<compile_context>
chip_gen: v7x
topology: tpu7x:2x2x1
jax: 0.10.0
libtpu: 0.0.40
codegen_flags: <defaults>
</compile_context>

<pallas_src>
import numpy as np
import jax
import jax.numpy as jnp
from jax import lax
from jax.experimental import pallas as pl
from jax.experimental.pallas import tpu as pltpu

# ------------------------- static problem sizes -------------------------
B = 2                    # batch
T = 8                    # text (tgt) sequence length
S = 16                   # gnn memory tokens per batch element (after .view)
DIN = 64                 # dim_input (gnn feature dim)
D = 32                   # args.token_dim (d_model)
NH = 8                   # nhead
HD = D // NH             # head dim = 4
DFF = 4 * D              # dim_feedforward = 128
BT = B * T               # 16 flattened queries
BS = B * S               # 32 flattened memory keys
RQ = NH * BT             # 128 (head, query) rows
EPS = 1e-5
SCALE = 1.0 / float(np.sqrt(HD))
NEG = -1e9               # additive mask value (exp underflows to exactly 0)
LANES = 128

assert RQ == DFF == LANES   # the 128-row "tall" slab block relies on this

# ------------------------- weight-slab layout (rows x 128 lanes, f32) ----
R_FFW1 = 0                 # rows   0.. 31 : ff_w1 (32,128), full width
R_TALL = 32                # rows  32..159 : lanes 0:32  ff_w2 (128,32)
#                                            lanes 32:64  hm            (RQ,32)
#                                            lanes 64:96  mask_ca base  (RQ,32)
#                                            lanes 96:112 rep           (RQ,16)
#                                            lanes 112:128 mask_sa base (RQ,16)
R_RSUM = R_TALL + DFF      # rows 160..175 : rsum (16,128), full width
R_SQ1 = R_RSUM + BT        # rows 176..207 : lanes 0:96 sa_wqkv | 96:128 gnn_w2
R_SQ2 = R_SQ1 + D          # rows 208..239 : lanes 0:64 ca_wkv | 64:96 sa_wo | 96:128 ca_wq
R_G1 = R_SQ2 + D           # rows 240..303 : lanes 0:32 gnn_w1 (64 rows); rows 240..271 lanes 32:64 ca_wo
R_BIAS = R_G1 + DIN        # rows 304..319 : bias / LayerNorm vectors, one per row
SLAB_ROWS = R_BIAS + 16    # 320 rows x 128 lanes x f32 = 160 KiB

# bias-block row order (within R_BIAS)
(B_GNN1, B_GNN2, B_SA_QKV, B_SA_O, B_CA_Q, B_CA_KV, B_CA_O,
 B_LN1W, B_LN1B, B_LN2W, B_LN2B, B_LN3W, B_LN3B, B_FF1, B_FF2) = range(15)

# ------------- merged activation block layout (BS=32 rows x 128 lanes) ---
A_TXT_L = DIN              # [0:BT,  DIN:DIN+D ]  text embeddings
A_KPT_R = BT               # [BT,    DIN:DIN+BT]  additive tgt key-padding mask
A_KPM_R = BT + 1           # [BT+1,  DIN:DIN+BS]  additive memory key-padding mask
ACT_ROWS = BS              # gnn features occupy [0:BS, 0:DIN]


def _gelu_tanh(x):
    # TODO(synk): torch nn.GELU defaults to the exact erf form; the tanh
    # approximation is used because erf lowering is not guaranteed in Mosaic.
    c = np.float32(np.sqrt(2.0 / np.pi))
    return 0.5 * x * (1.0 + jnp.tanh(c * (x + 0.044715 * x * x * x)))


def _layernorm(x, w, b):
    mu = jnp.mean(x, axis=-1, keepdims=True)
    var = jnp.mean((x - mu) * (x - mu), axis=-1, keepdims=True)
    return (x - mu) * lax.rsqrt(var + EPS) * w + b


# ------------------------------- the kernel -------------------------------
def decoder_kernel(act_ref, w_ref, out_ref):
    f32 = jnp.float32

    # ---- unpack the merged activation block (one DMA stream) ----
    act = act_ref[...]                                            # (BS, 128)
    gnnf = act[:, 0:DIN]                                          # (BS, DIN)
    tgt = act[0:BT, A_TXT_L:A_TXT_L + D]                          # (BT, D)
    kp_tgt = act[A_KPT_R:A_KPT_R + 1, A_TXT_L:A_TXT_L + BT]       # (1, BT)
    kp_mem = act[A_KPM_R:A_KPM_R + 1, A_TXT_L:A_TXT_L + BS]       # (1, BS)

    # ---- bias / LayerNorm vectors: one full-tile load, then row slices ----
    bias = w_ref[R_BIAS:R_BIAS + 16, :]                           # (16, 128)

    def brow(r, n):
        return bias[r:r + 1, 0:n]

    # ---- precomputed index tables (host-built, shipped in the slab) ----
    tbl = w_ref[R_TALL:R_TALL + RQ, :]                            # (RQ, 128)
    hm = tbl[:, 32:64]                                            # head-select mask (RQ, D)
    mask_ca = tbl[:, 64:96] + kp_mem                              # batch isolation + padding (RQ, BS)
    rep = tbl[:, 96:96 + BT]                                      # q-replication selector (RQ, BT)
    mask_sa = tbl[:, 112:112 + BT] + kp_tgt                       # (RQ, BT)
    rsum = w_ref[R_RSUM:R_RSUM + BT, :]                           # head-combine selector (BT, RQ)

    def mm(a, b):
        return jnp.dot(a, b, preferred_element_type=f32)

    def mha(q, k, v, wo, bo, addmask):
        # 1/sqrt(HD) is folded into the Q projection. Heads are packed onto the
        # sublane axis: replicate q per head on the MXU, mask per-head columns.
        qblk = mm(rep, q) * hm                                    # (RQ, D)
        s = lax.dot_general(qblk, k, (((1,), (1,)), ((), ())),
                            preferred_element_type=f32)           # (RQ, Lkv)
        s = s + addmask
        s = s - jnp.max(s, axis=-1, keepdims=True)
        e = jnp.exp(s)
        den = jnp.sum(e, axis=-1, keepdims=True)
        r = pl.reciprocal(den, approx=True)                       # EUP vrcp
        r = r * (2.0 - den * r)                                   # one Newton step -> f32 accuracy
        o = mm(e * r, v) * hm                                     # (RQ, D)
        return mm(mm(rsum, o), wo) + bo                           # concat(heads) @ Wo + bo -> (BT, D)

    # ---- linear_gnn_emb: Linear(DIN->D) -> GELU -> Linear(D->D) ----
    g1 = w_ref[R_G1:R_G1 + DIN, :]                                # (DIN, 128)
    gnn_w1 = g1[:, 0:D]
    ca_wo = g1[0:D, D:2 * D]
    sq1 = w_ref[R_SQ1:R_SQ1 + D, :]                               # (D, 128)
    h = mm(gnnf, gnn_w1) + brow(B_GNN1, D)
    mem = mm(_gelu_tanh(h), sq1[:, 96:128]) + brow(B_GNN2, D)     # (BS, D)

    # ---- self-attention (fused QKV projection) ----
    sq2 = w_ref[R_SQ2:R_SQ2 + D, :]                               # (D, 128)
    qkv = mm(tgt, sq1[:, 0:3 * D]) + brow(B_SA_QKV, 3 * D)        # (BT, 3D)
    sa = mha(qkv[:, 0:D], qkv[:, D:2 * D], qkv[:, 2 * D:3 * D],
             sq2[:, 64:96], brow(B_SA_O, D), mask_sa)
    x = _layernorm(tgt + sa, brow(B_LN1W, D), brow(B_LN1B, D))

    # ---- cross-attention over the gnn memory (fused KV projection) ----
    qc = mm(x, sq2[:, 96:128]) + brow(B_CA_Q, D)
    kv = mm(mem, sq2[:, 0:2 * D]) + brow(B_CA_KV, 2 * D)          # (BS, 2D)
    ca = mha(qc, kv[:, 0:D], kv[:, D:2 * D], ca_wo, brow(B_CA_O, D), mask_ca)
    x = _layernorm(x + ca, brow(B_LN2W, D), brow(B_LN2B, D))

    # ---- feed-forward (ReLU); all dropout layers are identity in eval mode ----
    hf = jnp.maximum(mm(x, w_ref[R_FFW1:R_FFW1 + D, :]) + brow(B_FF1, DFF), 0.0)
    ff = mm(hf, w_ref[R_TALL:R_TALL + DFF, 0:D]) + brow(B_FF2, D)
    x = _layernorm(x + ff, brow(B_LN3W, D), brow(B_LN3B, D))

    out_ref[...] = x


# ------------------------------ wrapper glue -------------------------------
def cross_modality_mha_for_text(slab, input_gnn_feats, input_gnn_mask, text_emb,
                                text_mask=None):
    """Mirrors CrossModalityMHA_for_text.forward (eval mode)."""
    text_emb = text_emb.astype(jnp.float32)
    Bv, Tv, Dv = text_emb.shape
    feats = input_gnn_feats.reshape(Bv, -1, input_gnn_feats.shape[-1]).astype(jnp.float32)
    gmask = input_gnn_mask.reshape(Bv, -1)
    Sv = feats.shape[1]
    assert (Bv, Tv, Dv, Sv, feats.shape[-1]) == (B, T, D, S, DIN)

    # additive key-padding masks (bool -> -1e9, float -> additive, as in torch MHA)
    if text_mask is None:
        tpad = jnp.zeros((1, BT), jnp.float32)
    elif jnp.issubdtype(text_mask.dtype, jnp.bool_):
        tpad = jnp.where(text_mask.reshape(1, BT), NEG, 0.0).astype(jnp.float32)
    else:
        tpad = text_mask.astype(jnp.float32).reshape(1, BT)
    mpad = jnp.where(gmask.reshape(1, BS), NEG, 0.0).astype(jnp.float32)

    # one lane-packed activation block: gnn feats | text emb | padding masks
    act = jnp.zeros((ACT_ROWS, LANES), jnp.float32)
    act = act.at[0:BS, 0:DIN].set(feats.reshape(BS, DIN))
    act = act.at[0:BT, A_TXT_L:A_TXT_L + D].set(text_emb.reshape(BT, D))
    act = act.at[A_KPT_R:A_KPT_R + 1, A_TXT_L:A_TXT_L + BT].set(tpad)
    act = act.at[A_KPM_R:A_KPM_R + 1, A_TXT_L:A_TXT_L + BS].set(mpad)

    out = pl.pallas_call(
        decoder_kernel,
        out_shape=jax.ShapeDtypeStruct((BT, D), jnp.float32),
        grid=(1,),
        in_specs=[
            pl.BlockSpec((ACT_ROWS, LANES), lambda i: (0, 0)),
            pl.BlockSpec((SLAB_ROWS, LANES), lambda i: (0, 0)),
        ],
        out_specs=pl.BlockSpec((BT, D), lambda i: (0, 0)),
        compiler_params=pltpu.CompilerParams(dimension_semantics=("arbitrary",)),
    )(act, slab)
    return out.reshape(B, T, D)


# --------------------------- params / slab packing --------------------------
def init_params(key):
    ks = iter(jax.random.split(key, 30))

    def w(shape, scale=0.08):
        return jax.random.normal(next(ks), shape, jnp.float32) * scale

    p = {}
    p['gnn_w1'] = w((DIN, D)); p['gnn_b1'] = w((D,), 0.02)
    p['gnn_w2'] = w((D, D));   p['gnn_b2'] = w((D,), 0.02)
    for pref in ('sa', 'ca'):
        p[f'{pref}_wq'] = w((D, D)); p[f'{pref}_bq'] = w((D,), 0.02)
        p[f'{pref}_wk'] = w((D, D)); p[f'{pref}_bk'] = w((D,), 0.02)
        p[f'{pref}_wv'] = w((D, D)); p[f'{pref}_bv'] = w((D,), 0.02)
        p[f'{pref}_wo'] = w((D, D)); p[f'{pref}_bo'] = w((D,), 0.02)
    for i in (1, 2, 3):
        p[f'ln{i}_w'] = jnp.ones((D,), jnp.float32)
        p[f'ln{i}_b'] = jnp.zeros((D,), jnp.float32)
    p['ff_w1'] = w((D, DFF)); p['ff_b1'] = w((DFF,), 0.02)
    p['ff_w2'] = w((DFF, D)); p['ff_b2'] = w((D,), 0.02)
    return p


def _static_tables():
    rows = np.arange(RQ)
    hrow = rows // BT                                   # head id of each packed row
    qrow = rows % BT                                    # flattened query index
    hm = (np.arange(D)[None, :] // HD == hrow[:, None]).astype(np.float32)     # (RQ, D)
    rep = (np.arange(BT)[None, :] == qrow[:, None]).astype(np.float32)         # (RQ, BT)
    rsum = np.ascontiguousarray(rep.T)                                         # (BT, RQ)
    qb = qrow // T                                      # batch id of each query row
    mask_sa = np.where(qb[:, None] == (np.arange(BT) // T)[None, :],
                       0.0, NEG).astype(np.float32)                            # (RQ, BT)
    mask_ca = np.where(qb[:, None] == (np.arange(BS) // S)[None, :],
                       0.0, NEG).astype(np.float32)                            # (RQ, BS)
    return hm, rep, rsum, mask_sa, mask_ca


def pack_slab(p):
    hm, rep, rsum, mask_sa, mask_ca = _static_tables()
    slab = np.zeros((SLAB_ROWS, LANES), np.float32)

    slab[R_FFW1:R_FFW1 + D, :] = np.asarray(p['ff_w1'])
    # tall block: ff_w2 + precomputed index tables
    slab[R_TALL:R_TALL + DFF, 0:D] = np.asarray(p['ff_w2'])
    slab[R_TALL:R_TALL + RQ, 32:64] = hm
    slab[R_TALL:R_TALL + RQ, 64:96] = mask_ca
    slab[R_TALL:R_TALL + RQ, 96:96 + BT] = rep
    slab[R_TALL:R_TALL + RQ, 112:112 + BT] = mask_sa
    slab[R_RSUM:R_RSUM + BT, :] = rsum
    # self-attn fused QKV (1/sqrt(HD) folded into the Q third) | gnn_w2
    slab[R_SQ1:R_SQ1 + D, 0:3 * D] = np.concatenate(
        [np.asarray(p['sa_wq']) * SCALE, p['sa_wk'], p['sa_wv']], axis=1)
    slab[R_SQ1:R_SQ1 + D, 96:128] = np.asarray(p['gnn_w2'])
    # cross-attn fused KV | sa_wo | ca_wq (scale folded)
    slab[R_SQ2:R_SQ2 + D, 0:2 * D] = np.concatenate([p['ca_wk'], p['ca_wv']], axis=1)
    slab[R_SQ2:R_SQ2 + D, 64:96] = np.asarray(p['sa_wo'])
    slab[R_SQ2:R_SQ2 + D, 96:128] = np.asarray(p['ca_wq']) * SCALE
    # gnn_w1 (tall, narrow) | ca_wo in its spare lane range
    slab[R_G1:R_G1 + DIN, 0:D] = np.asarray(p['gnn_w1'])
    slab[R_G1:R_G1 + D, D:2 * D] = np.asarray(p['ca_wo'])

    def bput(row, v):
        v = np.asarray(v, np.float32).reshape(-1)
        slab[R_BIAS + row, :v.shape[0]] = v

    bput(B_GNN1, p['gnn_b1']); bput(B_GNN2, p['gnn_b2'])
    bput(B_SA_QKV, np.concatenate(
        [np.asarray(p['sa_bq']) * SCALE, p['sa_bk'], p['sa_bv']]))
    bput(B_SA_O, p['sa_bo'])
    bput(B_CA_Q, np.asarray(p['ca_bq']) * SCALE)
    bput(B_CA_KV, np.concatenate([p['ca_bk'], p['ca_bv']]))
    bput(B_CA_O, p['ca_bo'])
    bput(B_LN1W, p['ln1_w']); bput(B_LN1B, p['ln1_b'])
    bput(B_LN2W, p['ln2_w']); bput(B_LN2B, p['ln2_b'])
    bput(B_LN3W, p['ln3_w']); bput(B_LN3B, p['ln3_b'])
    bput(B_FF1, p['ff_b1']); bput(B_FF2, p['ff_b2'])
    return jnp.asarray(slab)


# --------------------------- pure-JAX reference ----------------------------
def _ref_layernorm(x, w, b):
    mu = jnp.mean(x, axis=-1, keepdims=True)
    var = jnp.mean((x - mu) ** 2, axis=-1, keepdims=True)
    return (x - mu) / jnp.sqrt(var + EPS) * w + b


def _ref_mha(xq, xkv, wq, bq, wk, bk, wv, bv, wo, bo, add_key_mask):
    L, Lk = xq.shape[0], xkv.shape[0]
    q = (xq @ wq + bq).reshape(L, NH, HD).transpose(1, 0, 2) * SCALE
    k = (xkv @ wk + bk).reshape(Lk, NH, HD).transpose(1, 0, 2)
    v = (xkv @ wv + bv).reshape(Lk, NH, HD).transpose(1, 0, 2)
    s = jnp.einsum('hqd,hkd->hqk', q, k)
    if add_key_mask is not None:
        s = s + add_key_mask[None, None, :]
    a = jax.nn.softmax(s, axis=-1)
    o = jnp.einsum('hqk,hkd->hqd', a, v).transpose(1, 0, 2).reshape(L, D)
    return o @ wo + bo


def reference(p, input_gnn_feats, input_gnn_mask, text_emb, text_mask=None):
    Bv = text_emb.shape[0]
    feats = input_gnn_feats.reshape(Bv, -1, input_gnn_feats.shape[-1]).astype(jnp.float32)
    gmask = input_gnn_mask.reshape(Bv, -1)
    h = _gelu_tanh(feats @ p['gnn_w1'] + p['gnn_b1'])
    mem = h @ p['gnn_w2'] + p['gnn_b2']
    outs = []
    for b in range(Bv):
        x = text_emb[b].astype(jnp.float32)
        tmask = None
        if text_mask is not None:
            tm = text_mask[b]
            tmask = (jnp.where(tm, NEG, 0.0) if jnp.issubdtype(tm.dtype, jnp.bool_)
                     else tm.astype(jnp.float32))
        sa = _ref_mha(x, x, p['sa_wq'], p['sa_bq'], p['sa_wk'], p['sa_bk'],
                      p['sa_wv'], p['sa_bv'], p['sa_wo'], p['sa_bo'], tmask)
        x = _ref_layernorm(x + sa, p['ln1_w'], p['ln1_b'])
        ca_mask = jnp.where(gmask[b], NEG, 0.0)
        ca = _ref_mha(x, mem[b], p['ca_wq'], p['ca_bq'], p['ca_wk'], p['ca_bk'],
                      p['ca_wv'], p['ca_bv'], p['ca_wo'], p['ca_bo'], ca_mask)
        x = _ref_layernorm(x + ca, p['ln2_w'], p['ln2_b'])
        hf = jnp.maximum(x @ p['ff_w1'] + p['ff_b1'], 0.0)
        x = _ref_layernorm(x + hf @ p['ff_w2'] + p['ff_b2'], p['ln3_w'], p['ln3_b'])
        outs.append(x)
    return jnp.stack(outs, axis=0)


if __name__ == "__main__":
    key = jax.random.PRNGKey(0)
    kp_, kf_, km_, kt_ = jax.random.split(key, 4)

    params = init_params(kp_)
    slab = pack_slab(params)

    # raw inputs shaped as the PyTorch module receives them (before .view())
    input_gnn_feats = jax.random.normal(kf_, (B * 4, S // 4, DIN), jnp.float32)
    input_gnn_mask = jax.random.bernoulli(km_, 0.3, (B * 4, S // 4))
    input_gnn_mask = input_gnn_mask.at[:, 0].set(False)   # keep >=1 valid key per batch
    text_emb = jax.random.normal(kt_, (B, T, D), jnp.float32)

    out = cross_modality_mha_for_text(slab, input_gnn_feats, input_gnn_mask, text_emb)
    out = jax.block_until_ready(out)

    ref = jax.block_until_ready(
        reference(params, input_gnn_feats, input_gnn_mask, text_emb))
    np.testing.assert_allclose(np.asarray(out), np.asarray(ref), rtol=2e-4, atol=2e-4)

    assert out.shape == (B, T, D)
    print("KERNEL_OK")
</pallas_src>

<mosaic_0001>
module attributes {stable_mosaic.version = 11 : i64} {
  func.func @decoder_kernel(%arg0: i32, %arg1: memref<32x128xf32, #tpu.memory_space<vmem>>, %arg2: memref<320x128xf32, #tpu.memory_space<vmem>>, %arg3: memref<16x32xf32, #tpu.memory_space<vmem>>) attributes {dimension_semantics = [#tpu.dimension_semantics<arbitrary>], iteration_bounds = array<i64: 1>, scalar_prefetch = 0 : i64, scratch_operands = 0 : i64, tpu.core_type = #tpu.core_type<tc>, window_params = [{pipeline_mode = #tpu.pipeline_mode<synchronous>, transform_indices = @transform_0, window_bounds = array<i64: 32, 128>}, {pipeline_mode = #tpu.pipeline_mode<synchronous>, transform_indices = @transform_1, window_bounds = array<i64: 320, 128>}, {pipeline_mode = #tpu.pipeline_mode<synchronous>, transform_indices = @transform_2, window_bounds = array<i64: 16, 32>}]} {
    %c0 = arith.constant 0 : index
    %c0_0 = arith.constant 0 : index
    %0 = vector.load %arg1[%c0, %c0_0] : memref<32x128xf32, #tpu.memory_space<vmem>>, vector<32x128xf32>
    %1 = vector.extract_strided_slice %0 {offsets = [0, 0], sizes = [32, 64], strides = [1, 1]} : vector<32x128xf32> to vector<32x64xf32>
    %2 = vector.extract_strided_slice %0 {offsets = [0, 64], sizes = [16, 32], strides = [1, 1]} : vector<32x128xf32> to vector<16x32xf32>
    %3 = vector.extract_strided_slice %0 {offsets = [16, 64], sizes = [1, 16], strides = [1, 1]} : vector<32x128xf32> to vector<1x16xf32>
    %4 = vector.extract_strided_slice %0 {offsets = [17, 64], sizes = [1, 32], strides = [1, 1]} : vector<32x128xf32> to vector<1x32xf32>
    %c304 = arith.constant 304 : index
    %c0_1 = arith.constant 0 : index
    %5 = vector.load %arg2[%c304, %c0_1] : memref<320x128xf32, #tpu.memory_space<vmem>>, vector<16x128xf32>
    %c32 = arith.constant 32 : index
    %c0_2 = arith.constant 0 : index
    %6 = vector.load %arg2[%c32, %c0_2] : memref<320x128xf32, #tpu.memory_space<vmem>>, vector<128x128xf32>
    %7 = vector.extract_strided_slice %6 {offsets = [0, 32], sizes = [128, 32], strides = [1, 1]} : vector<128x128xf32> to vector<128x32xf32>
    %8 = vector.extract_strided_slice %6 {offsets = [0, 64], sizes = [128, 32], strides = [1, 1]} : vector<128x128xf32> to vector<128x32xf32>
    %9 = vector.broadcast %4 : vector<1x32xf32> to vector<128x32xf32>
    %10 = arith.addf %8, %9 : vector<128x32xf32>
    %11 = vector.extract_strided_slice %6 {offsets = [0, 96], sizes = [128, 16], strides = [1, 1]} : vector<128x128xf32> to vector<128x16xf32>
    %12 = vector.extract_strided_slice %6 {offsets = [0, 112], sizes = [128, 16], strides = [1, 1]} : vector<128x128xf32> to vector<128x16xf32>
    %13 = vector.broadcast %3 : vector<1x16xf32> to vector<128x16xf32>
    %14 = arith.addf %12, %13 : vector<128x16xf32>
    %c160 = arith.constant 160 : index
    %c0_3 = arith.constant 0 : index
    %15 = vector.load %arg2[%c160, %c0_3] : memref<320x128xf32, #tpu.memory_space<vmem>>, vector<16x128xf32>
    %c240 = arith.constant 240 : index
    %c0_4 = arith.constant 0 : index
    %16 = vector.load %arg2[%c240, %c0_4] : memref<320x128xf32, #tpu.memory_space<vmem>>, vector<64x128xf32>
    %17 = vector.extract_strided_slice %16 {offsets = [0, 0], sizes = [64, 32], strides = [1, 1]} : vector<64x128xf32> to vector<64x32xf32>
    %18 = vector.extract_strided_slice %16 {offsets = [0, 32], sizes = [32, 32], strides = [1, 1]} : vector<64x128xf32> to vector<32x32xf32>
    %c176 = arith.constant 176 : index
    %c0_5 = arith.constant 0 : index
    %19 = vector.load %arg2[%c176, %c0_5] : memref<320x128xf32, #tpu.memory_space<vmem>>, vector<32x128xf32>
    %cst = arith.constant dense<0.000000e+00> : vector<32x32xf32>
    %20 = tpu.matmul %1, %17, %cst {dimension_numbers = #tpu.dot_dimension_numbers<[1], [0], [0], [1], [0, 0, 1, 1], [], []>} : vector<32x64xf32>, vector<64x32xf32>, vector<32x32xf32> -> vector<32x32xf32>
    %21 = vector.extract_strided_slice %5 {offsets = [0, 0], sizes = [1, 32], strides = [1, 1]} : vector<16x128xf32> to vector<1x32xf32>
    %22 = vector.broadcast %21 : vector<1x32xf32> to vector<32x32xf32>
    %23 = arith.addf %20, %22 : vector<32x32xf32>
    %cst_6 = arith.constant 5.000000e-01 : f32
    %24 = vector.broadcast %cst_6 : f32 to vector<32x32xf32>
    %25 = arith.mulf %24, %23 : vector<32x32xf32>
    %cst_7 = arith.constant 4.471500e-02 : f32
    %26 = vector.broadcast %cst_7 : f32 to vector<32x32xf32>
    %27 = arith.mulf %26, %23 : vector<32x32xf32>
    %28 = arith.mulf %27, %23 : vector<32x32xf32>
    %29 = arith.mulf %28, %23 : vector<32x32xf32>
    %30 = arith.addf %23, %29 : vector<32x32xf32>
    %cst_8 = arith.constant 0.797884583 : f32
    %31 = vector.broadcast %cst_8 : f32 to vector<32x32xf32>
    %32 = arith.mulf %31, %30 : vector<32x32xf32>
    %33 = math.tanh %32 : vector<32x32xf32>
    %cst_9 = arith.constant 1.000000e+00 : f32
    %34 = vector.broadcast %cst_9 : f32 to vector<32x32xf32>
    %35 = arith.addf %34, %33 : vector<32x32xf32>
    %36 = arith.mulf %25, %35 : vector<32x32xf32>
    %37 = vector.extract_strided_slice %19 {offsets = [0, 96], sizes = [32, 32], strides = [1, 1]} : vector<32x128xf32> to vector<32x32xf32>
    %cst_10 = arith.constant dense<0.000000e+00> : vector<32x32xf32>
    %38 = tpu.matmul %36, %37, %cst_10 {dimension_numbers = #tpu.dot_dimension_numbers<[1], [0], [0], [1], [0, 0, 1, 1], [], []>} : vector<32x32xf32>, vector<32x32xf32>, vector<32x32xf32> -> vector<32x32xf32>
    %39 = vector.extract_strided_slice %5 {offsets = [1, 0], sizes = [1, 32], strides = [1, 1]} : vector<16x128xf32> to vector<1x32xf32>
    %40 = vector.broadcast %39 : vector<1x32xf32> to vector<32x32xf32>
    %41 = arith.addf %38, %40 : vector<32x32xf32>
    %c208 = arith.constant 208 : index
    %c0_11 = arith.constant 0 : index
    %42 = vector.load %arg2[%c208, %c0_11] : memref<320x128xf32, #tpu.memory_space<vmem>>, vector<32x128xf32>
    %43 = vector.extract_strided_slice %19 {offsets = [0, 0], sizes = [32, 96], strides = [1, 1]} : vector<32x128xf32> to vector<32x96xf32>
    %cst_12 = arith.constant dense<0.000000e+00> : vector<16x96xf32>
    %44 = tpu.matmul %2, %43, %cst_12 {dimension_numbers = #tpu.dot_dimension_numbers<[1], [0], [0], [1], [0, 0, 1, 1], [], []>} : vector<16x32xf32>, vector<32x96xf32>, vector<16x96xf32> -> vector<16x96xf32>
    %45 = vector.extract_strided_slice %5 {offsets = [2, 0], sizes = [1, 96], strides = [1, 1]} : vector<16x128xf32> to vector<1x96xf32>
    %46 = vector.broadcast %45 : vector<1x96xf32> to vector<16x96xf32>
    %47 = arith.addf %44, %46 : vector<16x96xf32>
    %48 = vector.extract_strided_slice %47 {offsets = [0, 0], sizes = [16, 32], strides = [1, 1]} : vector<16x96xf32> to vector<16x32xf32>
    %49 = vector.extract_strided_slice %47 {offsets = [0, 32], sizes = [16, 32], strides = [1, 1]} : vector<16x96xf32> to vector<16x32xf32>
    %50 = vector.extract_strided_slice %47 {offsets = [0, 64], sizes = [16, 32], strides = [1, 1]} : vector<16x96xf32> to vector<16x32xf32>
    %51 = vector.extract_strided_slice %42 {offsets = [0, 64], sizes = [32, 32], strides = [1, 1]} : vector<32x128xf32> to vector<32x32xf32>
    %52 = vector.extract_strided_slice %5 {offsets = [3, 0], sizes = [1, 32], strides = [1, 1]} : vector<16x128xf32> to vector<1x32xf32>
    %cst_13 = arith.constant dense<0.000000e+00> : vector<128x32xf32>
    %53 = tpu.matmul %11, %48, %cst_13 {dimension_numbers = #tpu.dot_dimension_numbers<[1], [0], [0], [1], [0, 0, 1, 1], [], []>} : vector<128x16xf32>, vector<16x32xf32>, vector<128x32xf32> -> vector<128x32xf32>
    %54 = arith.mulf %53, %7 : vector<128x32xf32>
    %cst_14 = arith.constant dense<0.000000e+00> : vector<128x16xf32>
    %55 = tpu.matmul %54, %49, %cst_14 {dimension_numbers = #tpu.dot_dimension_numbers<[1], [1], [0], [0], [0, 0, 1, 0], [], []>} : vector<128x32xf32>, vector<16x32xf32>, vector<128x16xf32> -> vector<128x16xf32>
    %56 = arith.addf %55, %14 : vector<128x16xf32>
    %cst_15 = arith.constant dense<0xFF800000> : vector<128xf32>
    %57 = vector.multi_reduction <maximumf>, %56, %cst_15 [1] : vector<128x16xf32> to vector<128xf32>
    %58 = vector.shape_cast %57 : vector<128xf32> to vector<128x1xf32>
    %59 = vector.broadcast %58 : vector<128x1xf32> to vector<128x16xf32>
    %60 = arith.subf %56, %59 : vector<128x16xf32>
    %61 = math.exp %60 : vector<128x16xf32>
    %cst_16 = arith.constant dense<0.000000e+00> : vector<128xf32>
    %62 = vector.multi_reduction <add>, %61, %cst_16 [1] : vector<128x16xf32> to vector<128xf32>
    %63 = vector.shape_cast %62 : vector<128xf32> to vector<128x1xf32>
    %64 = tpu.reciprocal %63 {approx = true} : vector<128x1xf32> -> vector<128x1xf32>
    %65 = arith.mulf %63, %64 : vector<128x1xf32>
    %cst_17 = arith.constant 2.000000e+00 : f32
    %66 = vector.broadcast %cst_17 : f32 to vector<128x1xf32>
    %67 = arith.subf %66, %65 : vector<128x1xf32>
    %68 = arith.mulf %64, %67 : vector<128x1xf32>
    %69 = vector.broadcast %68 : vector<128x1xf32> to vector<128x16xf32>
    %70 = arith.mulf %61, %69 : vector<128x16xf32>
    %cst_18 = arith.constant dense<0.000000e+00> : vector<128x32xf32>
    %71 = tpu.matmul %70, %50, %cst_18 {dimension_numbers = #tpu.dot_dimension_numbers<[1], [0], [0], [1], [0, 0, 1, 1], [], []>} : vector<128x16xf32>, vector<16x32xf32>, vector<128x32xf32> -> vector<128x32xf32>
    %72 = arith.mulf %71, %7 : vector<128x32xf32>
    %cst_19 = arith.constant dense<0.000000e+00> : vector<16x32xf32>
    %73 = tpu.matmul %15, %72, %cst_19 {dimension_numbers = #tpu.dot_dimension_numbers<[1], [0], [0], [1], [0, 0, 1, 1], [], []>} : vector<16x128xf32>, vector<128x32xf32>, vector<16x32xf32> -> vector<16x32xf32>
    %cst_20 = arith.constant dense<0.000000e+00> : vector<16x32xf32>
    %74 = tpu.matmul %73, %51, %cst_20 {dimension_numbers = #tpu.dot_dimension_numbers<[1], [0], [0], [1], [0, 0, 1, 1], [], []>} : vector<16x32xf32>, vector<32x32xf32>, vector<16x32xf32> -> vector<16x32xf32>
    %75 = vector.broadcast %52 : vector<1x32xf32> to vector<16x32xf32>
    %76 = arith.addf %74, %75 : vector<16x32xf32>
    %77 = arith.addf %2, %76 : vector<16x32xf32>
    %78 = vector.extract_strided_slice %5 {offsets = [7, 0], sizes = [1, 32], strides = [1, 1]} : vector<16x128xf32> to vector<1x32xf32>
    %79 = vector.extract_strided_slice %5 {offsets = [8, 0], sizes = [1, 32], strides = [1, 1]} : vector<16x128xf32> to vector<1x32xf32>
    %cst_21 = arith.constant dense<0.000000e+00> : vector<16xf32>
    %80 = vector.multi_reduction <add>, %77, %cst_21 [1] : vector<16x32xf32> to vector<16xf32>
    %81 = vector.shape_cast %80 : vector<16xf32> to vector<16x1xf32>
    %cst_22 = arith.constant 3.200000e+01 : f32
    %82 = vector.broadcast %cst_22 : f32 to vector<16x1xf32>
    %83 = arith.divf %81, %82 : vector<16x1xf32>
    %84 = vector.broadcast %83 : vector<16x1xf32> to vector<16x32xf32>
    %85 = arith.subf %77, %84 : vector<16x32xf32>
    %86 = vector.broadcast %83 : vector<16x1xf32> to vector<16x32xf32>
    %87 = arith.subf %77, %86 : vector<16x32xf32>
    %88 = arith.mulf %85, %87 : vector<16x32xf32>
    %cst_23 = arith.constant dense<0.000000e+00> : vector<16xf32>
    %89 = vector.multi_reduction <add>, %88, %cst_23 [1] : vector<16x32xf32> to vector<16xf32>
    %90 = vector.shape_cast %89 : vector<16xf32> to vector<16x1xf32>
    %cst_24 = arith.constant 3.200000e+01 : f32
    %91 = vector.broadcast %cst_24 : f32 to vector<16x1xf32>
    %92 = arith.divf %90, %91 : vector<16x1xf32>
    %93 = vector.broadcast %83 : vector<16x1xf32> to vector<16x32xf32>
    %94 = arith.subf %77, %93 : vector<16x32xf32>
    %cst_25 = arith.constant 9.99999974E-6 : f32
    %95 = vector.broadcast %cst_25 : f32 to vector<16x1xf32>
    %96 = arith.addf %92, %95 : vector<16x1xf32>
    %97 = math.rsqrt %96 : vector<16x1xf32>
    %98 = vector.broadcast %97 : vector<16x1xf32> to vector<16x32xf32>
    %99 = arith.mulf %94, %98 : vector<16x32xf32>
    %100 = vector.broadcast %78 : vector<1x32xf32> to vector<16x32xf32>
    %101 = arith.mulf %99, %100 : vector<16x32xf32>
    %102 = vector.broadcast %79 : vector<1x32xf32> to vector<16x32xf32>
    %103 = arith.addf %101, %102 : vector<16x32xf32>
    %104 = vector.extract_strided_slice %42 {offsets = [0, 96], sizes = [32, 32], strides = [1, 1]} : vector<32x128xf32> to vector<32x32xf32>
    %cst_26 = arith.constant dense<0.000000e+00> : vector<16x32xf32>
    %105 = tpu.matmul %103, %104, %cst_26 {dimension_numbers = #tpu.dot_dimension_numbers<[1], [0], [0], [1], [0, 0, 1, 1], [], []>} : vector<16x32xf32>, vector<32x32xf32>, vector<16x32xf32> -> vector<16x32xf32>
    %106 = vector.extract_strided_slice %5 {offsets = [4, 0], sizes = [1, 32], strides = [1, 1]} : vector<16x128xf32> to vector<1x32xf32>
    %107 = vector.broadcast %106 : vector<1x32xf32> to vector<16x32xf32>
    %108 = arith.addf %105, %107 : vector<16x32xf32>
    %109 = vector.extract_strided_slice %42 {offsets = [0, 0], sizes = [32, 64], strides = [1, 1]} : vector<32x128xf32> to vector<32x64xf32>
    %cst_27 = arith.constant dense<0.000000e+00> : vector<32x64xf32>
    %110 = tpu.matmul %41, %109, %cst_27 {dimension_numbers = #tpu.dot_dimension_numbers<[1], [0], [0], [1], [0, 0, 1, 1], [], []>} : vector<32x32xf32>, vector<32x64xf32>, vector<32x64xf32> -> vector<32x64xf32>
    %111 = vector.extract_strided_slice %5 {offsets = [5, 0], sizes = [1, 64], strides = [1, 1]} : vector<16x128xf32> to vector<1x64xf32>
    %112 = vector.broadcast %111 : vector<1x64xf32> to vector<32x64xf32>
    %113 = arith.addf %110, %112 : vector<32x64xf32>
    %114 = vector.extract_strided_slice %113 {offsets = [0, 0], sizes = [32, 32], strides = [1, 1]} : vector<32x64xf32> to vector<32x32xf32>
    %115 = vector.extract_strided_slice %113 {offsets = [0, 32], sizes = [32, 32], strides = [1, 1]} : vector<32x64xf32> to vector<32x32xf32>
    %116 = vector.extract_strided_slice %5 {offsets = [6, 0], sizes = [1, 32], strides = [1, 1]} : vector<16x128xf32> to vector<1x32xf32>
    %cst_28 = arith.constant dense<0.000000e+00> : vector<128x32xf32>
    %117 = tpu.matmul %11, %108, %cst_28 {dimension_numbers = #tpu.dot_dimension_numbers<[1], [0], [0], [1], [0, 0, 1, 1], [], []>} : vector<128x16xf32>, vector<16x32xf32>, vector<128x32xf32> -> vector<128x32xf32>
    %118 = arith.mulf %117, %7 : vector<128x32xf32>
    %cst_29 = arith.constant dense<0.000000e+00> : vector<128x32xf32>
    %119 = tpu.matmul %118, %114, %cst_29 {dimension_numbers = #tpu.dot_dimension_numbers<[1], [1], [0], [0], [0, 0, 1, 0], [], []>} : vector<128x32xf32>, vector<32x32xf32>, vector<128x32xf32> -> vector<128x32xf32>
    %120 = arith.addf %119, %10 : vector<128x32xf32>
    %cst_30 = arith.constant dense<0xFF800000> : vector<128xf32>
    %121 = vector.multi_reduction <maximumf>, %120, %cst_30 [1] : vector<128x32xf32> to vector<128xf32>
    %122 = vector.shape_cast %121 : vector<128xf32> to vector<128x1xf32>
    %123 = vector.broadcast %122 : vector<128x1xf32> to vector<128x32xf32>
    %124 = arith.subf %120, %123 : vector<128x32xf32>
    %125 = math.exp %124 : vector<128x32xf32>
    %cst_31 = arith.constant dense<0.000000e+00> : vector<128xf32>
    %126 = vector.multi_reduction <add>, %125, %cst_31 [1] : vector<128x32xf32> to vector<128xf32>
    %127 = vector.shape_cast %126 : vector<128xf32> to vector<128x1xf32>
    %128 = tpu.reciprocal %127 {approx = true} : vector<128x1xf32> -> vector<128x1xf32>
    %129 = arith.mulf %127, %128 : vector<128x1xf32>
    %cst_32 = arith.constant 2.000000e+00 : f32
    %130 = vector.broadcast %cst_32 : f32 to vector<128x1xf32>
    %131 = arith.subf %130, %129 : vector<128x1xf32>
    %132 = arith.mulf %128, %131 : vector<128x1xf32>
    %133 = vector.broadcast %132 : vector<128x1xf32> to vector<128x32xf32>
    %134 = arith.mulf %125, %133 : vector<128x32xf32>
    %cst_33 = arith.constant dense<0.000000e+00> : vector<128x32xf32>
    %135 = tpu.matmul %134, %115, %cst_33 {dimension_numbers = #tpu.dot_dimension_numbers<[1], [0], [0], [1], [0, 0, 1, 1], [], []>} : vector<128x32xf32>, vector<32x32xf32>, vector<128x32xf32> -> vector<128x32xf32>
    %136 = arith.mulf %135, %7 : vector<128x32xf32>
    %cst_34 = arith.constant dense<0.000000e+00> : vector<16x32xf32>
    %137 = tpu.matmul %15, %136, %cst_34 {dimension_numbers = #tpu.dot_dimension_numbers<[1], [0], [0], [1], [0, 0, 1, 1], [], []>} : vector<16x128xf32>, vector<128x32xf32>, vector<16x32xf32> -> vector<16x32xf32>
    %cst_35 = arith.constant dense<0.000000e+00> : vector<16x32xf32>
    %138 = tpu.matmul %137, %18, %cst_35 {dimension_numbers = #tpu.dot_dimension_numbers<[1], [0], [0], [1], [0, 0, 1, 1], [], []>} : vector<16x32xf32>, vector<32x32xf32>, vector<16x32xf32> -> vector<16x32xf32>
    %139 = vector.broadcast %116 : vector<1x32xf32> to vector<16x32xf32>
    %140 = arith.addf %138, %139 : vector<16x32xf32>
    %141 = arith.addf %103, %140 : vector<16x32xf32>
    %142 = vector.extract_strided_slice %5 {offsets = [9, 0], sizes = [1, 32], strides = [1, 1]} : vector<16x128xf32> to vector<1x32xf32>
    %143 = vector.extract_strided_slice %5 {offsets = [10, 0], sizes = [1, 32], strides = [1, 1]} : vector<16x128xf32> to vector<1x32xf32>
    %cst_36 = arith.constant dense<0.000000e+00> : vector<16xf32>
    %144 = vector.multi_reduction <add>, %141, %cst_36 [1] : vector<16x32xf32> to vector<16xf32>
    %145 = vector.shape_cast %144 : vector<16xf32> to vector<16x1xf32>
    %cst_37 = arith.constant 3.200000e+01 : f32
    %146 = vector.broadcast %cst_37 : f32 to vector<16x1xf32>
    %147 = arith.divf %145, %146 : vector<16x1xf32>
    %148 = vector.broadcast %147 : vector<16x1xf32> to vector<16x32xf32>
    %149 = arith.subf %141, %148 : vector<16x32xf32>
    %150 = vector.broadcast %147 : vector<16x1xf32> to vector<16x32xf32>
    %151 = arith.subf %141, %150 : vector<16x32xf32>
    %152 = arith.mulf %149, %151 : vector<16x32xf32>
    %cst_38 = arith.constant dense<0.000000e+00> : vector<16xf32>
    %153 = vector.multi_reduction <add>, %152, %cst_38 [1] : vector<16x32xf32> to vector<16xf32>
    %154 = vector.shape_cast %153 : vector<16xf32> to vector<16x1xf32>
    %cst_39 = arith.constant 3.200000e+01 : f32
    %155 = vector.broadcast %cst_39 : f32 to vector<16x1xf32>
    %156 = arith.divf %154, %155 : vector<16x1xf32>
    %157 = vector.broadcast %147 : vector<16x1xf32> to vector<16x32xf32>
    %158 = arith.subf %141, %157 : vector<16x32xf32>
    %cst_40 = arith.constant 9.99999974E-6 : f32
    %159 = vector.broadcast %cst_40 : f32 to vector<16x1xf32>
    %160 = arith.addf %156, %159 : vector<16x1xf32>
    %161 = math.rsqrt %160 : vector<16x1xf32>
    %162 = vector.broadcast %161 : vector<16x1xf32> to vector<16x32xf32>
    %163 = arith.mulf %158, %162 : vector<16x32xf32>
    %164 = vector.broadcast %142 : vector<1x32xf32> to vector<16x32xf32>
    %165 = arith.mulf %163, %164 : vector<16x32xf32>
    %166 = vector.broadcast %143 : vector<1x32xf32> to vector<16x32xf32>
    %167 = arith.addf %165, %166 : vector<16x32xf32>
    %c0_41 = arith.constant 0 : index
    %c0_42 = arith.constant 0 : index
    %168 = vector.load %arg2[%c0_41, %c0_42] : memref<320x128xf32, #tpu.memory_space<vmem>>, vector<32x128xf32>
    %cst_43 = arith.constant dense<0.000000e+00> : vector<16x128xf32>
    %169 = tpu.matmul %167, %168, %cst_43 {dimension_numbers = #tpu.dot_dimension_numbers<[1], [0], [0], [1], [0, 0, 1, 1], [], []>} : vector<16x32xf32>, vector<32x128xf32>, vector<16x128xf32> -> vector<16x128xf32>
    %170 = vector.extract_strided_slice %5 {offsets = [13, 0], sizes = [1, 128], strides = [1, 1]} : vector<16x128xf32> to vector<1x128xf32>
    %171 = vector.broadcast %170 : vector<1x128xf32> to vector<16x128xf32>
    %172 = arith.addf %169, %171 : vector<16x128xf32>
    %cst_44 = arith.constant 0.000000e+00 : f32
    %173 = vector.broadcast %cst_44 : f32 to vector<16x128xf32>
    %174 = arith.maximumf %172, %173 : vector<16x128xf32>
    %c32_45 = arith.constant 32 : index
    %c0_46 = arith.constant 0 : index
    %175 = vector.load %arg2[%c32_45, %c0_46] : memref<320x128xf32, #tpu.memory_space<vmem>>, vector<128x32xf32>
    %cst_47 = arith.constant dense<0.000000e+00> : vector<16x32xf32>
    %176 = tpu.matmul %174, %175, %cst_47 {dimension_numbers = #tpu.dot_dimension_numbers<[1], [0], [0], [1], [0, 0, 1, 1], [], []>} : vector<16x128xf32>, vector<128x32xf32>, vector<16x32xf32> -> vector<16x32xf32>
    %177 = vector.extract_strided_slice %5 {offsets = [14, 0], sizes = [1, 32], strides = [1, 1]} : vector<16x128xf32> to vector<1x32xf32>
    %178 = vector.broadcast %177 : vector<1x32xf32> to vector<16x32xf32>
    %179 = arith.addf %176, %178 : vector<16x32xf32>
    %180 = arith.addf %167, %179 : vector<16x32xf32>
    %181 = vector.extract_strided_slice %5 {offsets = [11, 0], sizes = [1, 32], strides = [1, 1]} : vector<16x128xf32> to vector<1x32xf32>
    %182 = vector.extract_strided_slice %5 {offsets = [12, 0], sizes = [1, 32], strides = [1, 1]} : vector<16x128xf32> to vector<1x32xf32>
    %cst_48 = arith.constant dense<0.000000e+00> : vector<16xf32>
    %183 = vector.multi_reduction <add>, %180, %cst_48 [1] : vector<16x32xf32> to vector<16xf32>
    %184 = vector.shape_cast %183 : vector<16xf32> to vector<16x1xf32>
    %cst_49 = arith.constant 3.200000e+01 : f32
    %185 = vector.broadcast %cst_49 : f32 to vector<16x1xf32>
    %186 = arith.divf %184, %185 : vector<16x1xf32>
    %187 = vector.broadcast %186 : vector<16x1xf32> to vector<16x32xf32>
    %188 = arith.subf %180, %187 : vector<16x32xf32>
    %189 = vector.broadcast %186 : vector<16x1xf32> to vector<16x32xf32>
    %190 = arith.subf %180, %189 : vector<16x32xf32>
    %191 = arith.mulf %188, %190 : vector<16x32xf32>
    %cst_50 = arith.constant dense<0.000000e+00> : vector<16xf32>
    %192 = vector.multi_reduction <add>, %191, %cst_50 [1] : vector<16x32xf32> to vector<16xf32>
    %193 = vector.shape_cast %192 : vector<16xf32> to vector<16x1xf32>
    %cst_51 = arith.constant 3.200000e+01 : f32
    %194 = vector.broadcast %cst_51 : f32 to vector<16x1xf32>
    %195 = arith.divf %193, %194 : vector<16x1xf32>
    %196 = vector.broadcast %186 : vector<16x1xf32> to vector<16x32xf32>
    %197 = arith.subf %180, %196 : vector<16x32xf32>
    %cst_52 = arith.constant 9.99999974E-6 : f32
    %198 = vector.broadcast %cst_52 : f32 to vector<16x1xf32>
    %199 = arith.addf %195, %198 : vector<16x1xf32>
    %200 = math.rsqrt %199 : vector<16x1xf32>
    %201 = vector.broadcast %200 : vector<16x1xf32> to vector<16x32xf32>
    %202 = arith.mulf %197, %201 : vector<16x32xf32>
    %203 = vector.broadcast %181 : vector<1x32xf32> to vector<16x32xf32>
    %204 = arith.mulf %202, %203 : vector<16x32xf32>
    %205 = vector.broadcast %182 : vector<1x32xf32> to vector<16x32xf32>
    %206 = arith.addf %204, %205 : vector<16x32xf32>
    %c0_53 = arith.constant 0 : index
    %c0_54 = arith.constant 0 : index
    %207 = vector.load %arg3[%c0_53, %c0_54] : memref<16x32xf32, #tpu.memory_space<vmem>>, vector<16x32xf32>
    tpu.vector_store %arg3[%c0_53, %c0_54], %206 {strides = array<i32>} : memref<16x32xf32, #tpu.memory_space<vmem>>, vector<16x32xf32>,
    return
  }
  func.func @transform_0(%arg0: i32) -> (i32, i32) {
    %c0_i32 = arith.constant 0 : i32
    %c0_i32_0 = arith.constant 0 : i32
    %c0_i32_1 = arith.constant 0 : i32
    return %c0_i32, %c0_i32_0 : i32, i32
  }
  func.func @transform_1(%arg0: i32) -> (i32, i32) {
    %c0_i32 = arith.constant 0 : i32
    %c0_i32_0 = arith.constant 0 : i32
    %c0_i32_1 = arith.constant 0 : i32
    return %c0_i32, %c0_i32_0 : i32, i32
  }
  func.func @transform_2(%arg0: i32) -> (i32, i32) {
    %c0_i32 = arith.constant 0 : i32
    %c0_i32_0 = arith.constant 0 : i32
    %c0_i32_1 = arith.constant 0 : i32
    return %c0_i32, %c0_i32_0 : i32, i32
  }
}

</mosaic_0001>

<llo_original>
// kernel: tpu_custom_call.1
$region0: #{tpu_custom_call.1}
  #allocation0 [shape = 'u32[]', space=smem, size = 0x4, offset = 0x4, fixed_abs, tag = 'smem constant byte address 0x4 - core index']
  #allocation1 [shape = 'u32[144,128]{1,0:T(1,128)}', space=vmem, size = 0x12000, scoped, tag = 'internal scratch']
  %s0 = inlined_call_operand.hbm [shape: f32[32,128], index: 0, kind: input, shape index: {}]
  %s1 = inlined_call_operand.hbm [shape: f32[320,128], index: 1, kind: input, shape index: {}]
  %s2 = inlined_call_operand.hbm [shape: f32[16,32], index: 2, kind: output, shape index: {}]
  %s3 = sld [smem:[#allocation0]]
  $region26: #{tpu_custom_call.1} parent=0
    _
  %s5 = ssub.s32 1, %s3
  %s6 = scalar_select 0, %s5, %s3
  $region1: #{tpu_custom_call.1} parent=0
    #allocation2 [shape = 'u8[16384]{0}', space=vmem, size = 0x4000, scoped, tag = 'input window, operand 0, single buffered']
    #allocation3 [shape = 's32[1]{0}', space=sflag, size = 0x4, scoped, tag = 'scoped memory for tpu_custom_call.1']
    #allocation4 [shape = 's32[1]{0}', space=sflag, size = 0x4, scoped, tag = 'scoped memory for tpu_custom_call.1']
    #allocation5 [shape = 'u8[163840]{0}', space=vmem, size = 0x28000, scoped, tag = 'input window, operand 1, single buffered']
    #allocation6 [shape = 's32[1]{0}', space=sflag, size = 0x4, scoped, tag = 'scoped memory for tpu_custom_call.1']
    #allocation7 [shape = 'u8[8192]{0}', space=vmem, size = 0x2000, scoped, tag = 'output window, operand 0, single buffered']
    %7 = vsyncpa [#allocation3], 0
    %8 = vsyncpa [#allocation6], 0
    %9 = vsyncpa [#allocation4], 0
    // Predicated region
    $region2: #{tpu_custom_call.1} parent=1 // pred_check
      _
    $region3: #{tpu_custom_call.1} parent=1 // pred_check_branch
      %11 = sbr.rel (0) target = $region5
    $region4: #{tpu_custom_call.1} parent=1 // pred_region
      %s13 = ssub.s32 512, 512
      %14 = vsyncadd [#allocation3], %s13
      %s15 = sshll.u32 [#allocation2], 4
      %s16 = int_to_ptr.vmem [resolvable:$true] %s15
      %21 = dma.hbm_to_vmem [thread:$0]  %s0, 512, %s16, [#allocation3], 128, 128, 8
    $region5: #{tpu_custom_call.1} parent=1 // pred_fallthru
      _
    // Predicated region
    $region6: #{tpu_custom_call.1} parent=1 // pred_check
      _
    $region7: #{tpu_custom_call.1} parent=1 // pred_check_branch
      %23 = sbr.rel (0) target = $region9
    $region8: #{tpu_custom_call.1} parent=1 // pred_region
      %s25 = ssub.s32 5120, 5120
      %26 = vsyncadd [#allocation6], %s25
      %s27 = sshll.u32 [#allocation5], 4
      %s28 = int_to_ptr.vmem [resolvable:$true] %s27
      %33 = dma.hbm_to_vmem [thread:$0]  %s1, 5120, %s28, [#allocation6], 128, 128, 8
    $region9: #{tpu_custom_call.1} parent=1 // pred_fallthru
      _
    // Predicated region
    $region10: #{tpu_custom_call.1} parent=1 // pred_check
      _
    $region11: #{tpu_custom_call.1} parent=1 // pred_check_branch
      %35 = sbr.rel (0) target = $region13
    $region12: #{tpu_custom_call.1} parent=1 // pred_region
      %36 = dma.done [#allocation3], 512
    $region13: #{tpu_custom_call.1} parent=1 // pred_fallthru
      _
    // Predicated region
    $region14: #{tpu_custom_call.1} parent=1 // pred_check
      _
    $region15: #{tpu_custom_call.1} parent=1 // pred_check_branch
      %38 = sbr.rel (0) target = $region17
    $region16: #{tpu_custom_call.1} parent=1 // pred_region
      %39 = dma.done [#allocation6], 5120
    $region17: #{tpu_custom_call.1} parent=1 // pred_fallthru
      _
    %v40 = vld [vmem:[#allocation2] sm:$0xff]
    %v41 = vld [vmem:[#allocation2 + $0x8] sm:$0xff]
    %v42 = vld [vmem:[#allocation2 + $0x10] sm:$0xff]
    %v43 = vld [vmem:[#allocation2 + $0x18] sm:$0xff]
    %v44 = vld [vmem:[#allocation5 + $0x130] sm:$0xff]
    %v45 = vld [vmem:[#allocation5 + $0x138] sm:$0xff]
    %v46 = vld [vmem:[#allocation5 + $0x20] sm:$0xff]
    %v47 = vld [vmem:[#allocation5 + $0x28] sm:$0xff]
    %v48 = vld [vmem:[#allocation5 + $0x30] sm:$0xff]
    %v49 = vld [vmem:[#allocation5 + $0x38] sm:$0xff]
    %v50 = vld [vmem:[#allocation5 + $0x40] sm:$0xff]
    %v51 = vld [vmem:[#allocation5 + $0x48] sm:$0xff]
    %v52 = vld [vmem:[#allocation5 + $0x50] sm:$0xff]
    %v53 = vld [vmem:[#allocation5 + $0x58] sm:$0xff]
    %v54 = vld [vmem:[#allocation5 + $0x60] sm:$0xff]
    %v55 = vld [vmem:[#allocation5 + $0x68] sm:$0xff]
    %v56 = vld [vmem:[#allocation5 + $0x70] sm:$0xff]
    %v57 = vld [vmem:[#allocation5 + $0x78] sm:$0xff]
    %v58 = vld [vmem:[#allocation5 + $0x80] sm:$0xff]
    %v59 = vld [vmem:[#allocation5 + $0x88] sm:$0xff]
    %v60 = vld [vmem:[#allocation5 + $0x90] sm:$0xff]
    %v61 = vld [vmem:[#allocation5 + $0x98] sm:$0xff]
    %v62 = vlaneseq
    %v63 = vshrl.u32 %v62, 7
    %v64 = vsub.s32 1, %v63
    %v65 = vrot.slane %v42, %v64
    %v66 = vadd.f32 %v46, %v65
    %v67 = vadd.f32 %v47, %v65
    %v68 = vadd.f32 %v48, %v65
    %v69 = vadd.f32 %v49, %v65
    %v70 = vadd.f32 %v50, %v65
    %v71 = vadd.f32 %v51, %v65
    %v72 = vadd.f32 %v52, %v65
    %v73 = vadd.f32 %v53, %v65
    %v74 = vadd.f32 %v54, %v65
    %v75 = vadd.f32 %v55, %v65
    %v76 = vadd.f32 %v56, %v65
    %v77 = vadd.f32 %v57, %v65
    %v78 = vadd.f32 %v58, %v65
    %v79 = vadd.f32 %v59, %v65
    %v80 = vadd.f32 %v60, %v65
    %v81 = vadd.f32 %v61, %v65
    %v82 = vlaneseq
    %v83 = vshrl.u32 %v82, 7
    %v84 = vsub.s32 0, %v83
    %v85 = vrot.slane %v42, %v84
    %87 = vrot.lane.b32.xlu0 %v85, 48
    %v88 = vpop.permute.xlu0 %87
    %v90 = vadd.f32 %v46, %v88
    %v91 = vadd.f32 %v47, %v88
    %v92 = vadd.f32 %v48, %v88
    %v93 = vadd.f32 %v49, %v88
    %v94 = vadd.f32 %v50, %v88
    %v95 = vadd.f32 %v51, %v88
    %v96 = vadd.f32 %v52, %v88
    %v97 = vadd.f32 %v53, %v88
    %v98 = vadd.f32 %v54, %v88
    %v99 = vadd.f32 %v55, %v88
    %v100 = vadd.f32 %v56, %v88
    %v101 = vadd.f32 %v57, %v88
    %v102 = vadd.f32 %v58, %v88
    %v103 = vadd.f32 %v59, %v88
    %v104 = vadd.f32 %v60, %v88
    %v105 = vadd.f32 %v61, %v88
    %v106 = vld [vmem:[#allocation5 + $0xa0] sm:$0xff]
    %v107 = vld [vmem:[#allocation5 + $0xa8] sm:$0xff]
    %v108 = vld [vmem:[#allocation5 + $0xf0] sm:$0xff]
    %v109 = vld [vmem:[#allocation5 + $0xf8] sm:$0xff]
    %v110 = vld [vmem:[#allocation5 + $0x100] sm:$0xff]
    %v111 = vld [vmem:[#allocation5 + $0x108] sm:$0xff]
    %v112 = vld [vmem:[#allocation5 + $0x110] sm:$0xff]
    %v113 = vld [vmem:[#allocation5 + $0x118] sm:$0xff]
    %v114 = vld [vmem:[#allocation5 + $0x120] sm:$0xff]
    %v115 = vld [vmem:[#allocation5 + $0x128] sm:$0xff]
    %v116 = vld [vmem:[#allocation5 + $0xb0] sm:$0xff]
    %v117 = vld [vmem:[#allocation5 + $0xb8] sm:$0xff]
    %v118 = vld [vmem:[#allocation5 + $0xc0] sm:$0xff]
    %v119 = vld [vmem:[#allocation5 + $0xc8] sm:$0xff]
    %v120 = vlaneseq
    %v121 = vshrl.u32 %v120, 7
    %v122 = vsub.s32 0, %v121
    %v123 = vrot.slane %v44, %v122
    %vm124 = vcmask 523264
    %v126 = vsel %vm124, %v40, 0
    %v129 = vsel %vm124, %v41, 0
    %v132 = vsel %vm124, %v42, 0
    %v135 = vsel %vm124, %v43, 0
    %137 = vmatprep.subr.mxu0 0.0
    %138 = vmatpush1.msra.mxu0 %v108
    %139 = vmatprep.subr.mxu0 0.0
    %140 = vmatpush1.msra.mxu0 %v109
    %141 = vmatprep.subr.mxu0 0.0
    %142 = vmatpush1.msra.mxu0 %v110
    %143 = vmatprep.subr.mxu0 0.0
    %144 = vmatpush1.msra.mxu0 %v111
    %145 = vmatprep.subr.mxu0 0.0
    %146 = vmatpush1.msra.mxu0 %v112
    %147 = vmatprep.subr.mxu0 0.0
    %148 = vmatpush1.msra.mxu0 %v113
    %149 = vmatprep.subr.mxu0 0.0
    %150 = vmatpush1.msra.mxu0 %v114
    %151 = vmatprep.subr.mxu0 0.0
    %152 = vmatpush1.msra.mxu0 %v115
    %153 = vmatprep.subr.mxu0 0.0
    %154 = vmatpush1.msra.mxu0 0.0
    %155 = vmatprep.subr.mxu0 0.0
    %156 = vmatpush1.msra.mxu0 0.0
    %157 = vmatprep.subr.mxu0 0.0
    %158 = vmatpush1.msra.mxu0 0.0
    %159 = vmatprep.subr.mxu0 0.0
    %160 = vmatpush1.msra.mxu0 0.0
    %161 = vmatprep.subr.mxu0 0.0
    %162 = vmatpush1.msra.mxu0 0.0
    %163 = vmatprep.subr.mxu0 0.0
    %164 = vmatpush1.msra.mxu0 0.0
    %165 = vmatprep.subr.mxu0 0.0
    %166 = vmatpush1.msra.mxu0 0.0
    %167 = vmatprep.subr.mxu0 0.0
    %168 = vmatpush1.msra.mxu0 0.0
    %169 = vmatprep.subr.mxu0 0.0
    %170 = vmatpush1.msra.mxu0 0.0
    %171 = vmatprep.subr.mxu0 0.0
    %172 = vmatpush1.msra.mxu0 0.0
    %173 = vmatprep.subr.mxu0 0.0
    %174 = vmatpush1.msra.mxu0 0.0
    %175 = vmatprep.subr.mxu0 0.0
    %176 = vmatpush1.msra.mxu0 0.0
    %177 = vmatprep.subr.mxu0 0.0
    %178 = vmatpush1.msra.mxu0 0.0
    %179 = vmatprep.subr.mxu0 0.0
    %180 = vmatpush1.msra.mxu0 0.0
    %181 = vmatprep.subr.mxu0 0.0
    %182 = vmatpush1.msra.mxu0 0.0
    %183 = vmatprep.subr.mxu0 0.0
    %184 = vmatpush1.msra.mxu0 0.0
    %185 = vmatprep.subr.mxu0 0.0
    %186 = vmatpush1.msra.mxu0 0.0
    %187 = vmatprep.subr.mxu0 0.0
    %188 = vmatpush1.msra.mxu0 0.0
    %189 = vmatprep.subr.mxu0 0.0
    %190 = vmatpush1.msra.mxu0 0.0
    %191 = vmatprep.subr.mxu0 0.0
    %192 = vmatpush1.msra.mxu0 0.0
    %193 = vmatprep.subr.mxu0 0.0
    %194 = vmatpush1.msra.mxu0 0.0
    %195 = vmatprep.subr.mxu0 0.0
    %196 = vmatpush1.msra.mxu0 0.0
    %197 = vmatprep.subr.mxu0 0.0
    %198 = vmatpush1.msra.mxu0 0.0
    %199 = vmatprep.subr.mxu0 0.0
    %200 = vmatpush1.msra.mxu0 0.0
    %201 = vmatprep.mubr.f32.mxu0 0.0
    %202 = vmatmul.mubr.f32.gmra.mrb[0].mxu0 %v126
    %v203 = vpop.f32.mrb[0].mxu0
    %v204 = vadd.f32 %v123, %v203
    %v205 = vpop.f32.mrb[0].mxu0
    %206 = vmatprep.mubr.f32.mxu0 0.0
    %207 = vmatmul.mubr.f32.gmra.mrb[0].mxu0 %v129
    %v208 = vpop.f32.mrb[0].mxu0
    %v209 = vadd.f32 %v123, %v208
    %v210 = vpop.f32.mrb[0].mxu0
    %211 = vmatprep.mubr.f32.mxu0 0.0
    %212 = vmatmul.mubr.f32.gmra.mrb[0].mxu0 %v132
    %v213 = vpop.f32.mrb[0].mxu0
    %v214 = vadd.f32 %v123, %v213
    %v215 = vpop.f32.mrb[0].mxu0
    %216 = vmatprep.mubr.f32.mxu0 0.0
    %217 = vmatmul.mubr.f32.gmra.mrb[0].mxu0 %v135
    %v218 = vpop.f32.mrb[0].mxu0
    %v219 = vadd.f32 %v123, %v218
    %v220 = vpop.f32.mrb[0].mxu0
    %221 = vdwg.mxu0
    %v222 = vmul.f32 %v204, 0.5
    %v223 = vmul.f32 %v209, 0.5
    %v224 = vmul.f32 %v214, 0.5
    %v225 = vmul.f32 %v219, 0.5
    %v226 = vmul.f32 %v204, 0.044715
    %v227 = vmul.f32 %v209, 0.044715
    %v228 = vmul.f32 %v214, 0.044715
    %v229 = vmul.f32 %v219, 0.044715
    %v230 = vmul.f32 %v226, %v204
    %v231 = vmul.f32 %v227, %v209
    %v232 = vmul.f32 %v228, %v214
    %v233 = vmul.f32 %v229, %v219
    %v234 = vmul.f32 %v230, %v204
    %v235 = vmul.f32 %v231, %v209
    %v236 = vmul.f32 %v232, %v214
    %v237 = vmul.f32 %v233, %v219
    %v238 = vadd.f32 %v204, %v234
    %v239 = vadd.f32 %v209, %v235
    %v240 = vadd.f32 %v214, %v236
    %v241 = vadd.f32 %v219, %v237
    %v242 = vmul.f32 %v238, 0.7978846
    %v243 = vmul.f32 %v239, 0.7978846
    %v244 = vmul.f32 %v240, 0.7978846
    %v245 = vmul.f32 %v241, 0.7978846
    %v246 = vtanh.pop %v242
    %v247 = vtanh.pop %v243
    %v248 = vtanh.pop %v244
    %v249 = vtanh.pop %v245
    %v250 = vadd.f32 %v246, 1.0
    %v251 = vadd.f32 %v247, 1.0
    %v252 = vadd.f32 %v248, 1.0
    %v253 = vadd.f32 %v249, 1.0
    %v254 = vmul.f32 %v222, %v250
    %v255 = vmul.f32 %v223, %v251
    %v256 = vmul.f32 %v224, %v252
    %v257 = vmul.f32 %v225, %v253
    %v258 = vlaneseq
    %v259 = vshrl.u32 %v258, 7
    %v260 = vsub.s32 1, %v259
    %v261 = vrot.slane %v44, %v260
    %266 = vrot.lane.b32.xlu0 %v116, 32
    %v267 = vpop.permute.xlu0 %266
    %268 = vrot.lane.b32.xlu0 %v117, 32
    %v269 = vpop.permute.xlu0 %268
    %270 = vrot.lane.b32.xlu0 %v118, 32
    %v271 = vpop.permute.xlu0 %270
    %272 = vrot.lane.b32.xlu0 %v119, 32
    %v273 = vpop.permute.xlu0 %272
    %vm278 = vcmask 261120
    %v280 = vsel %vm278, %v254, 0
    %v283 = vsel %vm278, %v255, 0
    %v286 = vsel %vm278, %v256, 0
    %v289 = vsel %vm278, %v257, 0
    %291 = vmatprep.subr.mxu0 0.0
    %292 = vmatpush1.msra.mxu0 %v267
    %293 = vmatprep.subr.mxu0 0.0
    %294 = vmatpush1.msra.mxu0 %v269
    %295 = vmatprep.subr.mxu0 0.0
    %296 = vmatpush1.msra.mxu0 %v271
    %297 = vmatprep.subr.mxu0 0.0
    %298 = vmatpush1.msra.mxu0 %v273
    %299 = vmatprep.subr.mxu0 0.0
    %300 = vmatpush1.msra.mxu0 0.0
    %301 = vmatprep.subr.mxu0 0.0
    %302 = vmatpush1.msra.mxu0 0.0
    %303 = vmatprep.subr.mxu0 0.0
    %304 = vmatpush1.msra.mxu0 0.0
    %305 = vmatprep.subr.mxu0 0.0
    %306 = vmatpush1.msra.mxu0 0.0
    %307 = vmatprep.subr.mxu0 0.0
    %308 = vmatpush1.msra.mxu0 0.0
    %309 = vmatprep.subr.mxu0 0.0
    %310 = vmatpush1.msra.mxu0 0.0
    %311 = vmatprep.subr.mxu0 0.0
    %312 = vmatpush1.msra.mxu0 0.0
    %313 = vmatprep.subr.mxu0 0.0
    %314 = vmatpush1.msra.mxu0 0.0
    %315 = vmatprep.subr.mxu0 0.0
    %316 = vmatpush1.msra.mxu0 0.0
    %317 = vmatprep.subr.mxu0 0.0
    %318 = vmatpush1.msra.mxu0 0.0
    %319 = vmatprep.subr.mxu0 0.0
    %320 = vmatpush1.msra.mxu0 0.0
    %321 = vmatprep.subr.mxu0 0.0
    %322 = vmatpush1.msra.mxu0 0.0
    %323 = vmatprep.subr.mxu0 0.0
    %324 = vmatpush1.msra.mxu0 0.0
    %325 = vmatprep.subr.mxu0 0.0
    %326 = vmatpush1.msra.mxu0 0.0
    %327 = vmatprep.subr.mxu0 0.0
    %328 = vmatpush1.msra.mxu0 0.0
    %329 = vmatprep.subr.mxu0 0.0
    %330 = vmatpush1.msra.mxu0 0.0
    %331 = vmatprep.subr.mxu0 0.0
    %332 = vmatpush1.msra.mxu0 0.0
    %333 = vmatprep.subr.mxu0 0.0
    %334 = vmatpush1.msra.mxu0 0.0
    %335 = vmatprep.subr.mxu0 0.0
    %336 = vmatpush1.msra.mxu0 0.0
    %337 = vmatprep.subr.mxu0 0.0
    %338 = vmatpush1.msra.mxu0 0.0
    %339 = vmatprep.subr.mxu0 0.0
    %340 = vmatpush1.msra.mxu0 0.0
    %341 = vmatprep.subr.mxu0 0.0
    %342 = vmatpush1.msra.mxu0 0.0
    %343 = vmatprep.subr.mxu0 0.0
    %344 = vmatpush1.msra.mxu0 0.0
    %345 = vmatprep.subr.mxu0 0.0
    %346 = vmatpush1.msra.mxu0 0.0
    %347 = vmatprep.subr.mxu0 0.0
    %348 = vmatpush1.msra.mxu0 0.0
    %349 = vmatprep.subr.mxu0 0.0
    %350 = vmatpush1.msra.mxu0 0.0
    %351 = vmatprep.subr.mxu0 0.0
    %352 = vmatpush1.msra.mxu0 0.0
    %353 = vmatprep.subr.mxu0 0.0
    %354 = vmatpush1.msra.mxu0 0.0
    %355 = vmatprep.mubr.f32.mxu0 0.0
    %356 = vmatmul.mubr.f32.gmra.mrb[0].mxu0 %v280
    %v357 = vpop.f32.mrb[0].mxu0
    %v358 = vadd.f32 %v261, %v357
    %v359 = vpop.f32.mrb[0].mxu0
    %360 = vmatprep.mubr.f32.mxu0 0.0
    %361 = vmatmul.mubr.f32.gmra.mrb[0].mxu0 %v283
    %v362 = vpop.f32.mrb[0].mxu0
    %v363 = vadd.f32 %v261, %v362
    %v364 = vpop.f32.mrb[0].mxu0
    %365 = vmatprep.mubr.f32.mxu0 0.0
    %366 = vmatmul.mubr.f32.gmra.mrb[0].mxu0 %v286
    %v367 = vpop.f32.mrb[0].mxu0
    %v368 = vadd.f32 %v261, %v367
    %v369 = vpop.f32.mrb[0].mxu0
    %370 = vmatprep.mubr.f32.mxu0 0.0
    %371 = vmatmul.mubr.f32.gmra.mrb[0].mxu0 %v289
    %v372 = vpop.f32.mrb[0].mxu0
    %v373 = vadd.f32 %v261, %v372
    %v374 = vpop.f32.mrb[0].mxu0
    %375 = vdwg.mxu0
    %v376 = vld [vmem:[#allocation5 + $0xd0] sm:$0xff]
    %v377 = vld [vmem:[#allocation5 + $0xd8] sm:$0xff]
    %v378 = vld [vmem:[#allocation5 + $0xe0] sm:$0xff]
    %v379 = vld [vmem:[#allocation5 + $0xe8] sm:$0xff]
    %v380 = vlaneseq
    %v381 = vshrl.u32 %v380, 7
    %v382 = vsub.s32 2, %v381
    %v383 = vrot.slane %v44, %v382
    %384 = vrot.lane.b32.xlu0 %v40, 64
    %v385 = vpop.permute.xlu0 %384
    %386 = vrot.lane.b32.xlu0 %v41, 64
    %v387 = vpop.permute.xlu0 %386
    %v388 = vsel %vm278, %v385, 0
    %v390 = vsel %vm278, %v387, 0
    %392 = vmatprep.subr.mxu0 0.0
    %393 = vmatpush1.msra.mxu0 %v116
    %394 = vmatprep.subr.mxu0 0.0
    %395 = vmatpush1.msra.mxu0 %v117
    %396 = vmatprep.subr.mxu0 0.0
    %397 = vmatpush1.msra.mxu0 %v118
    %398 = vmatprep.subr.mxu0 0.0
    %399 = vmatpush1.msra.mxu0 %v119
    %400 = vmatprep.subr.mxu0 0.0
    %401 = vmatpush1.msra.mxu0 0.0
    %402 = vmatprep.subr.mxu0 0.0
    %403 = vmatpush1.msra.mxu0 0.0
    %404 = vmatprep.subr.mxu0 0.0
    %405 = vmatpush1.msra.mxu0 0.0
    %406 = vmatprep.subr.mxu0 0.0
    %407 = vmatpush1.msra.mxu0 0.0
    %408 = vmatprep.subr.mxu0 0.0
    %409 = vmatpush1.msra.mxu0 0.0
    %410 = vmatprep.subr.mxu0 0.0
    %411 = vmatpush1.msra.mxu0 0.0
    %412 = vmatprep.subr.mxu0 0.0
    %413 = vmatpush1.msra.mxu0 0.0
    %414 = vmatprep.subr.mxu0 0.0
    %415 = vmatpush1.msra.mxu0 0.0
    %416 = vmatprep.subr.mxu0 0.0
    %417 = vmatpush1.msra.mxu0 0.0
    %418 = vmatprep.subr.mxu0 0.0
    %419 = vmatpush1.msra.mxu0 0.0
    %420 = vmatprep.subr.mxu0 0.0
    %421 = vmatpush1.msra.mxu0 0.0
    %422 = vmatprep.subr.mxu0 0.0
    %423 = vmatpush1.msra.mxu0 0.0
    %424 = vmatprep.subr.mxu0 0.0
    %425 = vmatpush1.msra.mxu0 0.0
    %426 = vmatprep.subr.mxu0 0.0
    %427 = vmatpush1.msra.mxu0 0.0
    %428 = vmatprep.subr.mxu0 0.0
    %429 = vmatpush1.msra.mxu0 0.0
    %430 = vmatprep.subr.mxu0 0.0
    %431 = vmatpush1.msra.mxu0 0.0
    %432 = vmatprep.subr.mxu0 0.0
    %433 = vmatpush1.msra.mxu0 0.0
    %434 = vmatprep.subr.mxu0 0.0
    %435 = vmatpush1.msra.mxu0 0.0
    %436 = vmatprep.subr.mxu0 0.0
    %437 = vmatpush1.msra.mxu0 0.0
    %438 = vmatprep.subr.mxu0 0.0
    %439 = vmatpush1.msra.mxu0 0.0
    %440 = vmatprep.subr.mxu0 0.0
    %441 = vmatpush1.msra.mxu0 0.0
    %442 = vmatprep.subr.mxu0 0.0
    %443 = vmatpush1.msra.mxu0 0.0
    %444 = vmatprep.subr.mxu0 0.0
    %445 = vmatpush1.msra.mxu0 0.0
    %446 = vmatprep.subr.mxu0 0.0
    %447 = vmatpush1.msra.mxu0 0.0
    %448 = vmatprep.subr.mxu0 0.0
    %449 = vmatpush1.msra.mxu0 0.0
    %450 = vmatprep.subr.mxu0 0.0
    %451 = vmatpush1.msra.mxu0 0.0
    %452 = vmatprep.subr.mxu0 0.0
    %453 = vmatpush1.msra.mxu0 0.0
    %454 = vmatprep.subr.mxu0 0.0
    %455 = vmatpush1.msra.mxu0 0.0
    %456 = vmatprep.mubr.f32.mxu0 0.0
    %457 = vmatmul.mubr.f32.gmra.mrb[0].mxu0 %v388
    %v458 = vpop.f32.mrb[0].mxu0
    %v459 = vadd.f32 %v383, %v458
    %v460 = vpop.f32.mrb[0].mxu0
    %461 = vmatprep.mubr.f32.mxu0 0.0
    %462 = vmatmul.mubr.f32.gmra.mrb[0].mxu0 %v390
    %v463 = vpop.f32.mrb[0].mxu0
    %v464 = vadd.f32 %v383, %v463
    %v465 = vpop.f32.mrb[0].mxu0
    %466 = vdwg.mxu0
    %483 = vrot.lane.b32.xlu0 %v46, 32
    %v484 = vpop.permute.xlu0 %483
    %485 = vrot.lane.b32.xlu0 %v47, 32
    %v486 = vpop.permute.xlu0 %485
    %487 = vrot.lane.b32.xlu0 %v48, 32
    %v488 = vpop.permute.xlu0 %487
    %489 = vrot.lane.b32.xlu0 %v49, 32
    %v490 = vpop.permute.xlu0 %489
    %491 = vrot.lane.b32.xlu0 %v50, 32
    %v492 = vpop.permute.xlu0 %491
    %493 = vrot.lane.b32.xlu0 %v51, 32
    %v494 = vpop.permute.xlu0 %493
    %495 = vrot.lane.b32.xlu0 %v52, 32
    %v496 = vpop.permute.xlu0 %495
    %497 = vrot.lane.b32.xlu0 %v53, 32
    %v498 = vpop.permute.xlu0 %497
    %499 = vrot.lane.b32.xlu0 %v54, 32
    %v500 = vpop.permute.xlu0 %499
    %501 = vrot.lane.b32.xlu0 %v55, 32
    %v502 = vpop.permute.xlu0 %501
    %503 = vrot.lane.b32.xlu0 %v56, 32
    %v504 = vpop.permute.xlu0 %503
    %505 = vrot.lane.b32.xlu0 %v57, 32
    %v506 = vpop.permute.xlu0 %505
    %507 = vrot.lane.b32.xlu0 %v58, 32
    %v508 = vpop.permute.xlu0 %507
    %509 = vrot.lane.b32.xlu0 %v59, 32
    %v510 = vpop.permute.xlu0 %509
    %511 = vrot.lane.b32.xlu0 %v60, 32
    %v512 = vpop.permute.xlu0 %511
    %513 = vrot.lane.b32.xlu0 %v61, 32
    %v514 = vpop.permute.xlu0 %513
    %vm515 = vcmask 130048
    %v516 = vsel %vm515, %v484, 0
    %v518 = vsel %vm515, %v486, 0
    %v520 = vsel %vm515, %v488, 0
    %v522 = vsel %vm515, %v490, 0
    %v524 = vsel %vm515, %v492, 0
    %v526 = vsel %vm515, %v494, 0
    %v528 = vsel %vm515, %v496, 0
    %v530 = vsel %vm515, %v498, 0
    %v532 = vsel %vm515, %v500, 0
    %v534 = vsel %vm515, %v502, 0
    %v536 = vsel %vm515, %v504, 0
    %v538 = vsel %vm515, %v506, 0
    %v540 = vsel %vm515, %v508, 0
    %v542 = vsel %vm515, %v510, 0
    %v544 = vsel %vm515, %v512, 0
    %v546 = vsel %vm515, %v514, 0
    %548 = vmatprep.subr.mxu0 0.0
    %549 = vmatpush1.msra.mxu0 %v459
    %550 = vmatprep.subr.mxu0 0.0
    %551 = vmatpush1.msra.mxu0 %v464
    %552 = vmatprep.subr.mxu0 0.0
    %553 = vmatpush1.msra.mxu0 0.0
    %554 = vmatprep.subr.mxu0 0.0
    %555 = vmatpush1.msra.mxu0 0.0
    %556 = vmatprep.subr.mxu0 0.0
    %557 = vmatpush1.msra.mxu0 0.0
    %558 = vmatprep.subr.mxu0 0.0
    %559 = vmatpush1.msra.mxu0 0.0
    %560 = vmatprep.subr.mxu0 0.0
    %561 = vmatpush1.msra.mxu0 0.0
    %562 = vmatprep.subr.mxu0 0.0
    %563 = vmatpush1.msra.mxu0 0.0
    %564 = vmatprep.subr.mxu0 0.0
    %565 = vmatpush1.msra.mxu0 0.0
    %566 = vmatprep.subr.mxu0 0.0
    %567 = vmatpush1.msra.mxu0 0.0
    %568 = vmatprep.subr.mxu0 0.0
    %569 = vmatpush1.msra.mxu0 0.0
    %570 = vmatprep.subr.mxu0 0.0
    %571 = vmatpush1.msra.mxu0 0.0
    %572 = vmatprep.subr.mxu0 0.0
    %573 = vmatpush1.msra.mxu0 0.0
    %574 = vmatprep.subr.mxu0 0.0
    %575 = vmatpush1.msra.mxu0 0.0
    %576 = vmatprep.subr.mxu0 0.0
    %577 = vmatpush1.msra.mxu0 0.0
    %578 = vmatprep.subr.mxu0 0.0
    %579 = vmatpush1.msra.mxu0 0.0
    %580 = vmatprep.subr.mxu0 0.0
    %581 = vmatpush1.msra.mxu0 0.0
    %582 = vmatprep.subr.mxu0 0.0
    %583 = vmatpush1.msra.mxu0 0.0
    %584 = vmatprep.subr.mxu0 0.0
    %585 = vmatpush1.msra.mxu0 0.0
    %586 = vmatprep.subr.mxu0 0.0
    %587 = vmatpush1.msra.mxu0 0.0
    %588 = vmatprep.subr.mxu0 0.0
    %589 = vmatpush1.msra.mxu0 0.0
    %590 = vmatprep.subr.mxu0 0.0
    %591 = vmatpush1.msra.mxu0 0.0
    %592 = vmatprep.subr.mxu0 0.0
    %593 = vmatpush1.msra.mxu0 0.0
    %594 = vmatprep.subr.mxu0 0.0
    %595 = vmatpush1.msra.mxu0 0.0
    %596 = vmatprep.subr.mxu0 0.0
    %597 = vmatpush1.msra.mxu0 0.0
    %598 = vmatprep.subr.mxu0 0.0
    %599 = vmatpush1.msra.mxu0 0.0
    %600 = vmatprep.subr.mxu0 0.0
    %601 = vmatpush1.msra.mxu0 0.0
    %602 = vmatprep.subr.mxu0 0.0
    %603 = vmatpush1.msra.mxu0 0.0
    %604 = vmatprep.subr.mxu0 0.0
    %605 = vmatpush1.msra.mxu0 0.0
    %606 = vmatprep.subr.mxu0 0.0
    %607 = vmatpush1.msra.mxu0 0.0
    %608 = vmatprep.subr.mxu0 0.0
    %609 = vmatpush1.msra.mxu0 0.0
    %610 = vmatprep.subr.mxu0 0.0
    %611 = vmatpush1.msra.mxu0 0.0
    %612 = vmatprep.mubr.f32.mxu0 0.0
    %613 = vmatmul.mubr.f32.gmra.mrb[0].mxu0 %v516
    %v614 = vpop.f32.mrb[0].mxu0
    %v615 = vadd.f32 0.0, %v614
    %v616 = vpop.f32.mrb[0].mxu0
    %617 = vmatprep.mubr.f32.mxu0 0.0
    %618 = vmatmul.mubr.f32.gmra.mrb[0].mxu0 %v518
    %v619 = vpop.f32.mrb[0].mxu0
    %v620 = vadd.f32 0.0, %v619
    %v621 = vpop.f32.mrb[0].mxu0
    %622 = vmatprep.mubr.f32.mxu0 0.0
    %623 = vmatmul.mubr.f32.gmra.mrb[0].mxu0 %v520
    %v624 = vpop.f32.mrb[0].mxu0
    %v625 = vadd.f32 0.0, %v624
    %v626 = vpop.f32.mrb[0].mxu0
    %627 = vmatprep.mubr.f32.mxu0 0.0
    %628 = vmatmul.mubr.f32.gmra.mrb[0].mxu0 %v522
    %v629 = vpop.f32.mrb[0].mxu0
    %v630 = vadd.f32 0.0, %v629
    %v631 = vpop.f32.mrb[0].mxu0
    %632 = vmatprep.mubr.f32.mxu0 0.0
    %633 = vmatmul.mubr.f32.gmra.mrb[0].mxu0 %v524
    %v634 = vpop.f32.mrb[0].mxu0
    %v635 = vadd.f32 0.0, %v634
    %v636 = vpop.f32.mrb[0].mxu0
    %637 = vmatprep.mubr.f32.mxu0 0.0
    %638 = vmatmul.mubr.f32.gmra.mrb[0].mxu0 %v526
    %v639 = vpop.f32.mrb[0].mxu0
    %v640 = vadd.f32 0.0, %v639
    %v641 = vpop.f32.mrb[0].mxu0
    %642 = vmatprep.mubr.f32.mxu0 0.0
    %643 = vmatmul.mubr.f32.gmra.mrb[0].mxu0 %v528
    %v644 = vpop.f32.mrb[0].mxu0
    %v645 = vadd.f32 0.0, %v644
    %v646 = vpop.f32.mrb[0].mxu0
    %647 = vmatprep.mubr.f32.mxu0 0.0
    %648 = vmatmul.mubr.f32.gmra.mrb[0].mxu0 %v530
    %v649 = vpop.f32.mrb[0].mxu0
    %v650 = vadd.f32 0.0, %v649
    %v651 = vpop.f32.mrb[0].mxu0
    %652 = vmatprep.mubr.f32.mxu0 0.0
    %653 = vmatmul.mubr.f32.gmra.mrb[0].mxu0 %v532
    %v654 = vpop.f32.mrb[0].mxu0
    %v655 = vadd.f32 0.0, %v654
    %v656 = vpop.f32.mrb[0].mxu0
    %657 = vmatprep.mubr.f32.mxu0 0.0
    %658 = vmatmul.mubr.f32.gmra.mrb[0].mxu0 %v534
    %v659 = vpop.f32.mrb[0].mxu0
    %v660 = vadd.f32 0.0, %v659
    %v661 = vpop.f32.mrb[0].mxu0
    %662 = vmatprep.mubr.f32.mxu0 0.0
    %663 = vmatmul.mubr.f32.gmra.mrb[0].mxu0 %v536
    %v664 = vpop.f32.mrb[0].mxu0
    %v665 = vadd.f32 0.0, %v664
    %v666 = vpop.f32.mrb[0].mxu0
    %667 = vmatprep.mubr.f32.mxu0 0.0
    %668 = vmatmul.mubr.f32.gmra.mrb[0].mxu0 %v538
    %v669 = vpop.f32.mrb[0].mxu0
    %v670 = vadd.f32 0.0, %v669
    %v671 = vpop.f32.mrb[0].mxu0
    %672 = vmatprep.mubr.f32.mxu0 0.0
    %673 = vmatmul.mubr.f32.gmra.mrb[0].mxu0 %v540
    %v674 = vpop.f32.mrb[0].mxu0
    %v675 = vadd.f32 0.0, %v674
    %v676 = vpop.f32.mrb[0].mxu0
    %677 = vmatprep.mubr.f32.mxu0 0.0
    %678 = vmatmul.mubr.f32.gmra.mrb[0].mxu0 %v542
    %v679 = vpop.f32.mrb[0].mxu0
    %v680 = vadd.f32 0.0, %v679
    %v681 = vpop.f32.mrb[0].mxu0
    %682 = vmatprep.mubr.f32.mxu0 0.0
    %683 = vmatmul.mubr.f32.gmra.mrb[0].mxu0 %v544
    %v684 = vpop.f32.mrb[0].mxu0
    %v685 = vadd.f32 0.0, %v684
    %v686 = vpop.f32.mrb[0].mxu0
    %687 = vmatprep.mubr.f32.mxu0 0.0
    %688 = vmatmul.mubr.f32.gmra.mrb[0].mxu0 %v546
    %v689 = vpop.f32.mrb[0].mxu0
    %v690 = vadd.f32 0.0, %v689
    %v691 = vpop.f32.mrb[0].mxu0
    %692 = vdwg.mxu0
    %693 = vrot.lane.b32.xlu0 %v46, 96
    %v694 = vpop.permute.xlu0 %693
    %695 = vrot.lane.b32.xlu0 %v47, 96
    %v696 = vpop.permute.xlu0 %695
    %697 = vrot.lane.b32.xlu0 %v48, 96
    %v698 = vpop.permute.xlu0 %697
    %699 = vrot.lane.b32.xlu0 %v49, 96
    %v700 = vpop.permute.xlu0 %699
    %701 = vrot.lane.b32.xlu0 %v50, 96
    %v702 = vpop.permute.xlu0 %701
    %703 = vrot.lane.b32.xlu0 %v51, 96
    %v704 = vpop.permute.xlu0 %703
    %705 = vrot.lane.b32.xlu0 %v52, 96
    %v706 = vpop.permute.xlu0 %705
    %707 = vrot.lane.b32.xlu0 %v53, 96
    %v708 = vpop.permute.xlu0 %707
    %709 = vrot.lane.b32.xlu0 %v54, 96
    %v710 = vpop.permute.xlu0 %709
    %711 = vrot.lane.b32.xlu0 %v55, 96
    %v712 = vpop.permute.xlu0 %711
    %713 = vrot.lane.b32.xlu0 %v56, 96
    %v714 = vpop.permute.xlu0 %713
    %715 = vrot.lane.b32.xlu0 %v57, 96
    %v716 = vpop.permute.xlu0 %715
    %717 = vrot.lane.b32.xlu0 %v58, 96
    %v718 = vpop.permute.xlu0 %717
    %719 = vrot.lane.b32.xlu0 %v59, 96
    %v720 = vpop.permute.xlu0 %719
    %721 = vrot.lane.b32.xlu0 %v60, 96
    %v722 = vpop.permute.xlu0 %721
    %723 = vrot.lane.b32.xlu0 %v61, 96
    %v724 = vpop.permute.xlu0 %723
    %v741 = vmul.f32 %v615, %v694
    %v742 = vmul.f32 %v620, %v696
    %v743 = vmul.f32 %v625, %v698
    %v744 = vmul.f32 %v630, %v700
    %v745 = vmul.f32 %v635, %v702
    %v746 = vmul.f32 %v640, %v704
    %v747 = vmul.f32 %v645, %v706
    %v748 = vmul.f32 %v650, %v708
    %v749 = vmul.f32 %v655, %v710
    %v750 = vmul.f32 %v660, %v712
    %v751 = vmul.f32 %v665, %v714
    %v752 = vmul.f32 %v670, %v716
    %v753 = vmul.f32 %v675, %v718
    %v754 = vmul.f32 %v680, %v720
    %v755 = vmul.f32 %v685, %v722
    %v756 = vmul.f32 %v690, %v724
    %759 = vrot.lane.b32.xlu0 %v459, 96
    %v760 = vpop.permute.xlu0 %759
    %761 = vrot.lane.b32.xlu0 %v464, 96
    %v762 = vpop.permute.xlu0 %761
    %779 = vrot.lane.b32.xlu0 %v90, 16
    %v780 = vpop.permute.xlu0 %779
    %781 = vrot.lane.b32.xlu0 %v91, 16
    %v782 = vpop.permute.xlu0 %781
    %783 = vrot.lane.b32.xlu0 %v92, 16
    %v784 = vpop.permute.xlu0 %783
    %785 = vrot.lane.b32.xlu0 %v93, 16
    %v786 = vpop.permute.xlu0 %785
    %787 = vrot.lane.b32.xlu0 %v94, 16
    %v788 = vpop.permute.xlu0 %787
    %789 = vrot.lane.b32.xlu0 %v95, 16
    %v790 = vpop.permute.xlu0 %789
    %791 = vrot.lane.b32.xlu0 %v96, 16
    %v792 = vpop.permute.xlu0 %791
    %793 = vrot.lane.b32.xlu0 %v97, 16
    %v794 = vpop.permute.xlu0 %793
    %795 = vrot.lane.b32.xlu0 %v98, 16
    %v796 = vpop.permute.xlu0 %795
    %797 = vrot.lane.b32.xlu0 %v99, 16
    %v798 = vpop.permute.xlu0 %797
    %799 = vrot.lane.b32.xlu0 %v100, 16
    %v800 = vpop.permute.xlu0 %799
    %801 = vrot.lane.b32.xlu0 %v101, 16
    %v802 = vpop.permute.xlu0 %801
    %803 = vrot.lane.b32.xlu0 %v102, 16
    %v804 = vpop.permute.xlu0 %803
    %805 = vrot.lane.b32.xlu0 %v103, 16
    %v806 = vpop.permute.xlu0 %805
    %807 = vrot.lane.b32.xlu0 %v104, 16
    %v808 = vpop.permute.xlu0 %807
    %809 = vrot.lane.b32.xlu0 %v105, 16
    %v810 = vpop.permute.xlu0 %809
    %v828 = vsel %vm278, %v741, 0
    %v831 = vsel %vm278, %v742, 0
    %v834 = vsel %vm278, %v743, 0
    %v837 = vsel %vm278, %v744, 0
    %v840 = vsel %vm278, %v745, 0
    %v843 = vsel %vm278, %v746, 0
    %v846 = vsel %vm278, %v747, 0
    %v849 = vsel %vm278, %v748, 0
    %v852 = vsel %vm278, %v749, 0
    %v855 = vsel %vm278, %v750, 0
    %v858 = vsel %vm278, %v751, 0
    %v861 = vsel %vm278, %v752, 0
    %v864 = vsel %vm278, %v753, 0
    %v867 = vsel %vm278, %v754, 0
    %v870 = vsel %vm278, %v755, 0
    %v873 = vsel %vm278, %v756, 0
    %v875 = vsel %vm278, %v760, 0
    %v877 = vsel %vm278, %v762, 0
    %879 = vmatprep.subr.mxu0 0.0
    %880 = vmatpush1.xpose.msra.mxu0 %v875
    %881 = vmatprep.subr.mxu0 0.0
    %882 = vmatpush1.xpose.msra.mxu0 %v877
    %883 = vmatprep.subr.mxu0 0.0
    %884 = vmatpush1.xpose.msra.mxu0 0.0
    %885 = vmatprep.subr.mxu0 0.0
    %886 = vmatpush1.xpose.msra.mxu0 0.0
    %887 = vmatprep.subr.mxu0 0.0
    %888 = vmatpush1.xpose.msra.mxu0 0.0
    %889 = vmatprep.subr.mxu0 0.0
    %890 = vmatpush1.xpose.msra.mxu0 0.0
    %891 = vmatprep.subr.mxu0 0.0
    %892 = vmatpush1.xpose.msra.mxu0 0.0
    %893 = vmatprep.subr.mxu0 0.0
    %894 = vmatpush1.xpose.msra.mxu0 0.0
    %895 = vmatprep.subr.mxu0 0.0
    %896 = vmatpush1.xpose.msra.mxu0 0.0
    %897 = vmatprep.subr.mxu0 0.0
    %898 = vmatpush1.xpose.msra.mxu0 0.0
    %899 = vmatprep.subr.mxu0 0.0
    %900 = vmatpush1.xpose.msra.mxu0 0.0
    %901 = vmatprep.subr.mxu0 0.0
    %902 = vmatpush1.xpose.msra.mxu0 0.0
    %903 = vmatprep.subr.mxu0 0.0
    %904 = vmatpush1.xpose.msra.mxu0 0.0
    %905 = vmatprep.subr.mxu0 0.0
    %906 = vmatpush1.xpose.msra.mxu0 0.0
    %907 = vmatprep.subr.mxu0 0.0
    %908 = vmatpush1.xpose.msra.mxu0 0.0
    %909 = vmatprep.subr.mxu0 0.0
    %910 = vmatpush1.xpose.msra.mxu0 0.0
    %911 = vmatprep.subr.mxu0 0.0
    %912 = vmatpush1.xpose.msra.mxu0 0.0
    %913 = vmatprep.subr.mxu0 0.0
    %914 = vmatpush1.xpose.msra.mxu0 0.0
    %915 = vmatprep.subr.mxu0 0.0
    %916 = vmatpush1.xpose.msra.mxu0 0.0
    %917 = vmatprep.subr.mxu0 0.0
    %918 = vmatpush1.xpose.msra.mxu0 0.0
    %919 = vmatprep.subr.mxu0 0.0
    %920 = vmatpush1.xpose.msra.mxu0 0.0
    %921 = vmatprep.subr.mxu0 0.0
    %922 = vmatpush1.xpose.msra.mxu0 0.0
    %923 = vmatprep.subr.mxu0 0.0
    %924 = vmatpush1.xpose.msra.mxu0 0.0
    %925 = vmatprep.subr.mxu0 0.0
    %926 = vmatpush1.xpose.msra.mxu0 0.0
    %927 = vmatprep.subr.mxu0 0.0
    %928 = vmatpush1.xpose.msra.mxu0 0.0
    %929 = vmatprep.subr.mxu0 0.0
    %930 = vmatpush1.xpose.msra.mxu0 0.0
    %931 = vmatprep.subr.mxu0 0.0
    %932 = vmatpush1.xpose.msra.mxu0 0.0
    %933 = vmatprep.subr.mxu0 0.0
    %934 = vmatpush1.xpose.msra.mxu0 0.0
    %935 = vmatprep.subr.mxu0 0.0
    %936 = vmatpush1.xpose.msra.mxu0 0.0
    %937 = vmatprep.subr.mxu0 0.0
    %938 = vmatpush1.xpose.msra.mxu0 0.0
    %939 = vmatprep.subr.mxu0 0.0
    %940 = vmatpush1.xpose.msra.mxu0 0.0
    %941 = vmatprep.subr.mxu0 0.0
    %942 = vmatpush1.xpose.msra.mxu0 0.0
    %943 = vmatprep.mubr.f32.mxu0 0.0
    %944 = vmatmul.mubr.f32.gmra.mrb[0].mxu0 %v828
    %v945 = vpop.f32.mrb[0].mxu0
    %v946 = vadd.f32 %v780, %v945
    %v947 = vpop.f32.mrb[0].mxu0
    %948 = vmatprep.mubr.f32.mxu0 0.0
    %949 = vmatmul.mubr.f32.gmra.mrb[0].mxu0 %v831
    %v950 = vpop.f32.mrb[0].mxu0
    %v951 = vadd.f32 %v782, %v950
    %v952 = vpop.f32.mrb[0].mxu0
    %953 = vmatprep.mubr.f32.mxu0 0.0
    %954 = vmatmul.mubr.f32.gmra.mrb[0].mxu0 %v834
    %v955 = vpop.f32.mrb[0].mxu0
    %v956 = vadd.f32 %v784, %v955
    %v957 = vpop.f32.mrb[0].mxu0
    %958 = vmatprep.mubr.f32.mxu0 0.0
    %959 = vmatmul.mubr.f32.gmra.mrb[0].mxu0 %v837
    %v960 = vpop.f32.mrb[0].mxu0
    %v961 = vadd.f32 %v786, %v960
    %v962 = vpop.f32.mrb[0].mxu0
    %963 = vmatprep.mubr.f32.mxu0 0.0
    %964 = vmatmul.mubr.f32.gmra.mrb[0].mxu0 %v840
    %v965 = vpop.f32.mrb[0].mxu0
    %v966 = vadd.f32 %v788, %v965
    %v967 = vpop.f32.mrb[0].mxu0
    %968 = vmatprep.mubr.f32.mxu0 0.0
    %969 = vmatmul.mubr.f32.gmra.mrb[0].mxu0 %v843
    %v970 = vpop.f32.mrb[0].mxu0
    %v971 = vadd.f32 %v790, %v970
    %v972 = vpop.f32.mrb[0].mxu0
    %973 = vmatprep.mubr.f32.mxu0 0.0
    %974 = vmatmul.mubr.f32.gmra.mrb[0].mxu0 %v846
    %v975 = vpop.f32.mrb[0].mxu0
    %v976 = vadd.f32 %v792, %v975
    %v977 = vpop.f32.mrb[0].mxu0
    %978 = vmatprep.mubr.f32.mxu0 0.0
    %979 = vmatmul.mubr.f32.gmra.mrb[0].mxu0 %v849
    %v980 = vpop.f32.mrb[0].mxu0
    %v981 = vadd.f32 %v794, %v980
    %v982 = vpop.f32.mrb[0].mxu0
    %983 = vmatprep.mubr.f32.mxu0 0.0
    %984 = vmatmul.mubr.f32.gmra.mrb[0].mxu0 %v852
    %v985 = vpop.f32.mrb[0].mxu0
    %v986 = vadd.f32 %v796, %v985
    %v987 = vpop.f32.mrb[0].mxu0
    %988 = vmatprep.mubr.f32.mxu0 0.0
    %989 = vmatmul.mubr.f32.gmra.mrb[0].mxu0 %v855
    %v990 = vpop.f32.mrb[0].mxu0
    %v991 = vadd.f32 %v798, %v990
    %v992 = vpop.f32.mrb[0].mxu0
    %993 = vmatprep.mubr.f32.mxu0 0.0
    %994 = vmatmul.mubr.f32.gmra.mrb[0].mxu0 %v858
    %v995 = vpop.f32.mrb[0].mxu0
    %v996 = vadd.f32 %v800, %v995
    %v997 = vpop.f32.mrb[0].mxu0
    %998 = vmatprep.mubr.f32.mxu0 0.0
    %999 = vmatmul.mubr.f32.gmra.mrb[0].mxu0 %v861
    %v1000 = vpop.f32.mrb[0].mxu0
    %v1001 = vadd.f32 %v802, %v1000
    %v1002 = vpop.f32.mrb[0].mxu0
    %1003 = vmatprep.mubr.f32.mxu0 0.0
    %1004 = vmatmul.mubr.f32.gmra.mrb[0].mxu0 %v864
    %v1005 = vpop.f32.mrb[0].mxu0
    %v1006 = vadd.f32 %v804, %v1005
    %v1007 = vpop.f32.mrb[0].mxu0
    %1008 = vmatprep.mubr.f32.mxu0 0.0
    %1009 = vmatmul.mubr.f32.gmra.mrb[0].mxu0 %v867
    %v1010 = vpop.f32.mrb[0].mxu0
    %v1011 = vadd.f32 %v806, %v1010
    %v1012 = vpop.f32.mrb[0].mxu0
    %1013 = vmatprep.mubr.f32.mxu0 0.0
    %1014 = vmatmul.mubr.f32.gmra.mrb[0].mxu0 %v870
    %v1015 = vpop.f32.mrb[0].mxu0
    %v1016 = vadd.f32 %v808, %v1015
    %v1017 = vpop.f32.mrb[0].mxu0
    %1018 = vmatprep.mubr.f32.mxu0 0.0
    %1019 = vmatmul.mubr.f32.gmra.mrb[0].mxu0 %v873
    %v1020 = vpop.f32.mrb[0].mxu0
    %v1021 = vadd.f32 %v810, %v1020
    %v1022 = vpop.f32.mrb[0].mxu0
    %1023 = vdwg.mxu0
    %v1024 = vsel %vm515, %v946, -inf
    %1025 = vmax.xlane.f32.xlu0 %v1024
    %v1026 = vpop.xlane.xlu0 %1025
    %v1027 = vsel %vm515, %v951, -inf
    %1028 = vmax.xlane.f32.xlu0 %v1027
    %v1029 = vpop.xlane.xlu0 %1028
    %v1030 = vsel %vm515, %v956, -inf
    %1031 = vmax.xlane.f32.xlu0 %v1030
    %v1032 = vpop.xlane.xlu0 %1031
    %v1033 = vsel %vm515, %v961, -inf
    %1034 = vmax.xlane.f32.xlu0 %v1033
    %v1035 = vpop.xlane.xlu0 %1034
    %v1036 = vsel %vm515, %v966, -inf
    %1037 = vmax.xlane.f32.xlu0 %v1036
    %v1038 = vpop.xlane.xlu0 %1037
    %v1039 = vsel %vm515, %v971, -inf
    %1040 = vmax.xlane.f32.xlu0 %v1039
    %v1041 = vpop.xlane.xlu0 %1040
    %v1042 = vsel %vm515, %v976, -inf
    %1043 = vmax.xlane.f32.xlu0 %v1042
    %v1044 = vpop.xlane.xlu0 %1043
    %v1045 = vsel %vm515, %v981, -inf
    %1046 = vmax.xlane.f32.xlu0 %v1045
    %v1047 = vpop.xlane.xlu0 %1046
    %v1048 = vsel %vm515, %v986, -inf
    %1049 = vmax.xlane.f32.xlu0 %v1048
    %v1050 = vpop.xlane.xlu0 %1049
    %v1051 = vsel %vm515, %v991, -inf
    %1052 = vmax.xlane.f32.xlu0 %v1051
    %v1053 = vpop.xlane.xlu0 %1052
    %v1054 = vsel %vm515, %v996, -inf
    %1055 = vmax.xlane.f32.xlu0 %v1054
    %v1056 = vpop.xlane.xlu0 %1055
    %v1057 = vsel %vm515, %v1001, -inf
    %1058 = vmax.xlane.f32.xlu0 %v1057
    %v1059 = vpop.xlane.xlu0 %1058
    %v1060 = vsel %vm515, %v1006, -inf
    %1061 = vmax.xlane.f32.xlu0 %v1060
    %v1062 = vpop.xlane.xlu0 %1061
    %v1063 = vsel %vm515, %v1011, -inf
    %1064 = vmax.xlane.f32.xlu0 %v1063
    %v1065 = vpop.xlane.xlu0 %1064
    %v1066 = vsel %vm515, %v1016, -inf
    %1067 = vmax.xlane.f32.xlu0 %v1066
    %v1068 = vpop.xlane.xlu0 %1067
    %v1069 = vsel %vm515, %v1021, -inf
    %1070 = vmax.xlane.f32.xlu0 %v1069
    %v1071 = vpop.xlane.xlu0 %1070
    %v1072 = vsub.f32 %v946, %v1026
    %v1073 = vsub.f32 %v951, %v1029
    %v1074 = vsub.f32 %v956, %v1032
    %v1075 = vsub.f32 %v961, %v1035
    %v1076 = vsub.f32 %v966, %v1038
    %v1077 = vsub.f32 %v971, %v1041
    %v1078 = vsub.f32 %v976, %v1044
    %v1079 = vsub.f32 %v981, %v1047
    %v1080 = vsub.f32 %v986, %v1050
    %v1081 = vsub.f32 %v991, %v1053
    %v1082 = vsub.f32 %v996, %v1056
    %v1083 = vsub.f32 %v1001, %v1059
    %v1084 = vsub.f32 %v1006, %v1062
    %v1085 = vsub.f32 %v1011, %v1065
    %v1086 = vsub.f32 %v1016, %v1068
    %v1087 = vsub.f32 %v1021, %v1071
    %v1088 = vmul.f32 %v1072, 1.442695
    %v1089 = vpow.pop %v1088
    %v1090 = vmul.f32 %v1073, 1.442695
    %v1091 = vpow.pop %v1090
    %v1092 = vmul.f32 %v1074, 1.442695
    %v1093 = vpow.pop %v1092
    %v1094 = vmul.f32 %v1075, 1.442695
    %v1095 = vpow.pop %v1094
    %v1096 = vmul.f32 %v1076, 1.442695
    %v1097 = vpow.pop %v1096
    %v1098 = vmul.f32 %v1077, 1.442695
    %v1099 = vpow.pop %v1098
    %v1100 = vmul.f32 %v1078, 1.442695
    %v1101 = vpow.pop %v1100
    %v1102 = vmul.f32 %v1079, 1.442695
    %v1103 = vpow.pop %v1102
    %v1104 = vmul.f32 %v1080, 1.442695
    %v1105 = vpow.pop %v1104
    %v1106 = vmul.f32 %v1081, 1.442695
    %v1107 = vpow.pop %v1106
    %v1108 = vmul.f32 %v1082, 1.442695
    %v1109 = vpow.pop %v1108
    %v1110 = vmul.f32 %v1083, 1.442695
    %v1111 = vpow.pop %v1110
    %v1112 = vmul.f32 %v1084, 1.442695
    %v1113 = vpow.pop %v1112
    %v1114 = vmul.f32 %v1085, 1.442695
    %v1115 = vpow.pop %v1114
    %v1116 = vmul.f32 %v1086, 1.442695
    %v1117 = vpow.pop %v1116
    %v1118 = vmul.f32 %v1087, 1.442695
    %v1119 = vpow.pop %v1118
    %v1120 = vsel %vm515, %v1089, 0.0
    %1121 = vadd.xlane.f32.xlu0 %v1120
    %v1122 = vpop.xlane.xlu0 %1121
    %v1123 = vsel %vm515, %v1091, 0.0
    %1124 = vadd.xlane.f32.xlu0 %v1123
    %v1125 = vpop.xlane.xlu0 %1124
    %v1126 = vsel %vm515, %v1093, 0.0
    %1127 = vadd.xlane.f32.xlu0 %v1126
    %v1128 = vpop.xlane.xlu0 %1127
    %v1129 = vsel %vm515, %v1095, 0.0
    %1130 = vadd.xlane.f32.xlu0 %v1129
    %v1131 = vpop.xlane.xlu0 %1130
    %v1132 = vsel %vm515, %v1097, 0.0
    %1133 = vadd.xlane.f32.xlu0 %v1132
    %v1134 = vpop.xlane.xlu0 %1133
    %v1135 = vsel %vm515, %v1099, 0.0
    %1136 = vadd.xlane.f32.xlu0 %v1135
    %v1137 = vpop.xlane.xlu0 %1136
    %v1138 = vsel %vm515, %v1101, 0.0
    %1139 = vadd.xlane.f32.xlu0 %v1138
    %v1140 = vpop.xlane.xlu0 %1139
    %v1141 = vsel %vm515, %v1103, 0.0
    %1142 = vadd.xlane.f32.xlu0 %v1141
    %v1143 = vpop.xlane.xlu0 %1142
    %v1144 = vsel %vm515, %v1105, 0.0
    %1145 = vadd.xlane.f32.xlu0 %v1144
    %v1146 = vpop.xlane.xlu0 %1145
    %v1147 = vsel %vm515, %v1107, 0.0
    %1148 = vadd.xlane.f32.xlu0 %v1147
    %v1149 = vpop.xlane.xlu0 %1148
    %v1150 = vsel %vm515, %v1109, 0.0
    %1151 = vadd.xlane.f32.xlu0 %v1150
    %v1152 = vpop.xlane.xlu0 %1151
    %v1153 = vsel %vm515, %v1111, 0.0
    %1154 = vadd.xlane.f32.xlu0 %v1153
    %v1155 = vpop.xlane.xlu0 %1154
    %v1156 = vsel %vm515, %v1113, 0.0
    %1157 = vadd.xlane.f32.xlu0 %v1156
    %v1158 = vpop.xlane.xlu0 %1157
    %v1159 = vsel %vm515, %v1115, 0.0
    %1160 = vadd.xlane.f32.xlu0 %v1159
    %v1161 = vpop.xlane.xlu0 %1160
    %v1162 = vsel %vm515, %v1117, 0.0
    %1163 = vadd.xlane.f32.xlu0 %v1162
    %v1164 = vpop.xlane.xlu0 %1163
    %v1165 = vsel %vm515, %v1119, 0.0
    %1166 = vadd.xlane.f32.xlu0 %v1165
    %v1167 = vpop.xlane.xlu0 %1166
    %v1168 = vrcp.pop %v1122
    %v1169 = vrcp.pop %v1125
    %v1170 = vrcp.pop %v1128
    %v1171 = vrcp.pop %v1131
    %v1172 = vrcp.pop %v1134
    %v1173 = vrcp.pop %v1137
    %v1174 = vrcp.pop %v1140
    %v1175 = vrcp.pop %v1143
    %v1176 = vrcp.pop %v1146
    %v1177 = vrcp.pop %v1149
    %v1178 = vrcp.pop %v1152
    %v1179 = vrcp.pop %v1155
    %v1180 = vrcp.pop %v1158
    %v1181 = vrcp.pop %v1161
    %v1182 = vrcp.pop %v1164
    %v1183 = vrcp.pop %v1167
    %v1184 = vmul.f32 %v1122, %v1168
    %v1185 = vmul.f32 %v1125, %v1169
    %v1186 = vmul.f32 %v1128, %v1170
    %v1187 = vmul.f32 %v1131, %v1171
    %v1188 = vmul.f32 %v1134, %v1172
    %v1189 = vmul.f32 %v1137, %v1173
    %v1190 = vmul.f32 %v1140, %v1174
    %v1191 = vmul.f32 %v1143, %v1175
    %v1192 = vmul.f32 %v1146, %v1176
    %v1193 = vmul.f32 %v1149, %v1177
    %v1194 = vmul.f32 %v1152, %v1178
    %v1195 = vmul.f32 %v1155, %v1179
    %v1196 = vmul.f32 %v1158, %v1180
    %v1197 = vmul.f32 %v1161, %v1181
    %v1198 = vmul.f32 %v1164, %v1182
    %v1199 = vmul.f32 %v1167, %v1183
    %v1200 = vsub.f32 2.0, %v1184
    %v1201 = vsub.f32 2.0, %v1185
    %v1202 = vsub.f32 2.0, %v1186
    %v1203 = vsub.f32 2.0, %v1187
    %v1204 = vsub.f32 2.0, %v1188
    %v1205 = vsub.f32 2.0, %v1189
    %v1206 = vsub.f32 2.0, %v1190
    %v1207 = vsub.f32 2.0, %v1191
    %v1208 = vsub.f32 2.0, %v1192
    %v1209 = vsub.f32 2.0, %v1193
    %v1210 = vsub.f32 2.0, %v1194
    %v1211 = vsub.f32 2.0, %v1195
    %v1212 = vsub.f32 2.0, %v1196
    %v1213 = vsub.f32 2.0, %v1197
    %v1214 = vsub.f32 2.0, %v1198
    %v1215 = vsub.f32 2.0, %v1199
    %v1216 = vmul.f32 %v1168, %v1200
    %v1217 = vmul.f32 %v1169, %v1201
    %v1218 = vmul.f32 %v1170, %v1202
    %v1219 = vmul.f32 %v1171, %v1203
    %v1220 = vmul.f32 %v1172, %v1204
    %v1221 = vmul.f32 %v1173, %v1205
    %v1222 = vmul.f32 %v1174, %v1206
    %v1223 = vmul.f32 %v1175, %v1207
    %v1224 = vmul.f32 %v1176, %v1208
    %v1225 = vmul.f32 %v1177, %v1209
    %v1226 = vmul.f32 %v1178, %v1210
    %v1227 = vmul.f32 %v1179, %v1211
    %v1228 = vmul.f32 %v1180, %v1212
    %v1229 = vmul.f32 %v1181, %v1213
    %v1230 = vmul.f32 %v1182, %v1214
    %v1231 = vmul.f32 %v1183, %v1215
    %v1232 = vmul.f32 %v1089, %v1216
    %v1233 = vmul.f32 %v1091, %v1217
    %v1234 = vmul.f32 %v1093, %v1218
    %v1235 = vmul.f32 %v1095, %v1219
    %v1236 = vmul.f32 %v1097, %v1220
    %v1237 = vmul.f32 %v1099, %v1221
    %v1238 = vmul.f32 %v1101, %v1222
    %v1239 = vmul.f32 %v1103, %v1223
    %v1240 = vmul.f32 %v1105, %v1224
    %v1241 = vmul.f32 %v1107, %v1225
    %v1242 = vmul.f32 %v1109, %v1226
    %v1243 = vmul.f32 %v1111, %v1227
    %v1244 = vmul.f32 %v1113, %v1228
    %v1245 = vmul.f32 %v1115, %v1229
    %v1246 = vmul.f32 %v1117, %v1230
    %v1247 = vmul.f32 %v1119, %v1231
    %1248 = vrot.lane.b32.xlu0 %v459, 64
    %v1249 = vpop.permute.xlu0 %1248
    %1250 = vrot.lane.b32.xlu0 %v464, 64
    %v1251 = vpop.permute.xlu0 %1250
    %v1255 = vsel %vm515, %v1232, 0
    %v1258 = vsel %vm515, %v1233, 0
    %v1261 = vsel %vm515, %v1234, 0
    %v1264 = vsel %vm515, %v1235, 0
    %v1267 = vsel %vm515, %v1236, 0
    %v1270 = vsel %vm515, %v1237, 0
    %v1273 = vsel %vm515, %v1238, 0
    %v1276 = vsel %vm515, %v1239, 0
    %v1279 = vsel %vm515, %v1240, 0
    %v1282 = vsel %vm515, %v1241, 0
    %v1285 = vsel %vm515, %v1242, 0
    %v1288 = vsel %vm515, %v1243, 0
    %v1291 = vsel %vm515, %v1244, 0
    %v1294 = vsel %vm515, %v1245, 0
    %v1297 = vsel %vm515, %v1246, 0
    %v1300 = vsel %vm515, %v1247, 0
    %1302 = vmatprep.subr.mxu0 0.0
    %1303 = vmatpush1.msra.mxu0 %v1249
    %1304 = vmatprep.subr.mxu0 0.0
    %1305 = vmatpush1.msra.mxu0 %v1251
    %1306 = vmatprep.subr.mxu0 0.0
    %1307 = vmatpush1.msra.mxu0 0.0
    %1308 = vmatprep.subr.mxu0 0.0
    %1309 = vmatpush1.msra.mxu0 0.0
    %1310 = vmatprep.subr.mxu0 0.0
    %1311 = vmatpush1.msra.mxu0 0.0
    %1312 = vmatprep.subr.mxu0 0.0
    %1313 = vmatpush1.msra.mxu0 0.0
    %1314 = vmatprep.subr.mxu0 0.0
    %1315 = vmatpush1.msra.mxu0 0.0
    %1316 = vmatprep.subr.mxu0 0.0
    %1317 = vmatpush1.msra.mxu0 0.0
    %1318 = vmatprep.subr.mxu0 0.0
    %1319 = vmatpush1.msra.mxu0 0.0
    %1320 = vmatprep.subr.mxu0 0.0
    %1321 = vmatpush1.msra.mxu0 0.0
    %1322 = vmatprep.subr.mxu0 0.0
    %1323 = vmatpush1.msra.mxu0 0.0
    %1324 = vmatprep.subr.mxu0 0.0
    %1325 = vmatpush1.msra.mxu0 0.0
    %1326 = vmatprep.subr.mxu0 0.0
    %1327 = vmatpush1.msra.mxu0 0.0
    %1328 = vmatprep.subr.mxu0 0.0
    %1329 = vmatpush1.msra.mxu0 0.0
    %1330 = vmatprep.subr.mxu0 0.0
    %1331 = vmatpush1.msra.mxu0 0.0
    %1332 = vmatprep.subr.mxu0 0.0
    %1333 = vmatpush1.msra.mxu0 0.0
    %1334 = vmatprep.subr.mxu0 0.0
    %1335 = vmatpush1.msra.mxu0 0.0
    %1336 = vmatprep.subr.mxu0 0.0
    %1337 = vmatpush1.msra.mxu0 0.0
    %1338 = vmatprep.subr.mxu0 0.0
    %1339 = vmatpush1.msra.mxu0 0.0
    %1340 = vmatprep.subr.mxu0 0.0
    %1341 = vmatpush1.msra.mxu0 0.0
    %1342 = vmatprep.subr.mxu0 0.0
    %1343 = vmatpush1.msra.mxu0 0.0
    %1344 = vmatprep.subr.mxu0 0.0
    %1345 = vmatpush1.msra.mxu0 0.0
    %1346 = vmatprep.subr.mxu0 0.0
    %1347 = vmatpush1.msra.mxu0 0.0
    %1348 = vmatprep.subr.mxu0 0.0
    %1349 = vmatpush1.msra.mxu0 0.0
    %1350 = vmatprep.subr.mxu0 0.0
    %1351 = vmatpush1.msra.mxu0 0.0
    %1352 = vmatprep.subr.mxu0 0.0
    %1353 = vmatpush1.msra.mxu0 0.0
    %1354 = vmatprep.subr.mxu0 0.0
    %1355 = vmatpush1.msra.mxu0 0.0
    %1356 = vmatprep.subr.mxu0 0.0
    %1357 = vmatpush1.msra.mxu0 0.0
    %1358 = vmatprep.subr.mxu0 0.0
    %1359 = vmatpush1.msra.mxu0 0.0
    %1360 = vmatprep.subr.mxu0 0.0
    %1361 = vmatpush1.msra.mxu0 0.0
    %1362 = vmatprep.subr.mxu0 0.0
    %1363 = vmatpush1.msra.mxu0 0.0
    %1364 = vmatprep.subr.mxu0 0.0
    %1365 = vmatpush1.msra.mxu0 0.0
    %1366 = vmatprep.mubr.f32.mxu0 0.0
    %1367 = vmatmul.mubr.f32.gmra.mrb[0].mxu0 %v1255
    %v1368 = vpop.f32.mrb[0].mxu0
    %v1369 = vadd.f32 0.0, %v1368
    %v1370 = vpop.f32.mrb[0].mxu0
    %1371 = vmatprep.mubr.f32.mxu0 0.0
    %1372 = vmatmul.mubr.f32.gmra.mrb[0].mxu0 %v1258
    %v1373 = vpop.f32.mrb[0].mxu0
    %v1374 = vadd.f32 0.0, %v1373
    %v1375 = vpop.f32.mrb[0].mxu0
    %1376 = vmatprep.mubr.f32.mxu0 0.0
    %1377 = vmatmul.mubr.f32.gmra.mrb[0].mxu0 %v1261
    %v1378 = vpop.f32.mrb[0].mxu0
    %v1379 = vadd.f32 0.0, %v1378
    %v1380 = vpop.f32.mrb[0].mxu0
    %1381 = vmatprep.mubr.f32.mxu0 0.0
    %1382 = vmatmul.mubr.f32.gmra.mrb[0].mxu0 %v1264
    %v1383 = vpop.f32.mrb[0].mxu0
    %v1384 = vadd.f32 0.0, %v1383
    %v1385 = vpop.f32.mrb[0].mxu0
    %1386 = vmatprep.mubr.f32.mxu0 0.0
    %1387 = vmatmul.mubr.f32.gmra.mrb[0].mxu0 %v1267
    %v1388 = vpop.f32.mrb[0].mxu0
    %v1389 = vadd.f32 0.0, %v1388
    %v1390 = vpop.f32.mrb[0].mxu0
    %1391 = vmatprep.mubr.f32.mxu0 0.0
    %1392 = vmatmul.mubr.f32.gmra.mrb[0].mxu0 %v1270
    %v1393 = vpop.f32.mrb[0].mxu0
    %v1394 = vadd.f32 0.0, %v1393
    %v1395 = vpop.f32.mrb[0].mxu0
    %1396 = vmatprep.mubr.f32.mxu0 0.0
    %1397 = vmatmul.mubr.f32.gmra.mrb[0].mxu0 %v1273
    %v1398 = vpop.f32.mrb[0].mxu0
    %v1399 = vadd.f32 0.0, %v1398
    %v1400 = vpop.f32.mrb[0].mxu0
    %1401 = vmatprep.mubr.f32.mxu0 0.0
    %1402 = vmatmul.mubr.f32.gmra.mrb[0].mxu0 %v1276
    %v1403 = vpop.f32.mrb[0].mxu0
    %v1404 = vadd.f32 0.0, %v1403
    %v1405 = vpop.f32.mrb[0].mxu0
    %1406 = vmatprep.mubr.f32.mxu0 0.0
    %1407 = vmatmul.mubr.f32.gmra.mrb[0].mxu0 %v1279
    %v1408 = vpop.f32.mrb[0].mxu0
    %v1409 = vadd.f32 0.0, %v1408
    %v1410 = vpop.f32.mrb[0].mxu0
    %1411 = vmatprep.mubr.f32.mxu0 0.0
    %1412 = vmatmul.mubr.f32.gmra.mrb[0].mxu0 %v1282
    %v1413 = vpop.f32.mrb[0].mxu0
    %v1414 = vadd.f32 0.0, %v1413
    %v1415 = vpop.f32.mrb[0].mxu0
    %1416 = vmatprep.mubr.f32.mxu0 0.0
    %1417 = vmatmul.mubr.f32.gmra.mrb[0].mxu0 %v1285
    %v1418 = vpop.f32.mrb[0].mxu0
    %v1419 = vadd.f32 0.0, %v1418
    %v1420 = vpop.f32.mrb[0].mxu0
    %1421 = vmatprep.mubr.f32.mxu0 0.0
    %1422 = vmatmul.mubr.f32.gmra.mrb[0].mxu0 %v1288
    %v1423 = vpop.f32.mrb[0].mxu0
    %v1424 = vadd.f32 0.0, %v1423
    %v1425 = vpop.f32.mrb[0].mxu0
    %1426 = vmatprep.mubr.f32.mxu0 0.0
    %1427 = vmatmul.mubr.f32.gmra.mrb[0].mxu0 %v1291
    %v1428 = vpop.f32.mrb[0].mxu0
    %v1429 = vadd.f32 0.0, %v1428
    %v1430 = vpop.f32.mrb[0].mxu0
    %1431 = vmatprep.mubr.f32.mxu0 0.0
    %1432 = vmatmul.mubr.f32.gmra.mrb[0].mxu0 %v1294
    %v1433 = vpop.f32.mrb[0].mxu0
    %v1434 = vadd.f32 0.0, %v1433
    %v1435 = vpop.f32.mrb[0].mxu0
    %1436 = vmatprep.mubr.f32.mxu0 0.0
    %1437 = vmatmul.mubr.f32.gmra.mrb[0].mxu0 %v1297
    %v1438 = vpop.f32.mrb[0].mxu0
    %v1439 = vadd.f32 0.0, %v1438
    %v1440 = vpop.f32.mrb[0].mxu0
    %1441 = vmatprep.mubr.f32.mxu0 0.0
    %1442 = vmatmul.mubr.f32.gmra.mrb[0].mxu0 %v1300
    %v1443 = vpop.f32.mrb[0].mxu0
    %v1444 = vadd.f32 0.0, %v1443
    %v1445 = vpop.f32.mrb[0].mxu0
    %1446 = vdwg.mxu0
    %v1447 = vmul.f32 %v1369, %v694
    %v1448 = vmul.f32 %v1374, %v696
    %v1449 = vmul.f32 %v1379, %v698
    %v1450 = vmul.f32 %v1384, %v700
    %v1451 = vmul.f32 %v1389, %v702
    %v1452 = vmul.f32 %v1394, %v704
    %v1453 = vmul.f32 %v1399, %v706
    %v1454 = vmul.f32 %v1404, %v708
    %v1455 = vmul.f32 %v1409, %v710
    %v1456 = vmul.f32 %v1414, %v712
    %v1457 = vmul.f32 %v1419, %v714
    %v1458 = vmul.f32 %v1424, %v716
    %v1459 = vmul.f32 %v1429, %v718
    %v1460 = vmul.f32 %v1434, %v720
    %v1461 = vmul.f32 %v1439, %v722
    %v1462 = vmul.f32 %v1444, %v724
    %1463 = vmatprep.subr.mxu0 0.0
    %1464 = vmatpush1.msra.mxu0 %v1447
    %1465 = vmatprep.subr.mxu0 0.0
    %1466 = vmatpush1.msra.mxu0 %v1448
    %1467 = vmatprep.subr.mxu0 0.0
    %1468 = vmatpush1.msra.mxu0 %v1449
    %1469 = vmatprep.subr.mxu0 0.0
    %1470 = vmatpush1.msra.mxu0 %v1450
    %1471 = vmatprep.subr.mxu0 0.0
    %1472 = vmatpush1.msra.mxu0 %v1451
    %1473 = vmatprep.subr.mxu0 0.0
    %1474 = vmatpush1.msra.mxu0 %v1452
    %1475 = vmatprep.subr.mxu0 0.0
    %1476 = vmatpush1.msra.mxu0 %v1453
    %1477 = vmatprep.subr.mxu0 0.0
    %1478 = vmatpush1.msra.mxu0 %v1454
    %1479 = vmatprep.subr.mxu0 0.0
    %1480 = vmatpush1.msra.mxu0 %v1455
    %1481 = vmatprep.subr.mxu0 0.0
    %1482 = vmatpush1.msra.mxu0 %v1456
    %1483 = vmatprep.subr.mxu0 0.0
    %1484 = vmatpush1.msra.mxu0 %v1457
    %1485 = vmatprep.subr.mxu0 0.0
    %1486 = vmatpush1.msra.mxu0 %v1458
    %1487 = vmatprep.subr.mxu0 0.0
    %1488 = vmatpush1.msra.mxu0 %v1459
    %1489 = vmatprep.subr.mxu0 0.0
    %1490 = vmatpush1.msra.mxu0 %v1460
    %1491 = vmatprep.subr.mxu0 0.0
    %1492 = vmatpush1.msra.mxu0 %v1461
    %1493 = vmatprep.subr.mxu0 0.0
    %1494 = vmatpush1.msra.mxu0 %v1462
    %1495 = vmatprep.subr.mxu0 0.0
    %1496 = vmatpush1.msra.mxu0 0.0
    %1497 = vmatprep.subr.mxu0 0.0
    %1498 = vmatpush1.msra.mxu0 0.0
    %1499 = vmatprep.subr.mxu0 0.0
    %1500 = vmatpush1.msra.mxu0 0.0
    %1501 = vmatprep.subr.mxu0 0.0
    %1502 = vmatpush1.msra.mxu0 0.0
    %1503 = vmatprep.subr.mxu0 0.0
    %1504 = vmatpush1.msra.mxu0 0.0
    %1505 = vmatprep.subr.mxu0 0.0
    %1506 = vmatpush1.msra.mxu0 0.0
    %1507 = vmatprep.subr.mxu0 0.0
    %1508 = vmatpush1.msra.mxu0 0.0
    %1509 = vmatprep.subr.mxu0 0.0
    %1510 = vmatpush1.msra.mxu0 0.0
    %1511 = vmatprep.subr.mxu0 0.0
    %1512 = vmatpush1.msra.mxu0 0.0
    %1513 = vmatprep.subr.mxu0 0.0
    %1514 = vmatpush1.msra.mxu0 0.0
    %1515 = vmatprep.subr.mxu0 0.0
    %1516 = vmatpush1.msra.mxu0 0.0
    %1517 = vmatprep.subr.mxu0 0.0
    %1518 = vmatpush1.msra.mxu0 0.0
    %1519 = vmatprep.subr.mxu0 0.0
    %1520 = vmatpush1.msra.mxu0 0.0
    %1521 = vmatprep.subr.mxu0 0.0
    %1522 = vmatpush1.msra.mxu0 0.0
    %1523 = vmatprep.subr.mxu0 0.0
    %1524 = vmatpush1.msra.mxu0 0.0
    %1525 = vmatprep.subr.mxu0 0.0
    %1526 = vmatpush1.msra.mxu0 0.0
    %1527 = vmatprep.mubr.f32.mxu0 0.0
    %1528 = vmatmul.mubr.f32.gmra.mrb[0].mxu0 %v106
    %v1529 = vpop.f32.mrb[0].mxu0
    %v1530 = vadd.f32 0.0, %v1529
    %v1531 = vpop.f32.mrb[0].mxu0
    %1532 = vmatprep.mubr.f32.mxu0 0.0
    %1533 = vmatmul.mubr.f32.gmra.mrb[0].mxu0 %v107
    %v1534 = vpop.f32.mrb[0].mxu0
    %v1535 = vadd.f32 0.0, %v1534
    %v1536 = vpop.f32.mrb[0].mxu0
    %1537 = vdwg.mxu0
    %v1538 = vlaneseq
    %v1539 = vshrl.u32 %v1538, 7
    %v1540 = vsub.s32 3, %v1539
    %v1541 = vrot.slane %v44, %v1540
    %1546 = vrot.lane.b32.xlu0 %v376, 64
    %v1547 = vpop.permute.xlu0 %1546
    %1548 = vrot.lane.b32.xlu0 %v377, 64
    %v1549 = vpop.permute.xlu0 %1548
    %1550 = vrot.lane.b32.xlu0 %v378, 64
    %v1551 = vpop.permute.xlu0 %1550
    %1552 = vrot.lane.b32.xlu0 %v379, 64
    %v1553 = vpop.permute.xlu0 %1552
    %v1559 = vsel %vm278, %v1530, 0
    %v1562 = vsel %vm278, %v1535, 0
    %1564 = vmatprep.subr.mxu0 0.0
    %1565 = vmatpush1.msra.mxu0 %v1547
    %1566 = vmatprep.subr.mxu0 0.0
    %1567 = vmatpush1.msra.mxu0 %v1549
    %1568 = vmatprep.subr.mxu0 0.0
    %1569 = vmatpush1.msra.mxu0 %v1551
    %1570 = vmatprep.subr.mxu0 0.0
    %1571 = vmatpush1.msra.mxu0 %v1553
    %1572 = vmatprep.subr.mxu0 0.0
    %1573 = vmatpush1.msra.mxu0 0.0
    %1574 = vmatprep.subr.mxu0 0.0
    %1575 = vmatpush1.msra.mxu0 0.0
    %1576 = vmatprep.subr.mxu0 0.0
    %1577 = vmatpush1.msra.mxu0 0.0
    %1578 = vmatprep.subr.mxu0 0.0
    %1579 = vmatpush1.msra.mxu0 0.0
    %1580 = vmatprep.subr.mxu0 0.0
    %1581 = vmatpush1.msra.mxu0 0.0
    %1582 = vmatprep.subr.mxu0 0.0
    %1583 = vmatpush1.msra.mxu0 0.0
    %1584 = vmatprep.subr.mxu0 0.0
    %1585 = vmatpush1.msra.mxu0 0.0
    %1586 = vmatprep.subr.mxu0 0.0
    %1587 = vmatpush1.msra.mxu0 0.0
    %1588 = vmatprep.subr.mxu0 0.0
    %1589 = vmatpush1.msra.mxu0 0.0
    %1590 = vmatprep.subr.mxu0 0.0
    %1591 = vmatpush1.msra.mxu0 0.0
    %1592 = vmatprep.subr.mxu0 0.0
    %1593 = vmatpush1.msra.mxu0 0.0
    %1594 = vmatprep.subr.mxu0 0.0
    %1595 = vmatpush1.msra.mxu0 0.0
    %1596 = vmatprep.subr.mxu0 0.0
    %1597 = vmatpush1.msra.mxu0 0.0
    %1598 = vmatprep.subr.mxu0 0.0
    %1599 = vmatpush1.msra.mxu0 0.0
    %1600 = vmatprep.subr.mxu0 0.0
    %1601 = vmatpush1.msra.mxu0 0.0
    %1602 = vmatprep.subr.mxu0 0.0
    %1603 = vmatpush1.msra.mxu0 0.0
    %1604 = vmatprep.subr.mxu0 0.0
    %1605 = vmatpush1.msra.mxu0 0.0
    %1606 = vmatprep.subr.mxu0 0.0
    %1607 = vmatpush1.msra.mxu0 0.0
    %1608 = vmatprep.subr.mxu0 0.0
    %1609 = vmatpush1.msra.mxu0 0.0
    %1610 = vmatprep.subr.mxu0 0.0
    %1611 = vmatpush1.msra.mxu0 0.0
    %1612 = vmatprep.subr.mxu0 0.0
    %1613 = vmatpush1.msra.mxu0 0.0
    %1614 = vmatprep.subr.mxu0 0.0
    %1615 = vmatpush1.msra.mxu0 0.0
    %1616 = vmatprep.subr.mxu0 0.0
    %1617 = vmatpush1.msra.mxu0 0.0
    %1618 = vmatprep.subr.mxu0 0.0
    %1619 = vmatpush1.msra.mxu0 0.0
    %1620 = vmatprep.subr.mxu0 0.0
    %1621 = vmatpush1.msra.mxu0 0.0
    %1622 = vmatprep.subr.mxu0 0.0
    %1623 = vmatpush1.msra.mxu0 0.0
    %1624 = vmatprep.subr.mxu0 0.0
    %1625 = vmatpush1.msra.mxu0 0.0
    %1626 = vmatprep.subr.mxu0 0.0
    %1627 = vmatpush1.msra.mxu0 0.0
    %1628 = vmatprep.mubr.f32.mxu0 0.0
    %1629 = vmatmul.mubr.f32.gmra.mrb[0].mxu0 %v1559
    %v1630 = vpop.f32.mrb[0].mxu0
    %v1631 = vadd.f32 %v1541, %v1630
    %v1632 = vpop.f32.mrb[0].mxu0
    %1633 = vmatprep.mubr.f32.mxu0 0.0
    %1634 = vmatmul.mubr.f32.gmra.mrb[0].mxu0 %v1562
    %v1635 = vpop.f32.mrb[0].mxu0
    %v1636 = vadd.f32 %v1541, %v1635
    %v1637 = vpop.f32.mrb[0].mxu0
    %1638 = vdwg.mxu0
    %1641 = vrot.lane.b32.xlu0 %v1631, 64
    %v1642 = vpop.permute.xlu0 %1641
    %1643 = vrot.lane.b32.xlu0 %v1636, 64
    %v1644 = vpop.permute.xlu0 %1643
    %v1647 = vadd.f32 %v40, %v1642
    %v1648 = vadd.f32 %v41, %v1644
    %1651 = vrot.lane.b32.xlu0 %v1647, 64
    %v1652 = vpop.permute.xlu0 %1651
    %1653 = vrot.lane.b32.xlu0 %v1648, 64
    %v1654 = vpop.permute.xlu0 %1653
    %v1657 = vsel %vm278, %v1652, 0.0
    %1658 = vadd.xlane.f32.xlu0 %v1657
    %v1659 = vpop.xlane.xlu0 %1658
    %v1660 = vsel %vm278, %v1654, 0.0
    %1661 = vadd.xlane.f32.xlu0 %v1660
    %v1662 = vpop.xlane.xlu0 %1661
    %v1663 = vrcp.pop 32.0
    %v1664 = vmul.f32 %v1659, %v1663
    %v1665 = vmul.f32 %v1662, %v1663
    %v1666 = vsub.f32 %v1647, %v1664
    %v1667 = vsub.f32 %v1648, %v1665
    %v1668 = vmul.f32 %v1666, %v1666
    %v1669 = vmul.f32 %v1667, %v1667
    %1672 = vrot.lane.b32.xlu0 %v1668, 64
    %v1673 = vpop.permute.xlu0 %1672
    %1674 = vrot.lane.b32.xlu0 %v1669, 64
    %v1675 = vpop.permute.xlu0 %1674
    %v1678 = vsel %vm278, %v1673, 0.0
    %1679 = vadd.xlane.f32.xlu0 %v1678
    %v1680 = vpop.xlane.xlu0 %1679
    %v1681 = vsel %vm278, %v1675, 0.0
    %1682 = vadd.xlane.f32.xlu0 %v1681
    %v1683 = vpop.xlane.xlu0 %1682
    %v1684 = vmul.f32 %v1680, %v1663
    %v1685 = vmul.f32 %v1683, %v1663
    %v1686 = vadd.f32 %v1684, 1e-05
    %v1687 = vadd.f32 %v1685, 1e-05
    %v1688 = vrsqrt.pop %v1686
    %v1689 = vrsqrt.pop %v1687
    %v1690 = vmul.f32 %v1666, %v1688
    %v1691 = vmul.f32 %v1667, %v1689
    %v1692 = vlaneseq
    %v1693 = vshrl.u32 %v1692, 7
    %v1694 = vsub.s32 7, %v1693
    %v1695 = vrot.slane %v44, %v1694
    %1697 = vrot.lane.b32.xlu0 %v1695, 64
    %v1698 = vpop.permute.xlu0 %1697
    %v1700 = vmul.f32 %v1690, %v1698
    %v1701 = vmul.f32 %v1691, %v1698
    %v1702 = vlaneseq
    %v1703 = vshrl.u32 %v1702, 7
    %v1704 = vsub.s32 0, %v1703
    %v1705 = vrot.slane %v45, %v1704
    %1707 = vrot.lane.b32.xlu0 %v1705, 64
    %v1708 = vpop.permute.xlu0 %1707
    %v1710 = vadd.f32 %v1700, %v1708
    %v1711 = vadd.f32 %v1701, %v1708
    %v1712 = vlaneseq
    %v1713 = vshrl.u32 %v1712, 7
    %v1714 = vsub.s32 4, %v1713
    %v1715 = vrot.slane %v44, %v1714
    %1718 = vrot.lane.b32.xlu0 %v1710, 64
    %v1719 = vpop.permute.xlu0 %1718
    %1720 = vrot.lane.b32.xlu0 %v1711, 64
    %v1721 = vpop.permute.xlu0 %1720
    %1722 = vrot.lane.b32.xlu0 %v376, 32
    %v1723 = vpop.permute.xlu0 %1722
    %1724 = vrot.lane.b32.xlu0 %v377, 32
    %v1725 = vpop.permute.xlu0 %1724
    %1726 = vrot.lane.b32.xlu0 %v378, 32
    %v1727 = vpop.permute.xlu0 %1726
    %1728 = vrot.lane.b32.xlu0 %v379, 32
    %v1729 = vpop.permute.xlu0 %1728
    %v1734 = vsel %vm278, %v1719, 0
    %v1736 = vsel %vm278, %v1721, 0
    %1738 = vmatprep.subr.mxu0 0.0
    %1739 = vmatpush1.msra.mxu0 %v1723
    %1740 = vmatprep.subr.mxu0 0.0
    %1741 = vmatpush1.msra.mxu0 %v1725
    %1742 = vmatprep.subr.mxu0 0.0
    %1743 = vmatpush1.msra.mxu0 %v1727
    %1744 = vmatprep.subr.mxu0 0.0
    %1745 = vmatpush1.msra.mxu0 %v1729
    %1746 = vmatprep.subr.mxu0 0.0
    %1747 = vmatpush1.msra.mxu0 0.0
    %1748 = vmatprep.subr.mxu0 0.0
    %1749 = vmatpush1.msra.mxu0 0.0
    %1750 = vmatprep.subr.mxu0 0.0
    %1751 = vmatpush1.msra.mxu0 0.0
    %1752 = vmatprep.subr.mxu0 0.0
    %1753 = vmatpush1.msra.mxu0 0.0
    %1754 = vmatprep.subr.mxu0 0.0
    %1755 = vmatpush1.msra.mxu0 0.0
    %1756 = vmatprep.subr.mxu0 0.0
    %1757 = vmatpush1.msra.mxu0 0.0
    %1758 = vmatprep.subr.mxu0 0.0
    %1759 = vmatpush1.msra.mxu0 0.0
    %1760 = vmatprep.subr.mxu0 0.0
    %1761 = vmatpush1.msra.mxu0 0.0
    %1762 = vmatprep.subr.mxu0 0.0
    %1763 = vmatpush1.msra.mxu0 0.0
    %1764 = vmatprep.subr.mxu0 0.0
    %1765 = vmatpush1.msra.mxu0 0.0
    %1766 = vmatprep.subr.mxu0 0.0
    %1767 = vmatpush1.msra.mxu0 0.0
    %1768 = vmatprep.subr.mxu0 0.0
    %1769 = vmatpush1.msra.mxu0 0.0
    %1770 = vmatprep.subr.mxu0 0.0
    %1771 = vmatpush1.msra.mxu0 0.0
    %1772 = vmatprep.subr.mxu0 0.0
    %1773 = vmatpush1.msra.mxu0 0.0
    %1774 = vmatprep.subr.mxu0 0.0
    %1775 = vmatpush1.msra.mxu0 0.0
    %1776 = vmatprep.subr.mxu0 0.0
    %1777 = vmatpush1.msra.mxu0 0.0
    %1778 = vmatprep.subr.mxu0 0.0
    %1779 = vmatpush1.msra.mxu0 0.0
    %1780 = vmatprep.subr.mxu0 0.0
    %1781 = vmatpush1.msra.mxu0 0.0
    %1782 = vmatprep.subr.mxu0 0.0
    %1783 = vmatpush1.msra.mxu0 0.0
    %1784 = vmatprep.subr.mxu0 0.0
    %1785 = vmatpush1.msra.mxu0 0.0
    %1786 = vmatprep.subr.mxu0 0.0
    %1787 = vmatpush1.msra.mxu0 0.0
    %1788 = vmatprep.subr.mxu0 0.0
    %1789 = vmatpush1.msra.mxu0 0.0
    %1790 = vmatprep.subr.mxu0 0.0
    %1791 = vmatpush1.msra.mxu0 0.0
    %1792 = vmatprep.subr.mxu0 0.0
    %1793 = vmatpush1.msra.mxu0 0.0
    %1794 = vmatprep.subr.mxu0 0.0
    %1795 = vmatpush1.msra.mxu0 0.0
    %1796 = vmatprep.subr.mxu0 0.0
    %1797 = vmatpush1.msra.mxu0 0.0
    %1798 = vmatprep.subr.mxu0 0.0
    %1799 = vmatpush1.msra.mxu0 0.0
    %1800 = vmatprep.subr.mxu0 0.0
    %1801 = vmatpush1.msra.mxu0 0.0
    %1802 = vmatprep.mubr.f32.mxu0 0.0
    %1803 = vmatmul.mubr.f32.gmra.mrb[0].mxu0 %v1734
    %v1804 = vpop.f32.mrb[0].mxu0
    %v1805 = vadd.f32 %v1715, %v1804
    %v1806 = vpop.f32.mrb[0].mxu0
    %1807 = vmatprep.mubr.f32.mxu0 0.0
    %1808 = vmatmul.mubr.f32.gmra.mrb[0].mxu0 %v1736
    %v1809 = vpop.f32.mrb[0].mxu0
    %v1810 = vadd.f32 %v1715, %v1809
    %v1811 = vpop.f32.mrb[0].mxu0
    %1812 = vdwg.mxu0
    %v1813 = vlaneseq
    %v1814 = vshrl.u32 %v1813, 7
    %v1815 = vsub.s32 5, %v1814
    %v1816 = vrot.slane %v44, %v1815
    %v1818 = vsel %vm278, %v358, 0
    %v1821 = vsel %vm278, %v363, 0
    %v1824 = vsel %vm278, %v368, 0
    %v1827 = vsel %vm278, %v373, 0
    %1829 = vmatprep.subr.mxu0 0.0
    %1830 = vmatpush1.msra.mxu0 %v376
    %1831 = vmatprep.subr.mxu0 0.0
    %1832 = vmatpush1.msra.mxu0 %v377
    %1833 = vmatprep.subr.mxu0 0.0
    %1834 = vmatpush1.msra.mxu0 %v378
    %1835 = vmatprep.subr.mxu0 0.0
    %1836 = vmatpush1.msra.mxu0 %v379
    %1837 = vmatprep.subr.mxu0 0.0
    %1838 = vmatpush1.msra.mxu0 0.0
    %1839 = vmatprep.subr.mxu0 0.0
    %1840 = vmatpush1.msra.mxu0 0.0
    %1841 = vmatprep.subr.mxu0 0.0
    %1842 = vmatpush1.msra.mxu0 0.0
    %1843 = vmatprep.subr.mxu0 0.0
    %1844 = vmatpush1.msra.mxu0 0.0
    %1845 = vmatprep.subr.mxu0 0.0
    %1846 = vmatpush1.msra.mxu0 0.0
    %1847 = vmatprep.subr.mxu0 0.0
    %1848 = vmatpush1.msra.mxu0 0.0
    %1849 = vmatprep.subr.mxu0 0.0
    %1850 = vmatpush1.msra.mxu0 0.0
    %1851 = vmatprep.subr.mxu0 0.0
    %1852 = vmatpush1.msra.mxu0 0.0
    %1853 = vmatprep.subr.mxu0 0.0
    %1854 = vmatpush1.msra.mxu0 0.0
    %1855 = vmatprep.subr.mxu0 0.0
    %1856 = vmatpush1.msra.mxu0 0.0
    %1857 = vmatprep.subr.mxu0 0.0
    %1858 = vmatpush1.msra.mxu0 0.0
    %1859 = vmatprep.subr.mxu0 0.0
    %1860 = vmatpush1.msra.mxu0 0.0
    %1861 = vmatprep.subr.mxu0 0.0
    %1862 = vmatpush1.msra.mxu0 0.0
    %1863 = vmatprep.subr.mxu0 0.0
    %1864 = vmatpush1.msra.mxu0 0.0
    %1865 = vmatprep.subr.mxu0 0.0
    %1866 = vmatpush1.msra.mxu0 0.0
    %1867 = vmatprep.subr.mxu0 0.0
    %1868 = vmatpush1.msra.mxu0 0.0
    %1869 = vmatprep.subr.mxu0 0.0
    %1870 = vmatpush1.msra.mxu0 0.0
    %1871 = vmatprep.subr.mxu0 0.0
    %1872 = vmatpush1.msra.mxu0 0.0
    %1873 = vmatprep.subr.mxu0 0.0
    %1874 = vmatpush1.msra.mxu0 0.0
    %1875 = vmatprep.subr.mxu0 0.0
    %1876 = vmatpush1.msra.mxu0 0.0
    %1877 = vmatprep.subr.mxu0 0.0
    %1878 = vmatpush1.msra.mxu0 0.0
    %1879 = vmatprep.subr.mxu0 0.0
    %1880 = vmatpush1.msra.mxu0 0.0
    %1881 = vmatprep.subr.mxu0 0.0
    %1882 = vmatpush1.msra.mxu0 0.0
    %1883 = vmatprep.subr.mxu0 0.0
    %1884 = vmatpush1.msra.mxu0 0.0
    %1885 = vmatprep.subr.mxu0 0.0
    %1886 = vmatpush1.msra.mxu0 0.0
    %1887 = vmatprep.subr.mxu0 0.0
    %1888 = vmatpush1.msra.mxu0 0.0
    %1889 = vmatprep.subr.mxu0 0.0
    %1890 = vmatpush1.msra.mxu0 0.0
    %1891 = vmatprep.subr.mxu0 0.0
    %1892 = vmatpush1.msra.mxu0 0.0
    %1893 = vmatprep.mubr.f32.mxu0 0.0
    %1894 = vmatmul.mubr.f32.gmra.mrb[0].mxu0 %v1818
    %v1895 = vpop.f32.mrb[0].mxu0
    %v1896 = vadd.f32 %v1816, %v1895
    %v1897 = vpop.f32.mrb[0].mxu0
    %1898 = vmatprep.mubr.f32.mxu0 0.0
    %1899 = vmatmul.mubr.f32.gmra.mrb[0].mxu0 %v1821
    %v1900 = vpop.f32.mrb[0].mxu0
    %v1901 = vadd.f32 %v1816, %v1900
    %v1902 = vpop.f32.mrb[0].mxu0
    %1903 = vmatprep.mubr.f32.mxu0 0.0
    %1904 = vmatmul.mubr.f32.gmra.mrb[0].mxu0 %v1824
    %v1905 = vpop.f32.mrb[0].mxu0
    %v1906 = vadd.f32 %v1816, %v1905
    %v1907 = vpop.f32.mrb[0].mxu0
    %1908 = vmatprep.mubr.f32.mxu0 0.0
    %1909 = vmatmul.mubr.f32.gmra.mrb[0].mxu0 %v1827
    %v1910 = vpop.f32.mrb[0].mxu0
    %v1911 = vadd.f32 %v1816, %v1910
    %v1912 = vpop.f32.mrb[0].mxu0
    %1913 = vdwg.mxu0
    %1914 = vmatprep.subr.mxu0 0.0
    %1915 = vmatpush1.msra.mxu0 %v1805
    %1916 = vmatprep.subr.mxu0 0.0
    %1917 = vmatpush1.msra.mxu0 %v1810
    %1918 = vmatprep.subr.mxu0 0.0
    %1919 = vmatpush1.msra.mxu0 0.0
    %1920 = vmatprep.subr.mxu0 0.0
    %1921 = vmatpush1.msra.mxu0 0.0
    %1922 = vmatprep.subr.mxu0 0.0
    %1923 = vmatpush1.msra.mxu0 0.0
    %1924 = vmatprep.subr.mxu0 0.0
    %1925 = vmatpush1.msra.mxu0 0.0
    %1926 = vmatprep.subr.mxu0 0.0
    %1927 = vmatpush1.msra.mxu0 0.0
    %1928 = vmatprep.subr.mxu0 0.0
    %1929 = vmatpush1.msra.mxu0 0.0
    %1930 = vmatprep.subr.mxu0 0.0
    %1931 = vmatpush1.msra.mxu0 0.0
    %1932 = vmatprep.subr.mxu0 0.0
    %1933 = vmatpush1.msra.mxu0 0.0
    %1934 = vmatprep.subr.mxu0 0.0
    %1935 = vmatpush1.msra.mxu0 0.0
    %1936 = vmatprep.subr.mxu0 0.0
    %1937 = vmatpush1.msra.mxu0 0.0
    %1938 = vmatprep.subr.mxu0 0.0
    %1939 = vmatpush1.msra.mxu0 0.0
    %1940 = vmatprep.subr.mxu0 0.0
    %1941 = vmatpush1.msra.mxu0 0.0
    %1942 = vmatprep.subr.mxu0 0.0
    %1943 = vmatpush1.msra.mxu0 0.0
    %1944 = vmatprep.subr.mxu0 0.0
    %1945 = vmatpush1.msra.mxu0 0.0
    %1946 = vmatprep.subr.mxu0 0.0
    %1947 = vmatpush1.msra.mxu0 0.0
    %1948 = vmatprep.subr.mxu0 0.0
    %1949 = vmatpush1.msra.mxu0 0.0
    %1950 = vmatprep.subr.mxu0 0.0
    %1951 = vmatpush1.msra.mxu0 0.0
    %1952 = vmatprep.subr.mxu0 0.0
    %1953 = vmatpush1.msra.mxu0 0.0
    %1954 = vmatprep.subr.mxu0 0.0
    %1955 = vmatpush1.msra.mxu0 0.0
    %1956 = vmatprep.subr.mxu0 0.0
    %1957 = vmatpush1.msra.mxu0 0.0
    %1958 = vmatprep.subr.mxu0 0.0
    %1959 = vmatpush1.msra.mxu0 0.0
    %1960 = vmatprep.subr.mxu0 0.0
    %1961 = vmatpush1.msra.mxu0 0.0
    %1962 = vmatprep.subr.mxu0 0.0
    %1963 = vmatpush1.msra.mxu0 0.0
    %1964 = vmatprep.subr.mxu0 0.0
    %1965 = vmatpush1.msra.mxu0 0.0
    %1966 = vmatprep.subr.mxu0 0.0
    %1967 = vmatpush1.msra.mxu0 0.0
    %1968 = vmatprep.subr.mxu0 0.0
    %1969 = vmatpush1.msra.mxu0 0.0
    %1970 = vmatprep.subr.mxu0 0.0
    %1971 = vmatpush1.msra.mxu0 0.0
    %1972 = vmatprep.subr.mxu0 0.0
    %1973 = vmatpush1.msra.mxu0 0.0
    %1974 = vmatprep.subr.mxu0 0.0
    %1975 = vmatpush1.msra.mxu0 0.0
    %1976 = vmatprep.subr.mxu0 0.0
    %1977 = vmatpush1.msra.mxu0 0.0
    %1978 = vmatprep.mubr.f32.mxu0 0.0
    %1979 = vmatmul.mubr.f32.gmra.mrb[0].mxu0 %v516
    %v1980 = vpop.f32.mrb[0].mxu0
    %v1981 = vadd.f32 0.0, %v1980
    %v1982 = vpop.f32.mrb[0].mxu0
    %1983 = vmatprep.mubr.f32.mxu0 0.0
    %1984 = vmatmul.mubr.f32.gmra.mrb[0].mxu0 %v518
    %v1985 = vpop.f32.mrb[0].mxu0
    %v1986 = vadd.f32 0.0, %v1985
    %v1987 = vpop.f32.mrb[0].mxu0
    %1988 = vmatprep.mubr.f32.mxu0 0.0
    %1989 = vmatmul.mubr.f32.gmra.mrb[0].mxu0 %v520
    %v1990 = vpop.f32.mrb[0].mxu0
    %v1991 = vadd.f32 0.0, %v1990
    %v1992 = vpop.f32.mrb[0].mxu0
    %1993 = vmatprep.mubr.f32.mxu0 0.0
    %1994 = vmatmul.mubr.f32.gmra.mrb[0].mxu0 %v522
    %v1995 = vpop.f32.mrb[0].mxu0
    %v1996 = vadd.f32 0.0, %v1995
    %v1997 = vpop.f32.mrb[0].mxu0
    %1998 = vmatprep.mubr.f32.mxu0 0.0
    %1999 = vmatmul.mubr.f32.gmra.mrb[0].mxu0 %v524
    %v2000 = vpop.f32.mrb[0].mxu0
    %v2001 = vadd.f32 0.0, %v2000
    %v2002 = vpop.f32.mrb[0].mxu0
    %2003 = vmatprep.mubr.f32.mxu0 0.0
    %2004 = vmatmul.mubr.f32.gmra.mrb[0].mxu0 %v526
    %v2005 = vpop.f32.mrb[0].mxu0
    %v2006 = vadd.f32 0.0, %v2005
    %v2007 = vpop.f32.mrb[0].mxu0
    %2008 = vmatprep.mubr.f32.mxu0 0.0
    %2009 = vmatmul.mubr.f32.gmra.mrb[0].mxu0 %v528
    %v2010 = vpop.f32.mrb[0].mxu0
    %v2011 = vadd.f32 0.0, %v2010
    %v2012 = vpop.f32.mrb[0].mxu0
    %2013 = vmatprep.mubr.f32.mxu0 0.0
    %2014 = vmatmul.mubr.f32.gmra.mrb[0].mxu0 %v530
    %v2015 = vpop.f32.mrb[0].mxu0
    %v2016 = vadd.f32 0.0, %v2015
    %v2017 = vpop.f32.mrb[0].mxu0
    %2018 = vmatprep.mubr.f32.mxu0 0.0
    %2019 = vmatmul.mubr.f32.gmra.mrb[0].mxu0 %v532
    %v2020 = vpop.f32.mrb[0].mxu0
    %v2021 = vadd.f32 0.0, %v2020
    %v2022 = vpop.f32.mrb[0].mxu0
    %2023 = vmatprep.mubr.f32.mxu0 0.0
    %2024 = vmatmul.mubr.f32.gmra.mrb[0].mxu0 %v534
    %v2025 = vpop.f32.mrb[0].mxu0
    %v2026 = vadd.f32 0.0, %v2025
    %v2027 = vpop.f32.mrb[0].mxu0
    %2028 = vmatprep.mubr.f32.mxu0 0.0
    %2029 = vmatmul.mubr.f32.gmra.mrb[0].mxu0 %v536
    %v2030 = vpop.f32.mrb[0].mxu0
    %v2031 = vadd.f32 0.0, %v2030
    %v2032 = vpop.f32.mrb[0].mxu0
    %2033 = vmatprep.mubr.f32.mxu0 0.0
    %2034 = vmatmul.mubr.f32.gmra.mrb[0].mxu0 %v538
    %v2035 = vpop.f32.mrb[0].mxu0
    %v2036 = vadd.f32 0.0, %v2035
    %v2037 = vpop.f32.mrb[0].mxu0
    %2038 = vmatprep.mubr.f32.mxu0 0.0
    %2039 = vmatmul.mubr.f32.gmra.mrb[0].mxu0 %v540
    %v2040 = vpop.f32.mrb[0].mxu0
    %v2041 = vadd.f32 0.0, %v2040
    %v2042 = vpop.f32.mrb[0].mxu0
    %2043 = vmatprep.mubr.f32.mxu0 0.0
    %2044 = vmatmul.mubr.f32.gmra.mrb[0].mxu0 %v542
    %v2045 = vpop.f32.mrb[0].mxu0
    %v2046 = vadd.f32 0.0, %v2045
    %v2047 = vpop.f32.mrb[0].mxu0
    %2048 = vmatprep.mubr.f32.mxu0 0.0
    %2049 = vmatmul.mubr.f32.gmra.mrb[0].mxu0 %v544
    %v2050 = vpop.f32.mrb[0].mxu0
    %v2051 = vadd.f32 0.0, %v2050
    %v2052 = vpop.f32.mrb[0].mxu0
    %2053 = vmatprep.mubr.f32.mxu0 0.0
    %2054 = vmatmul.mubr.f32.gmra.mrb[0].mxu0 %v546
    %v2055 = vpop.f32.mrb[0].mxu0
    %v2056 = vadd.f32 0.0, %v2055
    %v2057 = vpop.f32.mrb[0].mxu0
    %2058 = vdwg.mxu0
    %v2059 = vmul.f32 %v1981, %v694
    %v2060 = vmul.f32 %v1986, %v696
    %v2061 = vmul.f32 %v1991, %v698
    %v2062 = vmul.f32 %v1996, %v700
    %v2063 = vmul.f32 %v2001, %v702
    %v2064 = vmul.f32 %v2006, %v704
    %v2065 = vmul.f32 %v2011, %v706
    %v2066 = vmul.f32 %v2016, %v708
    %v2067 = vmul.f32 %v2021, %v710
    %v2068 = vmul.f32 %v2026, %v712
    %v2069 = vmul.f32 %v2031, %v714
    %v2070 = vmul.f32 %v2036, %v716
    %v2071 = vmul.f32 %v2041, %v718
    %v2072 = vmul.f32 %v2046, %v720
    %v2073 = vmul.f32 %v2051, %v722
    %v2074 = vmul.f32 %v2056, %v724
    %2091 = vrot.lane.b32.xlu0 %v66, 64
    %v2092 = vpop.permute.xlu0 %2091
    %2093 = vrot.lane.b32.xlu0 %v67, 64
    %v2094 = vpop.permute.xlu0 %2093
    %2095 = vrot.lane.b32.xlu0 %v68, 64
    %v2096 = vpop.permute.xlu0 %2095
    %2097 = vrot.lane.b32.xlu0 %v69, 64
    %v2098 = vpop.permute.xlu0 %2097
    %2099 = vrot.lane.b32.xlu0 %v70, 64
    %v2100 = vpop.permute.xlu0 %2099
    %2101 = vrot.lane.b32.xlu0 %v71, 64
    %v2102 = vpop.permute.xlu0 %2101
    %2103 = vrot.lane.b32.xlu0 %v72, 64
    %v2104 = vpop.permute.xlu0 %2103
    %2105 = vrot.lane.b32.xlu0 %v73, 64
    %v2106 = vpop.permute.xlu0 %2105
    %2107 = vrot.lane.b32.xlu0 %v74, 64
    %v2108 = vpop.permute.xlu0 %2107
    %2109 = vrot.lane.b32.xlu0 %v75, 64
    %v2110 = vpop.permute.xlu0 %2109
    %2111 = vrot.lane.b32.xlu0 %v76, 64
    %v2112 = vpop.permute.xlu0 %2111
    %2113 = vrot.lane.b32.xlu0 %v77, 64
    %v2114 = vpop.permute.xlu0 %2113
    %2115 = vrot.lane.b32.xlu0 %v78, 64
    %v2116 = vpop.permute.xlu0 %2115
    %2117 = vrot.lane.b32.xlu0 %v79, 64
    %v2118 = vpop.permute.xlu0 %2117
    %2119 = vrot.lane.b32.xlu0 %v80, 64
    %v2120 = vpop.permute.xlu0 %2119
    %2121 = vrot.lane.b32.xlu0 %v81, 64
    %v2122 = vpop.permute.xlu0 %2121
    %v2140 = vsel %vm278, %v2059, 0
    %v2143 = vsel %vm278, %v2060, 0
    %v2146 = vsel %vm278, %v2061, 0
    %v2149 = vsel %vm278, %v2062, 0
    %v2152 = vsel %vm278, %v2063, 0
    %v2155 = vsel %vm278, %v2064, 0
    %v2158 = vsel %vm278, %v2065, 0
    %v2161 = vsel %vm278, %v2066, 0
    %v2164 = vsel %vm278, %v2067, 0
    %v2167 = vsel %vm278, %v2068, 0
    %v2170 = vsel %vm278, %v2069, 0
    %v2173 = vsel %vm278, %v2070, 0
    %v2176 = vsel %vm278, %v2071, 0
    %v2179 = vsel %vm278, %v2072, 0
    %v2182 = vsel %vm278, %v2073, 0
    %v2185 = vsel %vm278, %v2074, 0
    %v2188 = vsel %vm278, %v1896, 0
    %v2191 = vsel %vm278, %v1901, 0
    %v2194 = vsel %vm278, %v1906, 0
    %v2197 = vsel %vm278, %v1911, 0
    %2199 = vmatprep.subr.mxu0 0.0
    %2200 = vmatpush1.xpose.msra.mxu0 %v2188
    %2201 = vmatprep.subr.mxu0 0.0
    %2202 = vmatpush1.xpose.msra.mxu0 %v2191
    %2203 = vmatprep.subr.mxu0 0.0
    %2204 = vmatpush1.xpose.msra.mxu0 %v2194
    %2205 = vmatprep.subr.mxu0 0.0
    %2206 = vmatpush1.xpose.msra.mxu0 %v2197
    %2207 = vmatprep.subr.mxu0 0.0
    %2208 = vmatpush1.xpose.msra.mxu0 0.0
    %2209 = vmatprep.subr.mxu0 0.0
    %2210 = vmatpush1.xpose.msra.mxu0 0.0
    %2211 = vmatprep.subr.mxu0 0.0
    %2212 = vmatpush1.xpose.msra.mxu0 0.0
    %2213 = vmatprep.subr.mxu0 0.0
    %2214 = vmatpush1.xpose.msra.mxu0 0.0
    %2215 = vmatprep.subr.mxu0 0.0
    %2216 = vmatpush1.xpose.msra.mxu0 0.0
    %2217 = vmatprep.subr.mxu0 0.0
    %2218 = vmatpush1.xpose.msra.mxu0 0.0
    %2219 = vmatprep.subr.mxu0 0.0
    %2220 = vmatpush1.xpose.msra.mxu0 0.0
    %2221 = vmatprep.subr.mxu0 0.0
    %2222 = vmatpush1.xpose.msra.mxu0 0.0
    %2223 = vmatprep.subr.mxu0 0.0
    %2224 = vmatpush1.xpose.msra.mxu0 0.0
    %2225 = vmatprep.subr.mxu0 0.0
    %2226 = vmatpush1.xpose.msra.mxu0 0.0
    %2227 = vmatprep.subr.mxu0 0.0
    %2228 = vmatpush1.xpose.msra.mxu0 0.0
    %2229 = vmatprep.subr.mxu0 0.0
    %2230 = vmatpush1.xpose.msra.mxu0 0.0
    %2231 = vmatprep.subr.mxu0 0.0
    %2232 = vmatpush1.xpose.msra.mxu0 0.0
    %2233 = vmatprep.subr.mxu0 0.0
    %2234 = vmatpush1.xpose.msra.mxu0 0.0
    %2235 = vmatprep.subr.mxu0 0.0
    %2236 = vmatpush1.xpose.msra.mxu0 0.0
    %2237 = vmatprep.subr.mxu0 0.0
    %2238 = vmatpush1.xpose.msra.mxu0 0.0
    %2239 = vmatprep.subr.mxu0 0.0
    %2240 = vmatpush1.xpose.msra.mxu0 0.0
    %2241 = vmatprep.subr.mxu0 0.0
    %2242 = vmatpush1.xpose.msra.mxu0 0.0
    %2243 = vmatprep.subr.mxu0 0.0
    %2244 = vmatpush1.xpose.msra.mxu0 0.0
    %2245 = vmatprep.subr.mxu0 0.0
    %2246 = vmatpush1.xpose.msra.mxu0 0.0
    %2247 = vmatprep.subr.mxu0 0.0
    %2248 = vmatpush1.xpose.msra.mxu0 0.0
    %2249 = vmatprep.subr.mxu0 0.0
    %2250 = vmatpush1.xpose.msra.mxu0 0.0
    %2251 = vmatprep.subr.mxu0 0.0
    %2252 = vmatpush1.xpose.msra.mxu0 0.0
    %2253 = vmatprep.subr.mxu0 0.0
    %2254 = vmatpush1.xpose.msra.mxu0 0.0
    %2255 = vmatprep.subr.mxu0 0.0
    %2256 = vmatpush1.xpose.msra.mxu0 0.0
    %2257 = vmatprep.subr.mxu0 0.0
    %2258 = vmatpush1.xpose.msra.mxu0 0.0
    %2259 = vmatprep.subr.mxu0 0.0
    %2260 = vmatpush1.xpose.msra.mxu0 0.0
    %2261 = vmatprep.subr.mxu0 0.0
    %2262 = vmatpush1.xpose.msra.mxu0 0.0
    %2263 = vmatprep.mubr.f32.mxu0 0.0
    %2264 = vmatmul.mubr.f32.gmra.mrb[0].mxu0 %v2140
    %v2265 = vpop.f32.mrb[0].mxu0
    %v2266 = vadd.f32 %v2092, %v2265
    %v2267 = vpop.f32.mrb[0].mxu0
    %2268 = vmatprep.mubr.f32.mxu0 0.0
    %2269 = vmatmul.mubr.f32.gmra.mrb[0].mxu0 %v2143
    %v2270 = vpop.f32.mrb[0].mxu0
    %v2271 = vadd.f32 %v2094, %v2270
    %v2272 = vpop.f32.mrb[0].mxu0
    %2273 = vmatprep.mubr.f32.mxu0 0.0
    %2274 = vmatmul.mubr.f32.gmra.mrb[0].mxu0 %v2146
    %v2275 = vpop.f32.mrb[0].mxu0
    %v2276 = vadd.f32 %v2096, %v2275
    %v2277 = vpop.f32.mrb[0].mxu0
    %2278 = vmatprep.mubr.f32.mxu0 0.0
    %2279 = vmatmul.mubr.f32.gmra.mrb[0].mxu0 %v2149
    %v2280 = vpop.f32.mrb[0].mxu0
    %v2281 = vadd.f32 %v2098, %v2280
    %v2282 = vpop.f32.mrb[0].mxu0
    %2283 = vmatprep.mubr.f32.mxu0 0.0
    %2284 = vmatmul.mubr.f32.gmra.mrb[0].mxu0 %v2152
    %v2285 = vpop.f32.mrb[0].mxu0
    %v2286 = vadd.f32 %v2100, %v2285
    %v2287 = vpop.f32.mrb[0].mxu0
    %2288 = vmatprep.mubr.f32.mxu0 0.0
    %2289 = vmatmul.mubr.f32.gmra.mrb[0].mxu0 %v2155
    %v2290 = vpop.f32.mrb[0].mxu0
    %v2291 = vadd.f32 %v2102, %v2290
    %v2292 = vpop.f32.mrb[0].mxu0
    %2293 = vmatprep.mubr.f32.mxu0 0.0
    %2294 = vmatmul.mubr.f32.gmra.mrb[0].mxu0 %v2158
    %v2295 = vpop.f32.mrb[0].mxu0
    %v2296 = vadd.f32 %v2104, %v2295
    %v2297 = vpop.f32.mrb[0].mxu0
    %2298 = vmatprep.mubr.f32.mxu0 0.0
    %2299 = vmatmul.mubr.f32.gmra.mrb[0].mxu0 %v2161
    %v2300 = vpop.f32.mrb[0].mxu0
    %v2301 = vadd.f32 %v2106, %v2300
    %v2302 = vpop.f32.mrb[0].mxu0
    %2303 = vmatprep.mubr.f32.mxu0 0.0
    %2304 = vmatmul.mubr.f32.gmra.mrb[0].mxu0 %v2164
    %v2305 = vpop.f32.mrb[0].mxu0
    %v2306 = vadd.f32 %v2108, %v2305
    %v2307 = vpop.f32.mrb[0].mxu0
    %2308 = vmatprep.mubr.f32.mxu0 0.0
    %2309 = vmatmul.mubr.f32.gmra.mrb[0].mxu0 %v2167
    %v2310 = vpop.f32.mrb[0].mxu0
    %v2311 = vadd.f32 %v2110, %v2310
    %v2312 = vpop.f32.mrb[0].mxu0
    %2313 = vmatprep.mubr.f32.mxu0 0.0
    %2314 = vmatmul.mubr.f32.gmra.mrb[0].mxu0 %v2170
    %v2315 = vpop.f32.mrb[0].mxu0
    %v2316 = vadd.f32 %v2112, %v2315
    %v2317 = vpop.f32.mrb[0].mxu0
    %2318 = vmatprep.mubr.f32.mxu0 0.0
    %2319 = vmatmul.mubr.f32.gmra.mrb[0].mxu0 %v2173
    %v2320 = vpop.f32.mrb[0].mxu0
    %v2321 = vadd.f32 %v2114, %v2320
    %v2322 = vpop.f32.mrb[0].mxu0
    %2323 = vmatprep.mubr.f32.mxu0 0.0
    %2324 = vmatmul.mubr.f32.gmra.mrb[0].mxu0 %v2176
    %v2325 = vpop.f32.mrb[0].mxu0
    %v2326 = vadd.f32 %v2116, %v2325
    %v2327 = vpop.f32.mrb[0].mxu0
    %2328 = vmatprep.mubr.f32.mxu0 0.0
    %2329 = vmatmul.mubr.f32.gmra.mrb[0].mxu0 %v2179
    %v2330 = vpop.f32.mrb[0].mxu0
    %v2331 = vadd.f32 %v2118, %v2330
    %v2332 = vpop.f32.mrb[0].mxu0
    %2333 = vmatprep.mubr.f32.mxu0 0.0
    %2334 = vmatmul.mubr.f32.gmra.mrb[0].mxu0 %v2182
    %v2335 = vpop.f32.mrb[0].mxu0
    %v2336 = vadd.f32 %v2120, %v2335
    %v2337 = vpop.f32.mrb[0].mxu0
    %2338 = vmatprep.mubr.f32.mxu0 0.0
    %2339 = vmatmul.mubr.f32.gmra.mrb[0].mxu0 %v2185
    %v2340 = vpop.f32.mrb[0].mxu0
    %v2341 = vadd.f32 %v2122, %v2340
    %v2342 = vpop.f32.mrb[0].mxu0
    %2343 = vdwg.mxu0
    %v2344 = vsel %vm278, %v2266, -inf
    %2345 = vmax.xlane.f32.xlu0 %v2344
    %v2346 = vpop.xlane.xlu0 %2345
    %v2347 = vsel %vm278, %v2271, -inf
    %2348 = vmax.xlane.f32.xlu0 %v2347
    %v2349 = vpop.xlane.xlu0 %2348
    %v2350 = vsel %vm278, %v2276, -inf
    %2351 = vmax.xlane.f32.xlu0 %v2350
    %v2352 = vpop.xlane.xlu0 %2351
    %v2353 = vsel %vm278, %v2281, -inf
    %2354 = vmax.xlane.f32.xlu0 %v2353
    %v2355 = vpop.xlane.xlu0 %2354
    %v2356 = vsel %vm278, %v2286, -inf
    %2357 = vmax.xlane.f32.xlu0 %v2356
    %v2358 = vpop.xlane.xlu0 %2357
    %v2359 = vsel %vm278, %v2291, -inf
    %2360 = vmax.xlane.f32.xlu0 %v2359
    %v2361 = vpop.xlane.xlu0 %2360
    %v2362 = vsel %vm278, %v2296, -inf
    %2363 = vmax.xlane.f32.xlu0 %v2362
    %v2364 = vpop.xlane.xlu0 %2363
    %v2365 = vsel %vm278, %v2301, -inf
    %2366 = vmax.xlane.f32.xlu0 %v2365
    %v2367 = vpop.xlane.xlu0 %2366
    %v2368 = vsel %vm278, %v2306, -inf
    %2369 = vmax.xlane.f32.xlu0 %v2368
    %v2370 = vpop.xlane.xlu0 %2369
    %v2371 = vsel %vm278, %v2311, -inf
    %2372 = vmax.xlane.f32.xlu0 %v2371
    %v2373 = vpop.xlane.xlu0 %2372
    %v2374 = vsel %vm278, %v2316, -inf
    %2375 = vmax.xlane.f32.xlu0 %v2374
    %v2376 = vpop.xlane.xlu0 %2375
    %v2377 = vsel %vm278, %v2321, -inf
    %2378 = vmax.xlane.f32.xlu0 %v2377
    %v2379 = vpop.xlane.xlu0 %2378
    %v2380 = vsel %vm278, %v2326, -inf
    %2381 = vmax.xlane.f32.xlu0 %v2380
    %v2382 = vpop.xlane.xlu0 %2381
    %v2383 = vsel %vm278, %v2331, -inf
    %2384 = vmax.xlane.f32.xlu0 %v2383
    %v2385 = vpop.xlane.xlu0 %2384
    %v2386 = vsel %vm278, %v2336, -inf
    %2387 = vmax.xlane.f32.xlu0 %v2386
    %v2388 = vpop.xlane.xlu0 %2387
    %v2389 = vsel %vm278, %v2341, -inf
    %2390 = vmax.xlane.f32.xlu0 %v2389
    %v2391 = vpop.xlane.xlu0 %2390
    %v2392 = vsub.f32 %v2266, %v2346
    %v2393 = vsub.f32 %v2271, %v2349
    %v2394 = vsub.f32 %v2276, %v2352
    %v2395 = vsub.f32 %v2281, %v2355
    %v2396 = vsub.f32 %v2286, %v2358
    %v2397 = vsub.f32 %v2291, %v2361
    %v2398 = vsub.f32 %v2296, %v2364
    %v2399 = vsub.f32 %v2301, %v2367
    %v2400 = vsub.f32 %v2306, %v2370
    %v2401 = vsub.f32 %v2311, %v2373
    %v2402 = vsub.f32 %v2316, %v2376
    %v2403 = vsub.f32 %v2321, %v2379
    %v2404 = vsub.f32 %v2326, %v2382
    %v2405 = vsub.f32 %v2331, %v2385
    %v2406 = vsub.f32 %v2336, %v2388
    %v2407 = vsub.f32 %v2341, %v2391
    %v2408 = vmul.f32 %v2392, 1.442695
    %v2409 = vpow.pop %v2408
    %v2410 = vmul.f32 %v2393, 1.442695
    %v2411 = vpow.pop %v2410
    %v2412 = vmul.f32 %v2394, 1.442695
    %v2413 = vpow.pop %v2412
    %v2414 = vmul.f32 %v2395, 1.442695
    %v2415 = vpow.pop %v2414
    %v2416 = vmul.f32 %v2396, 1.442695
    %v2417 = vpow.pop %v2416
    %v2418 = vmul.f32 %v2397, 1.442695
    %v2419 = vpow.pop %v2418
    %v2420 = vmul.f32 %v2398, 1.442695
    %v2421 = vpow.pop %v2420
    %v2422 = vmul.f32 %v2399, 1.442695
    %v2423 = vpow.pop %v2422
    %v2424 = vmul.f32 %v2400, 1.442695
    %v2425 = vpow.pop %v2424
    %v2426 = vmul.f32 %v2401, 1.442695
    %v2427 = vpow.pop %v2426
    %v2428 = vmul.f32 %v2402, 1.442695
    %v2429 = vpow.pop %v2428
    %v2430 = vmul.f32 %v2403, 1.442695
    %v2431 = vpow.pop %v2430
    %v2432 = vmul.f32 %v2404, 1.442695
    %v2433 = vpow.pop %v2432
    %v2434 = vmul.f32 %v2405, 1.442695
    %v2435 = vpow.pop %v2434
    %v2436 = vmul.f32 %v2406, 1.442695
    %v2437 = vpow.pop %v2436
    %v2438 = vmul.f32 %v2407, 1.442695
    %v2439 = vpow.pop %v2438
    %v2440 = vsel %vm278, %v2409, 0.0
    %2441 = vadd.xlane.f32.xlu0 %v2440
    %v2442 = vpop.xlane.xlu0 %2441
    %v2443 = vsel %vm278, %v2411, 0.0
    %2444 = vadd.xlane.f32.xlu0 %v2443
    %v2445 = vpop.xlane.xlu0 %2444
    %v2446 = vsel %vm278, %v2413, 0.0
    %2447 = vadd.xlane.f32.xlu0 %v2446
    %v2448 = vpop.xlane.xlu0 %2447
    %v2449 = vsel %vm278, %v2415, 0.0
    %2450 = vadd.xlane.f32.xlu0 %v2449
    %v2451 = vpop.xlane.xlu0 %2450
    %v2452 = vsel %vm278, %v2417, 0.0
    %2453 = vadd.xlane.f32.xlu0 %v2452
    %v2454 = vpop.xlane.xlu0 %2453
    %v2455 = vsel %vm278, %v2419, 0.0
    %2456 = vadd.xlane.f32.xlu0 %v2455
    %v2457 = vpop.xlane.xlu0 %2456
    %v2458 = vsel %vm278, %v2421, 0.0
    %2459 = vadd.xlane.f32.xlu0 %v2458
    %v2460 = vpop.xlane.xlu0 %2459
    %v2461 = vsel %vm278, %v2423, 0.0
    %2462 = vadd.xlane.f32.xlu0 %v2461
    %v2463 = vpop.xlane.xlu0 %2462
    %v2464 = vsel %vm278, %v2425, 0.0
    %2465 = vadd.xlane.f32.xlu0 %v2464
    %v2466 = vpop.xlane.xlu0 %2465
    %v2467 = vsel %vm278, %v2427, 0.0
    %2468 = vadd.xlane.f32.xlu0 %v2467
    %v2469 = vpop.xlane.xlu0 %2468
    %v2470 = vsel %vm278, %v2429, 0.0
    %2471 = vadd.xlane.f32.xlu0 %v2470
    %v2472 = vpop.xlane.xlu0 %2471
    %v2473 = vsel %vm278, %v2431, 0.0
    %2474 = vadd.xlane.f32.xlu0 %v2473
    %v2475 = vpop.xlane.xlu0 %2474
    %v2476 = vsel %vm278, %v2433, 0.0
    %2477 = vadd.xlane.f32.xlu0 %v2476
    %v2478 = vpop.xlane.xlu0 %2477
    %v2479 = vsel %vm278, %v2435, 0.0
    %2480 = vadd.xlane.f32.xlu0 %v2479
    %v2481 = vpop.xlane.xlu0 %2480
    %v2482 = vsel %vm278, %v2437, 0.0
    %2483 = vadd.xlane.f32.xlu0 %v2482
    %v2484 = vpop.xlane.xlu0 %2483
    %v2485 = vsel %vm278, %v2439, 0.0
    %2486 = vadd.xlane.f32.xlu0 %v2485
    %v2487 = vpop.xlane.xlu0 %2486
    %v2488 = vrcp.pop %v2442
    %v2489 = vrcp.pop %v2445
    %v2490 = vrcp.pop %v2448
    %v2491 = vrcp.pop %v2451
    %v2492 = vrcp.pop %v2454
    %v2493 = vrcp.pop %v2457
    %v2494 = vrcp.pop %v2460
    %v2495 = vrcp.pop %v2463
    %v2496 = vrcp.pop %v2466
    %v2497 = vrcp.pop %v2469
    %v2498 = vrcp.pop %v2472
    %v2499 = vrcp.pop %v2475
    %v2500 = vrcp.pop %v2478
    %v2501 = vrcp.pop %v2481
    %v2502 = vrcp.pop %v2484
    %v2503 = vrcp.pop %v2487
    %v2504 = vmul.f32 %v2442, %v2488
    %v2505 = vmul.f32 %v2445, %v2489
    %v2506 = vmul.f32 %v2448, %v2490
    %v2507 = vmul.f32 %v2451, %v2491
    %v2508 = vmul.f32 %v2454, %v2492
    %v2509 = vmul.f32 %v2457, %v2493
    %v2510 = vmul.f32 %v2460, %v2494
    %v2511 = vmul.f32 %v2463, %v2495
    %v2512 = vmul.f32 %v2466, %v2496
    %v2513 = vmul.f32 %v2469, %v2497
    %v2514 = vmul.f32 %v2472, %v2498
    %v2515 = vmul.f32 %v2475, %v2499
    %v2516 = vmul.f32 %v2478, %v2500
    %v2517 = vmul.f32 %v2481, %v2501
    %v2518 = vmul.f32 %v2484, %v2502
    %v2519 = vmul.f32 %v2487, %v2503
    %v2520 = vsub.f32 2.0, %v2504
    %v2521 = vsub.f32 2.0, %v2505
    %v2522 = vsub.f32 2.0, %v2506
    %v2523 = vsub.f32 2.0, %v2507
    %v2524 = vsub.f32 2.0, %v2508
    %v2525 = vsub.f32 2.0, %v2509
    %v2526 = vsub.f32 2.0, %v2510
    %v2527 = vsub.f32 2.0, %v2511
    %v2528 = vsub.f32 2.0, %v2512
    %v2529 = vsub.f32 2.0, %v2513
    %v2530 = vsub.f32 2.0, %v2514
    %v2531 = vsub.f32 2.0, %v2515
    %v2532 = vsub.f32 2.0, %v2516
    %v2533 = vsub.f32 2.0, %v2517
    %v2534 = vsub.f32 2.0, %v2518
    %v2535 = vsub.f32 2.0, %v2519
    %v2536 = vmul.f32 %v2488, %v2520
    %v2537 = vmul.f32 %v2489, %v2521
    %v2538 = vmul.f32 %v2490, %v2522
    %v2539 = vmul.f32 %v2491, %v2523
    %v2540 = vmul.f32 %v2492, %v2524
    %v2541 = vmul.f32 %v2493, %v2525
    %v2542 = vmul.f32 %v2494, %v2526
    %v2543 = vmul.f32 %v2495, %v2527
    %v2544 = vmul.f32 %v2496, %v2528
    %v2545 = vmul.f32 %v2497, %v2529
    %v2546 = vmul.f32 %v2498, %v2530
    %v2547 = vmul.f32 %v2499, %v2531
    %v2548 = vmul.f32 %v2500, %v2532
    %v2549 = vmul.f32 %v2501, %v2533
    %v2550 = vmul.f32 %v2502, %v2534
    %v2551 = vmul.f32 %v2503, %v2535
    %v2552 = vmul.f32 %v2409, %v2536
    %v2553 = vmul.f32 %v2411, %v2537
    %v2554 = vmul.f32 %v2413, %v2538
    %v2555 = vmul.f32 %v2415, %v2539
    %v2556 = vmul.f32 %v2417, %v2540
    %v2557 = vmul.f32 %v2419, %v2541
    %v2558 = vmul.f32 %v2421, %v2542
    %v2559 = vmul.f32 %v2423, %v2543
    %v2560 = vmul.f32 %v2425, %v2544
    %v2561 = vmul.f32 %v2427, %v2545
    %v2562 = vmul.f32 %v2429, %v2546
    %v2563 = vmul.f32 %v2431, %v2547
    %v2564 = vmul.f32 %v2433, %v2548
    %v2565 = vmul.f32 %v2435, %v2549
    %v2566 = vmul.f32 %v2437, %v2550
    %v2567 = vmul.f32 %v2439, %v2551
    %2568 = vrot.lane.b32.xlu0 %v1896, 96
    %v2569 = vpop.permute.xlu0 %2568
    %2570 = vrot.lane.b32.xlu0 %v1901, 96
    %v2571 = vpop.permute.xlu0 %2570
    %2572 = vrot.lane.b32.xlu0 %v1906, 96
    %v2573 = vpop.permute.xlu0 %2572
    %2574 = vrot.lane.b32.xlu0 %v1911, 96
    %v2575 = vpop.permute.xlu0 %2574
    %v2581 = vsel %vm278, %v2552, 0
    %v2584 = vsel %vm278, %v2553, 0
    %v2587 = vsel %vm278, %v2554, 0
    %v2590 = vsel %vm278, %v2555, 0
    %v2593 = vsel %vm278, %v2556, 0
    %v2596 = vsel %vm278, %v2557, 0
    %v2599 = vsel %vm278, %v2558, 0
    %v2602 = vsel %vm278, %v2559, 0
    %v2605 = vsel %vm278, %v2560, 0
    %v2608 = vsel %vm278, %v2561, 0
    %v2611 = vsel %vm278, %v2562, 0
    %v2614 = vsel %vm278, %v2563, 0
    %v2617 = vsel %vm278, %v2564, 0
    %v2620 = vsel %vm278, %v2565, 0
    %v2623 = vsel %vm278, %v2566, 0
    %v2626 = vsel %vm278, %v2567, 0
    %2628 = vmatprep.subr.mxu0 0.0
    %2629 = vmatpush1.msra.mxu0 %v2569
    %2630 = vmatprep.subr.mxu0 0.0
    %2631 = vmatpush1.msra.mxu0 %v2571
    %2632 = vmatprep.subr.mxu0 0.0
    %2633 = vmatpush1.msra.mxu0 %v2573
    %2634 = vmatprep.subr.mxu0 0.0
    %2635 = vmatpush1.msra.mxu0 %v2575
    %2636 = vmatprep.subr.mxu0 0.0
    %2637 = vmatpush1.msra.mxu0 0.0
    %2638 = vmatprep.subr.mxu0 0.0
    %2639 = vmatpush1.msra.mxu0 0.0
    %2640 = vmatprep.subr.mxu0 0.0
    %2641 = vmatpush1.msra.mxu0 0.0
    %2642 = vmatprep.subr.mxu0 0.0
    %2643 = vmatpush1.msra.mxu0 0.0
    %2644 = vmatprep.subr.mxu0 0.0
    %2645 = vmatpush1.msra.mxu0 0.0
    %2646 = vmatprep.subr.mxu0 0.0
    %2647 = vmatpush1.msra.mxu0 0.0
    %2648 = vmatprep.subr.mxu0 0.0
    %2649 = vmatpush1.msra.mxu0 0.0
    %2650 = vmatprep.subr.mxu0 0.0
    %2651 = vmatpush1.msra.mxu0 0.0
    %2652 = vmatprep.subr.mxu0 0.0
    %2653 = vmatpush1.msra.mxu0 0.0
    %2654 = vmatprep.subr.mxu0 0.0
    %2655 = vmatpush1.msra.mxu0 0.0
    %2656 = vmatprep.subr.mxu0 0.0
    %2657 = vmatpush1.msra.mxu0 0.0
    %2658 = vmatprep.subr.mxu0 0.0
    %2659 = vmatpush1.msra.mxu0 0.0
    %2660 = vmatprep.subr.mxu0 0.0
    %2661 = vmatpush1.msra.mxu0 0.0
    %2662 = vmatprep.subr.mxu0 0.0
    %2663 = vmatpush1.msra.mxu0 0.0
    %2664 = vmatprep.subr.mxu0 0.0
    %2665 = vmatpush1.msra.mxu0 0.0
    %2666 = vmatprep.subr.mxu0 0.0
    %2667 = vmatpush1.msra.mxu0 0.0
    %2668 = vmatprep.subr.mxu0 0.0
    %2669 = vmatpush1.msra.mxu0 0.0
    %2670 = vmatprep.subr.mxu0 0.0
    %2671 = vmatpush1.msra.mxu0 0.0
    %2672 = vmatprep.subr.mxu0 0.0
    %2673 = vmatpush1.msra.mxu0 0.0
    %2674 = vmatprep.subr.mxu0 0.0
    %2675 = vmatpush1.msra.mxu0 0.0
    %2676 = vmatprep.subr.mxu0 0.0
    %2677 = vmatpush1.msra.mxu0 0.0
    %2678 = vmatprep.subr.mxu0 0.0
    %2679 = vmatpush1.msra.mxu0 0.0
    %2680 = vmatprep.subr.mxu0 0.0
    %2681 = vmatpush1.msra.mxu0 0.0
    %2682 = vmatprep.subr.mxu0 0.0
    %2683 = vmatpush1.msra.mxu0 0.0
    %2684 = vmatprep.subr.mxu0 0.0
    %2685 = vmatpush1.msra.mxu0 0.0
    %2686 = vmatprep.subr.mxu0 0.0
    %2687 = vmatpush1.msra.mxu0 0.0
    %2688 = vmatprep.subr.mxu0 0.0
    %2689 = vmatpush1.msra.mxu0 0.0
    %2690 = vmatprep.subr.mxu0 0.0
    %2691 = vmatpush1.msra.mxu0 0.0
    %2692 = vmatprep.mubr.f32.mxu0 0.0
    %2693 = vmatmul.mubr.f32.gmra.mrb[0].mxu0 %v2581
    %v2694 = vpop.f32.mrb[0].mxu0
    %v2695 = vadd.f32 0.0, %v2694
    %v2696 = vpop.f32.mrb[0].mxu0
    %2697 = vmatprep.mubr.f32.mxu0 0.0
    %2698 = vmatmul.mubr.f32.gmra.mrb[0].mxu0 %v2584
    %v2699 = vpop.f32.mrb[0].mxu0
    %v2700 = vadd.f32 0.0, %v2699
    %v2701 = vpop.f32.mrb[0].mxu0
    %2702 = vmatprep.mubr.f32.mxu0 0.0
    %2703 = vmatmul.mubr.f32.gmra.mrb[0].mxu0 %v2587
    %v2704 = vpop.f32.mrb[0].mxu0
    %v2705 = vadd.f32 0.0, %v2704
    %v2706 = vpop.f32.mrb[0].mxu0
    %2707 = vmatprep.mubr.f32.mxu0 0.0
    %2708 = vmatmul.mubr.f32.gmra.mrb[0].mxu0 %v2590
    %v2709 = vpop.f32.mrb[0].mxu0
    %v2710 = vadd.f32 0.0, %v2709
    %v2711 = vpop.f32.mrb[0].mxu0
    %2712 = vmatprep.mubr.f32.mxu0 0.0
    %2713 = vmatmul.mubr.f32.gmra.mrb[0].mxu0 %v2593
    %v2714 = vpop.f32.mrb[0].mxu0
    %v2715 = vadd.f32 0.0, %v2714
    %v2716 = vpop.f32.mrb[0].mxu0
    %2717 = vmatprep.mubr.f32.mxu0 0.0
    %2718 = vmatmul.mubr.f32.gmra.mrb[0].mxu0 %v2596
    %v2719 = vpop.f32.mrb[0].mxu0
    %v2720 = vadd.f32 0.0, %v2719
    %v2721 = vpop.f32.mrb[0].mxu0
    %2722 = vmatprep.mubr.f32.mxu0 0.0
    %2723 = vmatmul.mubr.f32.gmra.mrb[0].mxu0 %v2599
    %v2724 = vpop.f32.mrb[0].mxu0
    %v2725 = vadd.f32 0.0, %v2724
    %v2726 = vpop.f32.mrb[0].mxu0
    %2727 = vmatprep.mubr.f32.mxu0 0.0
    %2728 = vmatmul.mubr.f32.gmra.mrb[0].mxu0 %v2602
    %v2729 = vpop.f32.mrb[0].mxu0
    %v2730 = vadd.f32 0.0, %v2729
    %v2731 = vpop.f32.mrb[0].mxu0
    %2732 = vmatprep.mubr.f32.mxu0 0.0
    %2733 = vmatmul.mubr.f32.gmra.mrb[0].mxu0 %v2605
    %v2734 = vpop.f32.mrb[0].mxu0
    %v2735 = vadd.f32 0.0, %v2734
    %v2736 = vpop.f32.mrb[0].mxu0
    %2737 = vmatprep.mubr.f32.mxu0 0.0
    %2738 = vmatmul.mubr.f32.gmra.mrb[0].mxu0 %v2608
    %v2739 = vpop.f32.mrb[0].mxu0
    %v2740 = vadd.f32 0.0, %v2739
    %v2741 = vpop.f32.mrb[0].mxu0
    %2742 = vmatprep.mubr.f32.mxu0 0.0
    %2743 = vmatmul.mubr.f32.gmra.mrb[0].mxu0 %v2611
    %v2744 = vpop.f32.mrb[0].mxu0
    %v2745 = vadd.f32 0.0, %v2744
    %v2746 = vpop.f32.mrb[0].mxu0
    %2747 = vmatprep.mubr.f32.mxu0 0.0
    %2748 = vmatmul.mubr.f32.gmra.mrb[0].mxu0 %v2614
    %v2749 = vpop.f32.mrb[0].mxu0
    %v2750 = vadd.f32 0.0, %v2749
    %v2751 = vpop.f32.mrb[0].mxu0
    %2752 = vmatprep.mubr.f32.mxu0 0.0
    %2753 = vmatmul.mubr.f32.gmra.mrb[0].mxu0 %v2617
    %v2754 = vpop.f32.mrb[0].mxu0
    %v2755 = vadd.f32 0.0, %v2754
    %v2756 = vpop.f32.mrb[0].mxu0
    %2757 = vmatprep.mubr.f32.mxu0 0.0
    %2758 = vmatmul.mubr.f32.gmra.mrb[0].mxu0 %v2620
    %v2759 = vpop.f32.mrb[0].mxu0
    %v2760 = vadd.f32 0.0, %v2759
    %v2761 = vpop.f32.mrb[0].mxu0
    %2762 = vmatprep.mubr.f32.mxu0 0.0
    %2763 = vmatmul.mubr.f32.gmra.mrb[0].mxu0 %v2623
    %v2764 = vpop.f32.mrb[0].mxu0
    %v2765 = vadd.f32 0.0, %v2764
    %v2766 = vpop.f32.mrb[0].mxu0
    %2767 = vmatprep.mubr.f32.mxu0 0.0
    %2768 = vmatmul.mubr.f32.gmra.mrb[0].mxu0 %v2626
    %v2769 = vpop.f32.mrb[0].mxu0
    %v2770 = vadd.f32 0.0, %v2769
    %v2771 = vpop.f32.mrb[0].mxu0
    %2772 = vdwg.mxu0
    %v2773 = vmul.f32 %v2695, %v694
    %v2774 = vmul.f32 %v2700, %v696
    %v2775 = vmul.f32 %v2705, %v698
    %v2776 = vmul.f32 %v2710, %v700
    %v2777 = vmul.f32 %v2715, %v702
    %v2778 = vmul.f32 %v2720, %v704
    %v2779 = vmul.f32 %v2725, %v706
    %v2780 = vmul.f32 %v2730, %v708
    %v2781 = vmul.f32 %v2735, %v710
    %v2782 = vmul.f32 %v2740, %v712
    %v2783 = vmul.f32 %v2745, %v714
    %v2784 = vmul.f32 %v2750, %v716
    %v2785 = vmul.f32 %v2755, %v718
    %v2786 = vmul.f32 %v2760, %v720
    %v2787 = vmul.f32 %v2765, %v722
    %v2788 = vmul.f32 %v2770, %v724
    %2789 = vmatprep.subr.mxu0 0.0
    %2790 = vmatpush1.msra.mxu0 %v2773
    %2791 = vmatprep.subr.mxu0 0.0
    %2792 = vmatpush1.msra.mxu0 %v2774
    %2793 = vmatprep.subr.mxu0 0.0
    %2794 = vmatpush1.msra.mxu0 %v2775
    %2795 = vmatprep.subr.mxu0 0.0
    %2796 = vmatpush1.msra.mxu0 %v2776
    %2797 = vmatprep.subr.mxu0 0.0
    %2798 = vmatpush1.msra.mxu0 %v2777
    %2799 = vmatprep.subr.mxu0 0.0
    %2800 = vmatpush1.msra.mxu0 %v2778
    %2801 = vmatprep.subr.mxu0 0.0
    %2802 = vmatpush1.msra.mxu0 %v2779
    %2803 = vmatprep.subr.mxu0 0.0
    %2804 = vmatpush1.msra.mxu0 %v2780
    %2805 = vmatprep.subr.mxu0 0.0
    %2806 = vmatpush1.msra.mxu0 %v2781
    %2807 = vmatprep.subr.mxu0 0.0
    %2808 = vmatpush1.msra.mxu0 %v2782
    %2809 = vmatprep.subr.mxu0 0.0
    %2810 = vmatpush1.msra.mxu0 %v2783
    %2811 = vmatprep.subr.mxu0 0.0
    %2812 = vmatpush1.msra.mxu0 %v2784
    %2813 = vmatprep.subr.mxu0 0.0
    %2814 = vmatpush1.msra.mxu0 %v2785
    %2815 = vmatprep.subr.mxu0 0.0
    %2816 = vmatpush1.msra.mxu0 %v2786
    %2817 = vmatprep.subr.mxu0 0.0
    %2818 = vmatpush1.msra.mxu0 %v2787
    %2819 = vmatprep.subr.mxu0 0.0
    %2820 = vmatpush1.msra.mxu0 %v2788
    %2821 = vmatprep.subr.mxu0 0.0
    %2822 = vmatpush1.msra.mxu0 0.0
    %2823 = vmatprep.subr.mxu0 0.0
    %2824 = vmatpush1.msra.mxu0 0.0
    %2825 = vmatprep.subr.mxu0 0.0
    %2826 = vmatpush1.msra.mxu0 0.0
    %2827 = vmatprep.subr.mxu0 0.0
    %2828 = vmatpush1.msra.mxu0 0.0
    %2829 = vmatprep.subr.mxu0 0.0
    %2830 = vmatpush1.msra.mxu0 0.0
    %2831 = vmatprep.subr.mxu0 0.0
    %2832 = vmatpush1.msra.mxu0 0.0
    %2833 = vmatprep.subr.mxu0 0.0
    %2834 = vmatpush1.msra.mxu0 0.0
    %2835 = vmatprep.subr.mxu0 0.0
    %2836 = vmatpush1.msra.mxu0 0.0
    %2837 = vmatprep.subr.mxu0 0.0
    %2838 = vmatpush1.msra.mxu0 0.0
    %2839 = vmatprep.subr.mxu0 0.0
    %2840 = vmatpush1.msra.mxu0 0.0
    %2841 = vmatprep.subr.mxu0 0.0
    %2842 = vmatpush1.msra.mxu0 0.0
    %2843 = vmatprep.subr.mxu0 0.0
    %2844 = vmatpush1.msra.mxu0 0.0
    %2845 = vmatprep.subr.mxu0 0.0
    %2846 = vmatpush1.msra.mxu0 0.0
    %2847 = vmatprep.subr.mxu0 0.0
    %2848 = vmatpush1.msra.mxu0 0.0
    %2849 = vmatprep.subr.mxu0 0.0
    %2850 = vmatpush1.msra.mxu0 0.0
    %2851 = vmatprep.subr.mxu0 0.0
    %2852 = vmatpush1.msra.mxu0 0.0
    %2853 = vmatprep.mubr.f32.mxu0 0.0
    %2854 = vmatmul.mubr.f32.gmra.mrb[0].mxu0 %v106
    %v2855 = vpop.f32.mrb[0].mxu0
    %v2856 = vadd.f32 0.0, %v2855
    %v2857 = vpop.f32.mrb[0].mxu0
    %2858 = vmatprep.mubr.f32.mxu0 0.0
    %2859 = vmatmul.mubr.f32.gmra.mrb[0].mxu0 %v107
    %v2860 = vpop.f32.mrb[0].mxu0
    %v2861 = vadd.f32 0.0, %v2860
    %v2862 = vpop.f32.mrb[0].mxu0
    %2863 = vdwg.mxu0
    %v2864 = vlaneseq
    %v2865 = vshrl.u32 %v2864, 7
    %v2866 = vsub.s32 6, %v2865
    %v2867 = vrot.slane %v44, %v2866
    %2872 = vrot.lane.b32.xlu0 %v108, 96
    %v2873 = vpop.permute.xlu0 %2872
    %2874 = vrot.lane.b32.xlu0 %v109, 96
    %v2875 = vpop.permute.xlu0 %2874
    %2876 = vrot.lane.b32.xlu0 %v110, 96
    %v2877 = vpop.permute.xlu0 %2876
    %2878 = vrot.lane.b32.xlu0 %v111, 96
    %v2879 = vpop.permute.xlu0 %2878
    %v2885 = vsel %vm278, %v2856, 0
    %v2888 = vsel %vm278, %v2861, 0
    %2890 = vmatprep.subr.mxu0 0.0
    %2891 = vmatpush1.msra.mxu0 %v2873
    %2892 = vmatprep.subr.mxu0 0.0
    %2893 = vmatpush1.msra.mxu0 %v2875
    %2894 = vmatprep.subr.mxu0 0.0
    %2895 = vmatpush1.msra.mxu0 %v2877
    %2896 = vmatprep.subr.mxu0 0.0
    %2897 = vmatpush1.msra.mxu0 %v2879
    %2898 = vmatprep.subr.mxu0 0.0
    %2899 = vmatpush1.msra.mxu0 0.0
    %2900 = vmatprep.subr.mxu0 0.0
    %2901 = vmatpush1.msra.mxu0 0.0
    %2902 = vmatprep.subr.mxu0 0.0
    %2903 = vmatpush1.msra.mxu0 0.0
    %2904 = vmatprep.subr.mxu0 0.0
    %2905 = vmatpush1.msra.mxu0 0.0
    %2906 = vmatprep.subr.mxu0 0.0
    %2907 = vmatpush1.msra.mxu0 0.0
    %2908 = vmatprep.subr.mxu0 0.0
    %2909 = vmatpush1.msra.mxu0 0.0
    %2910 = vmatprep.subr.mxu0 0.0
    %2911 = vmatpush1.msra.mxu0 0.0
    %2912 = vmatprep.subr.mxu0 0.0
    %2913 = vmatpush1.msra.mxu0 0.0
    %2914 = vmatprep.subr.mxu0 0.0
    %2915 = vmatpush1.msra.mxu0 0.0
    %2916 = vmatprep.subr.mxu0 0.0
    %2917 = vmatpush1.msra.mxu0 0.0
    %2918 = vmatprep.subr.mxu0 0.0
    %2919 = vmatpush1.msra.mxu0 0.0
    %2920 = vmatprep.subr.mxu0 0.0
    %2921 = vmatpush1.msra.mxu0 0.0
    %2922 = vmatprep.subr.mxu0 0.0
    %2923 = vmatpush1.msra.mxu0 0.0
    %2924 = vmatprep.subr.mxu0 0.0
    %2925 = vmatpush1.msra.mxu0 0.0
    %2926 = vmatprep.subr.mxu0 0.0
    %2927 = vmatpush1.msra.mxu0 0.0
    %2928 = vmatprep.subr.mxu0 0.0
    %2929 = vmatpush1.msra.mxu0 0.0
    %2930 = vmatprep.subr.mxu0 0.0
    %2931 = vmatpush1.msra.mxu0 0.0
    %2932 = vmatprep.subr.mxu0 0.0
    %2933 = vmatpush1.msra.mxu0 0.0
    %2934 = vmatprep.subr.mxu0 0.0
    %2935 = vmatpush1.msra.mxu0 0.0
    %2936 = vmatprep.subr.mxu0 0.0
    %2937 = vmatpush1.msra.mxu0 0.0
    %2938 = vmatprep.subr.mxu0 0.0
    %2939 = vmatpush1.msra.mxu0 0.0
    %2940 = vmatprep.subr.mxu0 0.0
    %2941 = vmatpush1.msra.mxu0 0.0
    %2942 = vmatprep.subr.mxu0 0.0
    %2943 = vmatpush1.msra.mxu0 0.0
    %2944 = vmatprep.subr.mxu0 0.0
    %2945 = vmatpush1.msra.mxu0 0.0
    %2946 = vmatprep.subr.mxu0 0.0
    %2947 = vmatpush1.msra.mxu0 0.0
    %2948 = vmatprep.subr.mxu0 0.0
    %2949 = vmatpush1.msra.mxu0 0.0
    %2950 = vmatprep.subr.mxu0 0.0
    %2951 = vmatpush1.msra.mxu0 0.0
    %2952 = vmatprep.subr.mxu0 0.0
    %2953 = vmatpush1.msra.mxu0 0.0
    %2954 = vmatprep.mubr.f32.mxu0 0.0
    %2955 = vmatmul.mubr.f32.gmra.mrb[0].mxu0 %v2885
    %v2956 = vpop.f32.mrb[0].mxu0
    %v2957 = vadd.f32 %v2867, %v2956
    %v2958 = vpop.f32.mrb[0].mxu0
    %2959 = vmatprep.mubr.f32.mxu0 0.0
    %2960 = vmatmul.mubr.f32.gmra.mrb[0].mxu0 %v2888
    %v2961 = vpop.f32.mrb[0].mxu0
    %v2962 = vadd.f32 %v2867, %v2961
    %v2963 = vpop.f32.mrb[0].mxu0
    %2964 = vdwg.mxu0
    %2967 = vrot.lane.b32.xlu0 %v2957, 64
    %v2968 = vpop.permute.xlu0 %2967
    %2969 = vrot.lane.b32.xlu0 %v2962, 64
    %v2970 = vpop.permute.xlu0 %2969
    %v2973 = vadd.f32 %v1710, %v2968
    %v2974 = vadd.f32 %v1711, %v2970
    %2977 = vrot.lane.b32.xlu0 %v2973, 64
    %v2978 = vpop.permute.xlu0 %2977
    %2979 = vrot.lane.b32.xlu0 %v2974, 64
    %v2980 = vpop.permute.xlu0 %2979
    %v2983 = vsel %vm278, %v2978, 0.0
    %2984 = vadd.xlane.f32.xlu0 %v2983
    %v2985 = vpop.xlane.xlu0 %2984
    %v2986 = vsel %vm278, %v2980, 0.0
    %2987 = vadd.xlane.f32.xlu0 %v2986
    %v2988 = vpop.xlane.xlu0 %2987
    %v2989 = vmul.f32 %v2985, %v1663
    %v2990 = vmul.f32 %v2988, %v1663
    %v2991 = vsub.f32 %v2973, %v2989
    %v2992 = vsub.f32 %v2974, %v2990
    %v2993 = vmul.f32 %v2991, %v2991
    %v2994 = vmul.f32 %v2992, %v2992
    %2997 = vrot.lane.b32.xlu0 %v2993, 64
    %v2998 = vpop.permute.xlu0 %2997
    %2999 = vrot.lane.b32.xlu0 %v2994, 64
    %v3000 = vpop.permute.xlu0 %2999
    %v3003 = vsel %vm278, %v2998, 0.0
    %3004 = vadd.xlane.f32.xlu0 %v3003
    %v3005 = vpop.xlane.xlu0 %3004
    %v3006 = vsel %vm278, %v3000, 0.0
    %3007 = vadd.xlane.f32.xlu0 %v3006
    %v3008 = vpop.xlane.xlu0 %3007
    %v3009 = vmul.f32 %v3005, %v1663
    %v3010 = vmul.f32 %v3008, %v1663
    %v3011 = vadd.f32 %v3009, 1e-05
    %v3012 = vadd.f32 %v3010, 1e-05
    %v3013 = vrsqrt.pop %v3011
    %v3014 = vrsqrt.pop %v3012
    %v3015 = vmul.f32 %v2991, %v3013
    %v3016 = vmul.f32 %v2992, %v3014
    %v3017 = vlaneseq
    %v3018 = vshrl.u32 %v3017, 7
    %v3019 = vsub.s32 1, %v3018
    %v3020 = vrot.slane %v45, %v3019
    %3022 = vrot.lane.b32.xlu0 %v3020, 64
    %v3023 = vpop.permute.xlu0 %3022
    %v3025 = vmul.f32 %v3015, %v3023
    %v3026 = vmul.f32 %v3016, %v3023
    %v3027 = vlaneseq
    %v3028 = vshrl.u32 %v3027, 7
    %v3029 = vsub.s32 2, %v3028
    %v3030 = vrot.slane %v45, %v3029
    %3032 = vrot.lane.b32.xlu0 %v3030, 64
    %v3033 = vpop.permute.xlu0 %3032
    %v3035 = vadd.f32 %v3025, %v3033
    %v3036 = vadd.f32 %v3026, %v3033
    %v3037 = vld [vmem:[#allocation5] sm:$0xff]
    %v3038 = vld [vmem:[#allocation5 + $0x8] sm:$0xff]
    %v3039 = vld [vmem:[#allocation5 + $0x10] sm:$0xff]
    %v3040 = vld [vmem:[#allocation5 + $0x18] sm:$0xff]
    %v3041 = vlaneseq
    %v3042 = vshrl.u32 %v3041, 7
    %v3043 = vsub.s32 5, %v3042
    %v3044 = vrot.slane %v45, %v3043
    %3047 = vrot.lane.b32.xlu0 %v3035, 64
    %v3048 = vpop.permute.xlu0 %3047
    %3049 = vrot.lane.b32.xlu0 %v3036, 64
    %v3050 = vpop.permute.xlu0 %3049
    %v3051 = vsel %vm278, %v3048, 0
    %v3053 = vsel %vm278, %v3050, 0
    %3055 = vmatprep.subr.mxu0 0.0
    %3056 = vmatpush1.msra.mxu0 %v3037
    %3057 = vmatprep.subr.mxu0 0.0
    %3058 = vmatpush1.msra.mxu0 %v3038
    %3059 = vmatprep.subr.mxu0 0.0
    %3060 = vmatpush1.msra.mxu0 %v3039
    %3061 = vmatprep.subr.mxu0 0.0
    %3062 = vmatpush1.msra.mxu0 %v3040
    %3063 = vmatprep.subr.mxu0 0.0
    %3064 = vmatpush1.msra.mxu0 0.0
    %3065 = vmatprep.subr.mxu0 0.0
    %3066 = vmatpush1.msra.mxu0 0.0
    %3067 = vmatprep.subr.mxu0 0.0
    %3068 = vmatpush1.msra.mxu0 0.0
    %3069 = vmatprep.subr.mxu0 0.0
    %3070 = vmatpush1.msra.mxu0 0.0
    %3071 = vmatprep.subr.mxu0 0.0
    %3072 = vmatpush1.msra.mxu0 0.0
    %3073 = vmatprep.subr.mxu0 0.0
    %3074 = vmatpush1.msra.mxu0 0.0
    %3075 = vmatprep.subr.mxu0 0.0
    %3076 = vmatpush1.msra.mxu0 0.0
    %3077 = vmatprep.subr.mxu0 0.0
    %3078 = vmatpush1.msra.mxu0 0.0
    %3079 = vmatprep.subr.mxu0 0.0
    %3080 = vmatpush1.msra.mxu0 0.0
    %3081 = vmatprep.subr.mxu0 0.0
    %3082 = vmatpush1.msra.mxu0 0.0
    %3083 = vmatprep.subr.mxu0 0.0
    %3084 = vmatpush1.msra.mxu0 0.0
    %3085 = vmatprep.subr.mxu0 0.0
    %3086 = vmatpush1.msra.mxu0 0.0
    %3087 = vmatprep.subr.mxu0 0.0
    %3088 = vmatpush1.msra.mxu0 0.0
    %3089 = vmatprep.subr.mxu0 0.0
    %3090 = vmatpush1.msra.mxu0 0.0
    %3091 = vmatprep.subr.mxu0 0.0
    %3092 = vmatpush1.msra.mxu0 0.0
    %3093 = vmatprep.subr.mxu0 0.0
    %3094 = vmatpush1.msra.mxu0 0.0
    %3095 = vmatprep.subr.mxu0 0.0
    %3096 = vmatpush1.msra.mxu0 0.0
    %3097 = vmatprep.subr.mxu0 0.0
    %3098 = vmatpush1.msra.mxu0 0.0
    %3099 = vmatprep.subr.mxu0 0.0
    %3100 = vmatpush1.msra.mxu0 0.0
    %3101 = vmatprep.subr.mxu0 0.0
    %3102 = vmatpush1.msra.mxu0 0.0
    %3103 = vmatprep.subr.mxu0 0.0
    %3104 = vmatpush1.msra.mxu0 0.0
    %3105 = vmatprep.subr.mxu0 0.0
    %3106 = vmatpush1.msra.mxu0 0.0
    %3107 = vmatprep.subr.mxu0 0.0
    %3108 = vmatpush1.msra.mxu0 0.0
    %3109 = vmatprep.subr.mxu0 0.0
    %3110 = vmatpush1.msra.mxu0 0.0
    %3111 = vmatprep.subr.mxu0 0.0
    %3112 = vmatpush1.msra.mxu0 0.0
    %3113 = vmatprep.subr.mxu0 0.0
    %3114 = vmatpush1.msra.mxu0 0.0
    %3115 = vmatprep.subr.mxu0 0.0
    %3116 = vmatpush1.msra.mxu0 0.0
    %3117 = vmatprep.subr.mxu0 0.0
    %3118 = vmatpush1.msra.mxu0 0.0
    %3119 = vmatprep.mubr.f32.mxu0 0.0
    %3120 = vmatmul.mubr.f32.gmra.mrb[0].mxu0 %v3051
    %v3121 = vpop.f32.mrb[0].mxu0
    %v3122 = vadd.f32 %v3044, %v3121
    %v3123 = vpop.f32.mrb[0].mxu0
    %3124 = vmatprep.mubr.f32.mxu0 0.0
    %3125 = vmatmul.mubr.f32.gmra.mrb[0].mxu0 %v3053
    %v3126 = vpop.f32.mrb[0].mxu0
    %v3127 = vadd.f32 %v3044, %v3126
    %v3128 = vpop.f32.mrb[0].mxu0
    %3129 = vdwg.mxu0
    %v3130 = vmax.f32 %v3122, 0.0
    %v3131 = vmax.f32 %v3127, 0.0
    %v3132 = vlaneseq
    %v3133 = vshrl.u32 %v3132, 7
    %v3134 = vsub.s32 6, %v3133
    %v3135 = vrot.slane %v45, %v3134
    %3136 = vmatprep.subr.mxu0 0.0
    %3137 = vmatpush1.msra.mxu0 %v46
    %3138 = vmatprep.subr.mxu0 0.0
    %3139 = vmatpush1.msra.mxu0 %v47
    %3140 = vmatprep.subr.mxu0 0.0
    %3141 = vmatpush1.msra.mxu0 %v48
    %3142 = vmatprep.subr.mxu0 0.0
    %3143 = vmatpush1.msra.mxu0 %v49
    %3144 = vmatprep.subr.mxu0 0.0
    %3145 = vmatpush1.msra.mxu0 %v50
    %3146 = vmatprep.subr.mxu0 0.0
    %3147 = vmatpush1.msra.mxu0 %v51
    %3148 = vmatprep.subr.mxu0 0.0
    %3149 = vmatpush1.msra.mxu0 %v52
    %3150 = vmatprep.subr.mxu0 0.0
    %3151 = vmatpush1.msra.mxu0 %v53
    %3152 = vmatprep.subr.mxu0 0.0
    %3153 = vmatpush1.msra.mxu0 %v54
    %3154 = vmatprep.subr.mxu0 0.0
    %3155 = vmatpush1.msra.mxu0 %v55
    %3156 = vmatprep.subr.mxu0 0.0
    %3157 = vmatpush1.msra.mxu0 %v56
    %3158 = vmatprep.subr.mxu0 0.0
    %3159 = vmatpush1.msra.mxu0 %v57
    %3160 = vmatprep.subr.mxu0 0.0
    %3161 = vmatpush1.msra.mxu0 %v58
    %3162 = vmatprep.subr.mxu0 0.0
    %3163 = vmatpush1.msra.mxu0 %v59
    %3164 = vmatprep.subr.mxu0 0.0
    %3165 = vmatpush1.msra.mxu0 %v60
    %3166 = vmatprep.subr.mxu0 0.0
    %3167 = vmatpush1.msra.mxu0 %v61
    %3168 = vmatprep.subr.mxu0 0.0
    %3169 = vmatpush1.msra.mxu0 0.0
    %3170 = vmatprep.subr.mxu0 0.0
    %3171 = vmatpush1.msra.mxu0 0.0
    %3172 = vmatprep.subr.mxu0 0.0
    %3173 = vmatpush1.msra.mxu0 0.0
    %3174 = vmatprep.subr.mxu0 0.0
    %3175 = vmatpush1.msra.mxu0 0.0
    %3176 = vmatprep.subr.mxu0 0.0
    %3177 = vmatpush1.msra.mxu0 0.0
    %3178 = vmatprep.subr.mxu0 0.0
    %3179 = vmatpush1.msra.mxu0 0.0
    %3180 = vmatprep.subr.mxu0 0.0
    %3181 = vmatpush1.msra.mxu0 0.0
    %3182 = vmatprep.subr.mxu0 0.0
    %3183 = vmatpush1.msra.mxu0 0.0
    %3184 = vmatprep.subr.mxu0 0.0
    %3185 = vmatpush1.msra.mxu0 0.0
    %3186 = vmatprep.subr.mxu0 0.0
    %3187 = vmatpush1.msra.mxu0 0.0
    %3188 = vmatprep.subr.mxu0 0.0
    %3189 = vmatpush1.msra.mxu0 0.0
    %3190 = vmatprep.subr.mxu0 0.0
    %3191 = vmatpush1.msra.mxu0 0.0
    %3192 = vmatprep.subr.mxu0 0.0
    %3193 = vmatpush1.msra.mxu0 0.0
    %3194 = vmatprep.subr.mxu0 0.0
    %3195 = vmatpush1.msra.mxu0 0.0
    %3196 = vmatprep.subr.mxu0 0.0
    %3197 = vmatpush1.msra.mxu0 0.0
    %3198 = vmatprep.subr.mxu0 0.0
    %3199 = vmatpush1.msra.mxu0 0.0
    %3200 = vmatprep.mubr.f32.mxu0 0.0
    %3201 = vmatmul.mubr.f32.gmra.mrb[0].mxu0 %v3130
    %v3202 = vpop.f32.mrb[0].mxu0
    %v3203 = vadd.f32 %v3135, %v3202
    %v3204 = vpop.f32.mrb[0].mxu0
    %3205 = vmatprep.mubr.f32.mxu0 0.0
    %3206 = vmatmul.mubr.f32.gmra.mrb[0].mxu0 %v3131
    %v3207 = vpop.f32.mrb[0].mxu0
    %v3208 = vadd.f32 %v3135, %v3207
    %v3209 = vpop.f32.mrb[0].mxu0
    %3210 = vdwg.mxu0
    %3213 = vrot.lane.b32.xlu0 %v3203, 64
    %v3214 = vpop.permute.xlu0 %3213
    %3215 = vrot.lane.b32.xlu0 %v3208, 64
    %v3216 = vpop.permute.xlu0 %3215
    %v3219 = vadd.f32 %v3035, %v3214
    %v3220 = vadd.f32 %v3036, %v3216
    %3223 = vrot.lane.b32.xlu0 %v3219, 64
    %v3224 = vpop.permute.xlu0 %3223
    %3225 = vrot.lane.b32.xlu0 %v3220, 64
    %v3226 = vpop.permute.xlu0 %3225
    %v3229 = vsel %vm278, %v3224, 0.0
    %3230 = vadd.xlane.f32.xlu0 %v3229
    %v3231 = vpop.xlane.xlu0 %3230
    %v3232 = vsel %vm278, %v3226, 0.0
    %3233 = vadd.xlane.f32.xlu0 %v3232
    %v3234 = vpop.xlane.xlu0 %3233
    %v3235 = vmul.f32 %v3231, %v1663
    %v3236 = vmul.f32 %v3234, %v1663
    %v3237 = vsub.f32 %v3219, %v3235
    %v3238 = vsub.f32 %v3220, %v3236
    %v3239 = vmul.f32 %v3237, %v3237
    %v3240 = vmul.f32 %v3238, %v3238
    %3243 = vrot.lane.b32.xlu0 %v3239, 64
    %v3244 = vpop.permute.xlu0 %3243
    %3245 = vrot.lane.b32.xlu0 %v3240, 64
    %v3246 = vpop.permute.xlu0 %3245
    %v3249 = vsel %vm278, %v3244, 0.0
    %3250 = vadd.xlane.f32.xlu0 %v3249
    %v3251 = vpop.xlane.xlu0 %3250
    %v3252 = vsel %vm278, %v3246, 0.0
    %3253 = vadd.xlane.f32.xlu0 %v3252
    %v3254 = vpop.xlane.xlu0 %3253
    %v3255 = vmul.f32 %v3251, %v1663
    %v3256 = vmul.f32 %v3254, %v1663
    %v3257 = vadd.f32 %v3255, 1e-05
    %v3258 = vadd.f32 %v3256, 1e-05
    %v3259 = vrsqrt.pop %v3257
    %v3260 = vrsqrt.pop %v3258
    %v3261 = vmul.f32 %v3237, %v3259
    %v3262 = vmul.f32 %v3238, %v3260
    %v3263 = vlaneseq
    %v3264 = vshrl.u32 %v3263, 7
    %v3265 = vsub.s32 3, %v3264
    %v3266 = vrot.slane %v45, %v3265
    %3268 = vrot.lane.b32.xlu0 %v3266, 64
    %v3269 = vpop.permute.xlu0 %3268
    %v3271 = vmul.f32 %v3261, %v3269
    %v3272 = vmul.f32 %v3262, %v3269
    %v3273 = vlaneseq
    %v3274 = vshrl.u32 %v3273, 7
    %v3275 = vsub.s32 4, %v3274
    %v3276 = vrot.slane %v45, %v3275
    %3278 = vrot.lane.b32.xlu0 %v3276, 64
    %v3279 = vpop.permute.xlu0 %3278
    %v3281 = vadd.f32 %v3271, %v3279
    %v3282 = vadd.f32 %v3272, %v3279
    %3285 = vrot.lane.b32.xlu0 %v3281, 64
    %v3286 = vpop.permute.xlu0 %3285
    %3287 = vrot.lane.b32.xlu0 %v3282, 64
    %v3288 = vpop.permute.xlu0 %3287
    %3291 = vst.msk [vmem:[#allocation7] sm:$0xff] %vm278, %v3286
    %3292 = vst.msk [vmem:[#allocation7 + $0x8] sm:$0xff] %vm278, %v3288
    // Predicated region
    $region18: #{tpu_custom_call.1} parent=1 // pred_check
      _
    $region19: #{tpu_custom_call.1} parent=1 // pred_check_branch
      %3294 = sbr.rel (0) target = $region21
    $region20: #{tpu_custom_call.1} parent=1 // pred_region
      %s3296 = ssub.s32 256, 256
      %3297 = vsyncadd [#allocation4], %s3296
      %s3298 = sshll.u32 [#allocation7], 4
      %s3299 = int_to_ptr.vmem [resolvable:$true] %s3298
      %3304 = dma.vmem_to_hbm [thread:$0]  %s3299, 256, %s2, [#allocation4], 128, 128, 8
    $region21: #{tpu_custom_call.1} parent=1 // pred_fallthru
      _
    // Predicated region
    $region22: #{tpu_custom_call.1} parent=1 // pred_check
      _
    $region23: #{tpu_custom_call.1} parent=1 // pred_check_branch
      %3306 = sbr.rel (0) target = $region25
    $region24: #{tpu_custom_call.1} parent=1 // pred_region
      %3307 = dma.done [#allocation4], 256
    $region25: #{tpu_custom_call.1} parent=1 // pred_fallthru
      _
    %3308 = vsyncpa [#allocation3], 1
    %3309 = vsyncpa [#allocation6], 1
    %3310 = vsyncpa [#allocation4], 1

</llo_original>
